<compile_context>
chip_gen: v7x
topology: tpu7x:2x2x1
jax: 0.10.0
libtpu: 0.0.40
codegen_flags: <defaults>
</compile_context>

<pallas_src>
import functools
import math

import jax
import jax.numpy as jnp
from jax.experimental import pallas as pl
from jax.experimental.pallas import tpu as pltpu


HP = dict(
    hidden_size=32,
    num_attention_heads=2,
    num_hidden_layers=2,
    intermediate_size=64,
    vocab_size=100,
    max_position_embeddings=16,
    type_vocab_size=2,
    num_labels=3,
    initializer_range=0.02,
)


# ----------------------------- fused Pallas kernel ---------------------------

def _gelu(y):
    # TODO(synk): tanh-approx GELU; if the reference BertModel uses the
    # erf-based gelu, outputs differ at ~1e-3 — switch once confirmed.
    return 0.5 * y * (1.0 + jnp.tanh(
        0.7978845608028654 * (y + 0.044715 * y * y * y)))


def _layernorm(x, g, b):
    # E[x^2] - mu^2 form: the two lane reductions are independent -> overlap on XLUs.
    mu = jnp.mean(x, axis=-1, keepdims=True)
    ms = jnp.mean(x * x, axis=-1, keepdims=True)
    var = jnp.maximum(ms - mu * mu, 0.0)
    return (x - mu) * jax.lax.rsqrt(var + 1e-12) * g + b


def _fused_bert_kernel(
        # VMEM inputs
        emb_ref, mask_ref, label_ref, pool_ref, blk_ref,
        emb_ln_g_ref, emb_ln_b_ref,
        qw_ref, qb_ref, kw_ref, kb_ref, vw_ref, vb_ref,
        ao_w_ref, ao_b_ref, a_ln_g_ref, a_ln_b_ref,
        i_w_ref, i_b_ref, o_w_ref, o_b_ref, o_ln_g_ref, o_ln_b_ref,
        cls_w_ref, cls_b_ref,
        # output
        loss_ref,
        *, B, nH, n_layers, num_labels, half):
    f32 = jnp.float32

    x = _layernorm(emb_ref[...], emb_ln_g_ref[...], emb_ln_b_ref[...])   # (M, H)
    # TODO(synk): dropout layers omitted (deterministic eval, p = 0).

    key_keep = mask_ref[...]                                   # (1, M), 1.0 = keep
    # Block-diagonal additive attention bias over the flattened batch:
    #   0 where (same sequence AND key kept), -10000 otherwise.
    # Loop-invariant: computed once, reused by every layer/head.
    attn_bias = (blk_ref[...] * key_keep - 1.0) * 10000.0      # (M, M)

    for l in range(n_layers):
        attn_out = ao_b_ref[l]                                 # (1, H), broadcasts
        for h in range(nH):
            w = l * nH + h   # per-(layer, head) weight slab index (static)
            # Per-head projections; 1/sqrt(dh) already folded into qw/qb.
            q = jnp.dot(x, qw_ref[w], preferred_element_type=f32) + qb_ref[w]
            k = jnp.dot(x, kw_ref[w], preferred_element_type=f32) + kb_ref[w]
            v = jnp.dot(x, vw_ref[w], preferred_element_type=f32) + vb_ref[w]

            # Attention over the flattened batch with a block-diagonal mask:
            # one (M, M) score matrix and ONE softmax per head per layer.
            s = jax.lax.dot_general(q, k, (((1,), (1,)), ((), ())),
                                    preferred_element_type=f32)          # (M, M)
            s = s + attn_bias
            s = s - jnp.max(s, axis=-1, keepdims=True)
            p = jnp.exp(s)
            p = p / jnp.sum(p, axis=-1, keepdims=True)                   # exact div
            ctx = jnp.dot(p, v, preferred_element_type=f32)              # (M, dh)

            # Accumulate the output projection per head (no scratch round trip).
            attn_out = attn_out + jnp.dot(ctx, ao_w_ref[w],
                                          preferred_element_type=f32)    # (M, H)

        x = _layernorm(attn_out + x, a_ln_g_ref[l], a_ln_b_ref[l])

        # ---- feed-forward ----
        inter = _gelu(jnp.dot(x, i_w_ref[l], preferred_element_type=f32)
                      + i_b_ref[l])
        ffn = jnp.dot(inter, o_w_ref[l], preferred_element_type=f32) + o_b_ref[l]
        x = _layernorm(ffn + x, o_ln_g_ref[l], o_ln_b_ref[l])

    # ---- mean pooling (reference semantics: unmasked numerator /
    #      masked-token-count denominator), done as ONE MXU matmul ----
    summed = jnp.dot(pool_ref[...], x, preferred_element_type=f32)       # (B, H)
    denom = jnp.sum(pool_ref[...] * key_keep, axis=1, keepdims=True)     # (B, 1)
    pooled = summed / denom

    a = pooled[0:half, :]
    c = pooled[half:B, :]
    d = jnp.abs(a - c)

    # ||concat(a, c, |a-c|)||_2 without materializing the concat
    nrm = jnp.sqrt(jnp.sum(a * a, axis=1, keepdims=True)
                   + jnp.sum(c * c, axis=1, keepdims=True)
                   + jnp.sum(d * d, axis=1, keepdims=True))               # (half, 1)

    # (concat / nrm) @ W + bias == (a@Wa + c@Wc + d@Wd) / nrm + bias
    logits = (jnp.dot(a, cls_w_ref[0], preferred_element_type=f32)
              + jnp.dot(c, cls_w_ref[1], preferred_element_type=f32)
              + jnp.dot(d, cls_w_ref[2], preferred_element_type=f32))
    logits = logits / nrm + cls_b_ref[...]                                # (half, L)

    # cross-entropy (mean), fully vectorized one-hot
    m = jnp.max(logits, axis=1, keepdims=True)
    z = logits - m
    logp = z - jnp.log(jnp.sum(jnp.exp(z), axis=1, keepdims=True))        # (half, L)
    lane = jax.lax.broadcasted_iota(jnp.int32, (half, num_labels), 1)
    onehot = jnp.where(lane == label_ref[...], 1.0, 0.0)                  # (half, L)
    loss = -jnp.sum(onehot * logp) / float(half)
    loss_ref[...] = jnp.broadcast_to(loss, (1, 1))


# --------------------------- params / forward --------------------------------

def init_params(key, hp):
    H, I, L = hp['hidden_size'], hp['intermediate_size'], hp['num_labels']
    nl, nH = hp['num_hidden_layers'], hp['num_attention_heads']
    dh = H // nH
    std = hp['initializer_range']
    keys = iter(jax.random.split(key, 128))

    def nrm(shape):
        return std * jax.random.normal(next(keys), shape, jnp.float32)

    def split_cols(w):   # (H, H) -> (nH, H, dh): output columns per head
        return jnp.transpose(w.reshape(H, nH, dh), (1, 0, 2))

    def split_rows(w):   # (H, H) -> (nH, dh, H): input rows per head
        return w.reshape(nH, dh, H)

    scale = 1.0 / math.sqrt(dh)
    qw, kw, vw, aw, iw, ow = [], [], [], [], [], []
    for _ in range(nl):
        # 1/sqrt(dh) folded into the Q projection (bias is zero at init; a real
        # checkpoint's q-bias would be scaled the same way).
        qw.append(split_cols(nrm((H, H))) * scale)
        kw.append(split_cols(nrm((H, H))))
        vw.append(split_cols(nrm((H, H))))
        aw.append(split_rows(nrm((H, H))))
        iw.append(nrm((H, I)))
        ow.append(nrm((I, H)))

    def flat_heads(ws):  # list of (nH, a, b) -> (nl*nH, a, b)
        return jnp.concatenate(ws, axis=0)

    return dict(
        word_emb=nrm((hp['vocab_size'], H)),
        pos_emb=nrm((hp['max_position_embeddings'], H)),
        tok_emb=nrm((hp['type_vocab_size'], H)),
        emb_ln_g=jnp.ones((1, H), jnp.float32),
        emb_ln_b=jnp.zeros((1, H), jnp.float32),
        qw=flat_heads(qw), qb=jnp.zeros((nl * nH, 1, dh), jnp.float32),
        kw=flat_heads(kw), kb=jnp.zeros((nl * nH, 1, dh), jnp.float32),
        vw=flat_heads(vw), vb=jnp.zeros((nl * nH, 1, dh), jnp.float32),
        ao_w=flat_heads(aw), ao_b=jnp.zeros((nl, 1, H), jnp.float32),
        a_ln_g=jnp.ones((nl, 1, H), jnp.float32),
        a_ln_b=jnp.zeros((nl, 1, H), jnp.float32),
        i_w=jnp.stack(iw), i_b=jnp.zeros((nl, 1, I), jnp.float32),
        o_w=jnp.stack(ow), o_b=jnp.zeros((nl, 1, H), jnp.float32),
        o_ln_g=jnp.ones((nl, 1, H), jnp.float32),
        o_ln_b=jnp.zeros((nl, 1, H), jnp.float32),
        cls_w=nrm((3 * H, L)).reshape(3, H, L),
        cls_b=jnp.zeros((1, L), jnp.float32),
    )


def bert_for_sb_forward(params, input_ids, token_type_ids, attention_mask, label):
    hp = HP
    B, S = input_ids.shape
    H, nH = hp['hidden_size'], hp['num_attention_heads']
    nl, I, L = hp['num_hidden_layers'], hp['intermediate_size'], hp['num_labels']
    dh = H // nH
    half = B // 2
    M = B * S

    # --- embeddings (gathers are JAX glue) ---
    pos_ids = jnp.arange(S, dtype=jnp.int32)
    emb = (params['word_emb'][input_ids]
           + params['pos_emb'][pos_ids][None, :, :]
           + params['tok_emb'][token_type_ids])
    emb2d = emb.reshape(M, H).astype(jnp.float32)
    mask_flat = attention_mask.astype(jnp.float32).reshape(1, M)
    labels = label.astype(jnp.int32).reshape(half, 1)

    # Shape-only constants (folded by XLA at compile time): pooling selector
    # P[b, m] = 1 iff token m belongs to sequence b, and same-sequence matrix.
    tok_seq = jnp.arange(M, dtype=jnp.int32) // S
    pool_p = (tok_seq[None, :] == jnp.arange(B, dtype=jnp.int32)[:, None]
              ).astype(jnp.float32)                                       # (B, M)
    same_blk = (tok_seq[None, :] == tok_seq[:, None]).astype(jnp.float32)  # (M, M)

    vmem_args = (emb2d, mask_flat, labels, pool_p, same_blk,
                 params['emb_ln_g'], params['emb_ln_b'],
                 params['qw'], params['qb'], params['kw'], params['kb'],
                 params['vw'], params['vb'],
                 params['ao_w'], params['ao_b'],
                 params['a_ln_g'], params['a_ln_b'],
                 params['i_w'], params['i_b'], params['o_w'], params['o_b'],
                 params['o_ln_g'], params['o_ln_b'],
                 params['cls_w'], params['cls_b'])

    def _full_spec(shape):
        zeros = (0,) * len(shape)
        return pl.BlockSpec(shape, lambda i, zeros=zeros: zeros)

    flops = nl * (2 * M * H * 3 * H              # per-head Q/K/V projections
                  + nH * 2 * (2 * M * M * dh)    # scores + context
                  + 2 * M * H * H                # attention output projection
                  + 4 * M * H * I)               # FFN
    flops += 2 * B * M * H + 2 * half * 3 * H * L
    transcendentals = nl * (nH * M * M + M * I) + half * L
    bytes_accessed = sum(int(a.size) * 4 for a in vmem_args) + 4

    kern = functools.partial(_fused_bert_kernel, B=B, nH=nH, n_layers=nl,
                             num_labels=L, half=half)

    grid_spec = pltpu.PrefetchScalarGridSpec(
        num_scalar_prefetch=0,
        grid=(1,),
        in_specs=[_full_spec(a.shape) for a in vmem_args],
        out_specs=pl.BlockSpec((1, 1), lambda i: (0, 0)),
    )

    # TODO(synk): at these shapes one fused call on one TC is optimal; if scaled
    # to real BERT sizes, add a tiled grid (parallel batch axis for v7x's 2 TCs,
    # K-reduction axis + accumulator, bf16 MXU operands, tiles sized against
    # v7x's 64 MiB VMEM with vmem_limit_bytes set explicitly).
    loss = pl.pallas_call(
        kern,
        out_shape=jax.ShapeDtypeStruct((1, 1), jnp.float32),
        grid_spec=grid_spec,
        compiler_params=pltpu.CompilerParams(
            dimension_semantics=("arbitrary",)),
        cost_estimate=pl.CostEstimate(flops=flops,
                                      transcendentals=transcendentals,
                                      bytes_accessed=bytes_accessed),
    )(*vmem_args)
    return loss[0, 0]


# --------------------------------- main ---------------------------------------

if __name__ == "__main__":
    key = jax.random.PRNGKey(0)
    k_param, k_ids, k_lab = jax.random.split(key, 3)

    B, S = 4, 8
    params = init_params(k_param, HP)

    input_ids = jax.random.randint(k_ids, (B, S), 0, HP['vocab_size'],
                                   dtype=jnp.int32)
    token_type_ids = jnp.zeros((B, S), jnp.int32)
    attention_mask = jnp.array([[1, 1, 1, 1, 1, 1, 1, 1],
                                [1, 1, 1, 1, 1, 1, 0, 0],
                                [1, 1, 1, 1, 1, 1, 1, 1],
                                [1, 1, 1, 1, 1, 1, 1, 0]], dtype=jnp.int32)
    label = jax.random.randint(k_lab, (B // 2,), 0, HP['num_labels'],
                               dtype=jnp.int32)

    fwd = jax.jit(functools.partial(bert_for_sb_forward, params))
    loss = fwd(input_ids, token_type_ids, attention_mask, label)
    jax.block_until_ready(loss)
    assert loss.shape == () and bool(jnp.isfinite(loss))
    print("KERNEL_OK")
</pallas_src>

<mosaic_0001>
module attributes {stable_mosaic.version = 11 : i64} {
  func.func @_fused_bert_kernel(%arg0: i32, %arg1: memref<32x32xf32, #tpu.memory_space<vmem>>, %arg2: memref<1x32xf32, #tpu.memory_space<vmem>>, %arg3: memref<2x1xi32, #tpu.memory_space<vmem>>, %arg4: memref<4x32xf32, #tpu.memory_space<vmem>>, %arg5: memref<32x32xf32, #tpu.memory_space<vmem>>, %arg6: memref<1x32xf32, #tpu.memory_space<vmem>>, %arg7: memref<1x32xf32, #tpu.memory_space<vmem>>, %arg8: memref<4x32x16xf32, #tpu.memory_space<vmem>>, %arg9: memref<4x1x16xf32, #tpu.memory_space<vmem>>, %arg10: memref<4x32x16xf32, #tpu.memory_space<vmem>>, %arg11: memref<4x1x16xf32, #tpu.memory_space<vmem>>, %arg12: memref<4x32x16xf32, #tpu.memory_space<vmem>>, %arg13: memref<4x1x16xf32, #tpu.memory_space<vmem>>, %arg14: memref<4x16x32xf32, #tpu.memory_space<vmem>>, %arg15: memref<2x1x32xf32, #tpu.memory_space<vmem>>, %arg16: memref<2x1x32xf32, #tpu.memory_space<vmem>>, %arg17: memref<2x1x32xf32, #tpu.memory_space<vmem>>, %arg18: memref<2x32x64xf32, #tpu.memory_space<vmem>>, %arg19: memref<2x1x64xf32, #tpu.memory_space<vmem>>, %arg20: memref<2x64x32xf32, #tpu.memory_space<vmem>>, %arg21: memref<2x1x32xf32, #tpu.memory_space<vmem>>, %arg22: memref<2x1x32xf32, #tpu.memory_space<vmem>>, %arg23: memref<2x1x32xf32, #tpu.memory_space<vmem>>, %arg24: memref<3x32x3xf32, #tpu.memory_space<vmem>>, %arg25: memref<1x3xf32, #tpu.memory_space<vmem>>, %arg26: memref<1x1xf32, #tpu.memory_space<vmem>>) attributes {dimension_semantics = [#tpu.dimension_semantics<arbitrary>], iteration_bounds = array<i64: 1>, scalar_prefetch = 0 : i64, scratch_operands = 0 : i64, tpu.core_type = #tpu.core_type<tc>, window_params = [{pipeline_mode = #tpu.pipeline_mode<synchronous>, transform_indices = @transform_0, window_bounds = array<i64: 32, 32>}, {pipeline_mode = #tpu.pipeline_mode<synchronous>, transform_indices = @transform_1, window_bounds = array<i64: 1, 32>}, {pipeline_mode = #tpu.pipeline_mode<synchronous>, transform_indices = @transform_2, window_bounds = array<i64: 2, 1>}, {pipeline_mode = #tpu.pipeline_mode<synchronous>, transform_indices = @transform_3, window_bounds = array<i64: 4, 32>}, {pipeline_mode = #tpu.pipeline_mode<synchronous>, transform_indices = @transform_4, window_bounds = array<i64: 32, 32>}, {pipeline_mode = #tpu.pipeline_mode<synchronous>, transform_indices = @transform_5, window_bounds = array<i64: 1, 32>}, {pipeline_mode = #tpu.pipeline_mode<synchronous>, transform_indices = @transform_6, window_bounds = array<i64: 1, 32>}, {pipeline_mode = #tpu.pipeline_mode<synchronous>, transform_indices = @transform_7, window_bounds = array<i64: 4, 32, 16>}, {pipeline_mode = #tpu.pipeline_mode<synchronous>, transform_indices = @transform_8, window_bounds = array<i64: 4, 1, 16>}, {pipeline_mode = #tpu.pipeline_mode<synchronous>, transform_indices = @transform_9, window_bounds = array<i64: 4, 32, 16>}, {pipeline_mode = #tpu.pipeline_mode<synchronous>, transform_indices = @transform_10, window_bounds = array<i64: 4, 1, 16>}, {pipeline_mode = #tpu.pipeline_mode<synchronous>, transform_indices = @transform_11, window_bounds = array<i64: 4, 32, 16>}, {pipeline_mode = #tpu.pipeline_mode<synchronous>, transform_indices = @transform_12, window_bounds = array<i64: 4, 1, 16>}, {pipeline_mode = #tpu.pipeline_mode<synchronous>, transform_indices = @transform_13, window_bounds = array<i64: 4, 16, 32>}, {pipeline_mode = #tpu.pipeline_mode<synchronous>, transform_indices = @transform_14, window_bounds = array<i64: 2, 1, 32>}, {pipeline_mode = #tpu.pipeline_mode<synchronous>, transform_indices = @transform_15, window_bounds = array<i64: 2, 1, 32>}, {pipeline_mode = #tpu.pipeline_mode<synchronous>, transform_indices = @transform_16, window_bounds = array<i64: 2, 1, 32>}, {pipeline_mode = #tpu.pipeline_mode<synchronous>, transform_indices = @transform_17, window_bounds = array<i64: 2, 32, 64>}, {pipeline_mode = #tpu.pipeline_mode<synchronous>, transform_indices = @transform_18, window_bounds = array<i64: 2, 1, 64>}, {pipeline_mode = #tpu.pipeline_mode<synchronous>, transform_indices = @transform_19, window_bounds = array<i64: 2, 64, 32>}, {pipeline_mode = #tpu.pipeline_mode<synchronous>, transform_indices = @transform_20, window_bounds = array<i64: 2, 1, 32>}, {pipeline_mode = #tpu.pipeline_mode<synchronous>, transform_indices = @transform_21, window_bounds = array<i64: 2, 1, 32>}, {pipeline_mode = #tpu.pipeline_mode<synchronous>, transform_indices = @transform_22, window_bounds = array<i64: 2, 1, 32>}, {pipeline_mode = #tpu.pipeline_mode<synchronous>, transform_indices = @transform_23, window_bounds = array<i64: 3, 32, 3>}, {pipeline_mode = #tpu.pipeline_mode<synchronous>, transform_indices = @transform_24, window_bounds = array<i64: 1, 3>}, {pipeline_mode = #tpu.pipeline_mode<synchronous>, transform_indices = @transform_25, window_bounds = array<i64: 1, 1>}]} {
    %c0 = arith.constant 0 : index
    %c0_0 = arith.constant 0 : index
    %0 = vector.load %arg1[%c0, %c0_0] : memref<32x32xf32, #tpu.memory_space<vmem>>, vector<32x32xf32>
    %c0_1 = arith.constant 0 : index
    %c0_2 = arith.constant 0 : index
    %1 = vector.load %arg6[%c0_1, %c0_2] : memref<1x32xf32, #tpu.memory_space<vmem>>, vector<1x32xf32>
    %c0_3 = arith.constant 0 : index
    %c0_4 = arith.constant 0 : index
    %2 = vector.load %arg7[%c0_3, %c0_4] : memref<1x32xf32, #tpu.memory_space<vmem>>, vector<1x32xf32>
    %cst = arith.constant dense<0.000000e+00> : vector<32xf32>
    %3 = vector.multi_reduction <add>, %0, %cst [1] : vector<32x32xf32> to vector<32xf32>
    %4 = vector.shape_cast %3 : vector<32xf32> to vector<32x1xf32>
    %cst_5 = arith.constant 3.200000e+01 : f32
    %5 = vector.broadcast %cst_5 : f32 to vector<32x1xf32>
    %6 = arith.divf %4, %5 : vector<32x1xf32>
    %7 = arith.mulf %0, %0 : vector<32x32xf32>
    %cst_6 = arith.constant dense<0.000000e+00> : vector<32xf32>
    %8 = vector.multi_reduction <add>, %7, %cst_6 [1] : vector<32x32xf32> to vector<32xf32>
    %9 = vector.shape_cast %8 : vector<32xf32> to vector<32x1xf32>
    %cst_7 = arith.constant 3.200000e+01 : f32
    %10 = vector.broadcast %cst_7 : f32 to vector<32x1xf32>
    %11 = arith.divf %9, %10 : vector<32x1xf32>
    %12 = arith.mulf %6, %6 : vector<32x1xf32>
    %13 = arith.subf %11, %12 : vector<32x1xf32>
    %cst_8 = arith.constant 0.000000e+00 : f32
    %14 = vector.broadcast %cst_8 : f32 to vector<32x1xf32>
    %15 = arith.maximumf %13, %14 : vector<32x1xf32>
    %16 = vector.broadcast %6 : vector<32x1xf32> to vector<32x32xf32>
    %17 = arith.subf %0, %16 : vector<32x32xf32>
    %cst_9 = arith.constant 9.99999996E-13 : f32
    %18 = vector.broadcast %cst_9 : f32 to vector<32x1xf32>
    %19 = arith.addf %15, %18 : vector<32x1xf32>
    %20 = math.rsqrt %19 : vector<32x1xf32>
    %21 = vector.broadcast %20 : vector<32x1xf32> to vector<32x32xf32>
    %22 = arith.mulf %17, %21 : vector<32x32xf32>
    %23 = vector.broadcast %1 : vector<1x32xf32> to vector<32x32xf32>
    %24 = arith.mulf %22, %23 : vector<32x32xf32>
    %25 = vector.broadcast %2 : vector<1x32xf32> to vector<32x32xf32>
    %26 = arith.addf %24, %25 : vector<32x32xf32>
    %c0_10 = arith.constant 0 : index
    %c0_11 = arith.constant 0 : index
    %27 = vector.load %arg2[%c0_10, %c0_11] : memref<1x32xf32, #tpu.memory_space<vmem>>, vector<1x32xf32>
    %c0_12 = arith.constant 0 : index
    %c0_13 = arith.constant 0 : index
    %28 = vector.load %arg5[%c0_12, %c0_13] : memref<32x32xf32, #tpu.memory_space<vmem>>, vector<32x32xf32>
    %29 = vector.broadcast %27 : vector<1x32xf32> to vector<32x32xf32>
    %30 = arith.mulf %28, %29 : vector<32x32xf32>
    %cst_14 = arith.constant 1.000000e+00 : f32
    %31 = vector.broadcast %cst_14 : f32 to vector<32x32xf32>
    %32 = arith.subf %30, %31 : vector<32x32xf32>
    %cst_15 = arith.constant 1.000000e+04 : f32
    %33 = vector.broadcast %cst_15 : f32 to vector<32x32xf32>
    %34 = arith.mulf %32, %33 : vector<32x32xf32>
    %c0_16 = arith.constant 0 : index
    %c0_17 = arith.constant 0 : index
    %c0_18 = arith.constant 0 : index
    %35 = vector.load %arg15[%c0_16, %c0_17, %c0_18] : memref<2x1x32xf32, #tpu.memory_space<vmem>>, vector<1x1x32xf32>
    %36 = vector.shape_cast %35 : vector<1x1x32xf32> to vector<1x32xf32>
    %c0_19 = arith.constant 0 : index
    %c0_20 = arith.constant 0 : index
    %c0_21 = arith.constant 0 : index
    %37 = vector.load %arg8[%c0_19, %c0_20, %c0_21] : memref<4x32x16xf32, #tpu.memory_space<vmem>>, vector<1x32x16xf32>
    %38 = vector.shape_cast %37 : vector<1x32x16xf32> to vector<32x16xf32>
    %cst_22 = arith.constant dense<0.000000e+00> : vector<32x16xf32>
    %39 = tpu.matmul %26, %38, %cst_22 {dimension_numbers = #tpu.dot_dimension_numbers<[1], [0], [0], [1], [0, 0, 1, 1], [], []>} : vector<32x32xf32>, vector<32x16xf32>, vector<32x16xf32> -> vector<32x16xf32>
    %c0_23 = arith.constant 0 : index
    %c0_24 = arith.constant 0 : index
    %c0_25 = arith.constant 0 : index
    %40 = vector.load %arg9[%c0_23, %c0_24, %c0_25] : memref<4x1x16xf32, #tpu.memory_space<vmem>>, vector<1x1x16xf32>
    %41 = vector.shape_cast %40 : vector<1x1x16xf32> to vector<1x16xf32>
    %42 = vector.broadcast %41 : vector<1x16xf32> to vector<32x16xf32>
    %43 = arith.addf %39, %42 : vector<32x16xf32>
    %c0_26 = arith.constant 0 : index
    %c0_27 = arith.constant 0 : index
    %c0_28 = arith.constant 0 : index
    %44 = vector.load %arg10[%c0_26, %c0_27, %c0_28] : memref<4x32x16xf32, #tpu.memory_space<vmem>>, vector<1x32x16xf32>
    %45 = vector.shape_cast %44 : vector<1x32x16xf32> to vector<32x16xf32>
    %cst_29 = arith.constant dense<0.000000e+00> : vector<32x16xf32>
    %46 = tpu.matmul %26, %45, %cst_29 {dimension_numbers = #tpu.dot_dimension_numbers<[1], [0], [0], [1], [0, 0, 1, 1], [], []>} : vector<32x32xf32>, vector<32x16xf32>, vector<32x16xf32> -> vector<32x16xf32>
    %c0_30 = arith.constant 0 : index
    %c0_31 = arith.constant 0 : index
    %c0_32 = arith.constant 0 : index
    %47 = vector.load %arg11[%c0_30, %c0_31, %c0_32] : memref<4x1x16xf32, #tpu.memory_space<vmem>>, vector<1x1x16xf32>
    %48 = vector.shape_cast %47 : vector<1x1x16xf32> to vector<1x16xf32>
    %49 = vector.broadcast %48 : vector<1x16xf32> to vector<32x16xf32>
    %50 = arith.addf %46, %49 : vector<32x16xf32>
    %c0_33 = arith.constant 0 : index
    %c0_34 = arith.constant 0 : index
    %c0_35 = arith.constant 0 : index
    %51 = vector.load %arg12[%c0_33, %c0_34, %c0_35] : memref<4x32x16xf32, #tpu.memory_space<vmem>>, vector<1x32x16xf32>
    %52 = vector.shape_cast %51 : vector<1x32x16xf32> to vector<32x16xf32>
    %cst_36 = arith.constant dense<0.000000e+00> : vector<32x16xf32>
    %53 = tpu.matmul %26, %52, %cst_36 {dimension_numbers = #tpu.dot_dimension_numbers<[1], [0], [0], [1], [0, 0, 1, 1], [], []>} : vector<32x32xf32>, vector<32x16xf32>, vector<32x16xf32> -> vector<32x16xf32>
    %c0_37 = arith.constant 0 : index
    %c0_38 = arith.constant 0 : index
    %c0_39 = arith.constant 0 : index
    %54 = vector.load %arg13[%c0_37, %c0_38, %c0_39] : memref<4x1x16xf32, #tpu.memory_space<vmem>>, vector<1x1x16xf32>
    %55 = vector.shape_cast %54 : vector<1x1x16xf32> to vector<1x16xf32>
    %56 = vector.broadcast %55 : vector<1x16xf32> to vector<32x16xf32>
    %57 = arith.addf %53, %56 : vector<32x16xf32>
    %cst_40 = arith.constant dense<0.000000e+00> : vector<32x32xf32>
    %58 = tpu.matmul %43, %50, %cst_40 {dimension_numbers = #tpu.dot_dimension_numbers<[1], [1], [0], [0], [0, 0, 1, 0], [], []>} : vector<32x16xf32>, vector<32x16xf32>, vector<32x32xf32> -> vector<32x32xf32>
    %59 = arith.addf %58, %34 : vector<32x32xf32>
    %cst_41 = arith.constant dense<0xFF800000> : vector<32xf32>
    %60 = vector.multi_reduction <maximumf>, %59, %cst_41 [1] : vector<32x32xf32> to vector<32xf32>
    %61 = vector.shape_cast %60 : vector<32xf32> to vector<32x1xf32>
    %62 = vector.broadcast %61 : vector<32x1xf32> to vector<32x32xf32>
    %63 = arith.subf %59, %62 : vector<32x32xf32>
    %64 = math.exp %63 : vector<32x32xf32>
    %cst_42 = arith.constant dense<0.000000e+00> : vector<32xf32>
    %65 = vector.multi_reduction <add>, %64, %cst_42 [1] : vector<32x32xf32> to vector<32xf32>
    %66 = vector.shape_cast %65 : vector<32xf32> to vector<32x1xf32>
    %67 = vector.broadcast %66 : vector<32x1xf32> to vector<32x32xf32>
    %68 = arith.divf %64, %67 : vector<32x32xf32>
    %cst_43 = arith.constant dense<0.000000e+00> : vector<32x16xf32>
    %69 = tpu.matmul %68, %57, %cst_43 {dimension_numbers = #tpu.dot_dimension_numbers<[1], [0], [0], [1], [0, 0, 1, 1], [], []>} : vector<32x32xf32>, vector<32x16xf32>, vector<32x16xf32> -> vector<32x16xf32>
    %c0_44 = arith.constant 0 : index
    %c0_45 = arith.constant 0 : index
    %c0_46 = arith.constant 0 : index
    %70 = vector.load %arg14[%c0_44, %c0_45, %c0_46] : memref<4x16x32xf32, #tpu.memory_space<vmem>>, vector<1x16x32xf32>
    %71 = vector.shape_cast %70 : vector<1x16x32xf32> to vector<16x32xf32>
    %cst_47 = arith.constant dense<0.000000e+00> : vector<32x32xf32>
    %72 = tpu.matmul %69, %71, %cst_47 {dimension_numbers = #tpu.dot_dimension_numbers<[1], [0], [0], [1], [0, 0, 1, 1], [], []>} : vector<32x16xf32>, vector<16x32xf32>, vector<32x32xf32> -> vector<32x32xf32>
    %73 = vector.broadcast %36 : vector<1x32xf32> to vector<32x32xf32>
    %74 = arith.addf %73, %72 : vector<32x32xf32>
    %c1 = arith.constant 1 : index
    %c0_48 = arith.constant 0 : index
    %c0_49 = arith.constant 0 : index
    %75 = vector.load %arg8[%c1, %c0_48, %c0_49] : memref<4x32x16xf32, #tpu.memory_space<vmem>>, vector<1x32x16xf32>
    %76 = vector.shape_cast %75 : vector<1x32x16xf32> to vector<32x16xf32>
    %cst_50 = arith.constant dense<0.000000e+00> : vector<32x16xf32>
    %77 = tpu.matmul %26, %76, %cst_50 {dimension_numbers = #tpu.dot_dimension_numbers<[1], [0], [0], [1], [0, 0, 1, 1], [], []>} : vector<32x32xf32>, vector<32x16xf32>, vector<32x16xf32> -> vector<32x16xf32>
    %c1_51 = arith.constant 1 : index
    %c0_52 = arith.constant 0 : index
    %c0_53 = arith.constant 0 : index
    %78 = vector.load %arg9[%c1_51, %c0_52, %c0_53] : memref<4x1x16xf32, #tpu.memory_space<vmem>>, vector<1x1x16xf32>
    %79 = vector.shape_cast %78 : vector<1x1x16xf32> to vector<1x16xf32>
    %80 = vector.broadcast %79 : vector<1x16xf32> to vector<32x16xf32>
    %81 = arith.addf %77, %80 : vector<32x16xf32>
    %c1_54 = arith.constant 1 : index
    %c0_55 = arith.constant 0 : index
    %c0_56 = arith.constant 0 : index
    %82 = vector.load %arg10[%c1_54, %c0_55, %c0_56] : memref<4x32x16xf32, #tpu.memory_space<vmem>>, vector<1x32x16xf32>
    %83 = vector.shape_cast %82 : vector<1x32x16xf32> to vector<32x16xf32>
    %cst_57 = arith.constant dense<0.000000e+00> : vector<32x16xf32>
    %84 = tpu.matmul %26, %83, %cst_57 {dimension_numbers = #tpu.dot_dimension_numbers<[1], [0], [0], [1], [0, 0, 1, 1], [], []>} : vector<32x32xf32>, vector<32x16xf32>, vector<32x16xf32> -> vector<32x16xf32>
    %c1_58 = arith.constant 1 : index
    %c0_59 = arith.constant 0 : index
    %c0_60 = arith.constant 0 : index
    %85 = vector.load %arg11[%c1_58, %c0_59, %c0_60] : memref<4x1x16xf32, #tpu.memory_space<vmem>>, vector<1x1x16xf32>
    %86 = vector.shape_cast %85 : vector<1x1x16xf32> to vector<1x16xf32>
    %87 = vector.broadcast %86 : vector<1x16xf32> to vector<32x16xf32>
    %88 = arith.addf %84, %87 : vector<32x16xf32>
    %c1_61 = arith.constant 1 : index
    %c0_62 = arith.constant 0 : index
    %c0_63 = arith.constant 0 : index
    %89 = vector.load %arg12[%c1_61, %c0_62, %c0_63] : memref<4x32x16xf32, #tpu.memory_space<vmem>>, vector<1x32x16xf32>
    %90 = vector.shape_cast %89 : vector<1x32x16xf32> to vector<32x16xf32>
    %cst_64 = arith.constant dense<0.000000e+00> : vector<32x16xf32>
    %91 = tpu.matmul %26, %90, %cst_64 {dimension_numbers = #tpu.dot_dimension_numbers<[1], [0], [0], [1], [0, 0, 1, 1], [], []>} : vector<32x32xf32>, vector<32x16xf32>, vector<32x16xf32> -> vector<32x16xf32>
    %c1_65 = arith.constant 1 : index
    %c0_66 = arith.constant 0 : index
    %c0_67 = arith.constant 0 : index
    %92 = vector.load %arg13[%c1_65, %c0_66, %c0_67] : memref<4x1x16xf32, #tpu.memory_space<vmem>>, vector<1x1x16xf32>
    %93 = vector.shape_cast %92 : vector<1x1x16xf32> to vector<1x16xf32>
    %94 = vector.broadcast %93 : vector<1x16xf32> to vector<32x16xf32>
    %95 = arith.addf %91, %94 : vector<32x16xf32>
    %cst_68 = arith.constant dense<0.000000e+00> : vector<32x32xf32>
    %96 = tpu.matmul %81, %88, %cst_68 {dimension_numbers = #tpu.dot_dimension_numbers<[1], [1], [0], [0], [0, 0, 1, 0], [], []>} : vector<32x16xf32>, vector<32x16xf32>, vector<32x32xf32> -> vector<32x32xf32>
    %97 = arith.addf %96, %34 : vector<32x32xf32>
    %cst_69 = arith.constant dense<0xFF800000> : vector<32xf32>
    %98 = vector.multi_reduction <maximumf>, %97, %cst_69 [1] : vector<32x32xf32> to vector<32xf32>
    %99 = vector.shape_cast %98 : vector<32xf32> to vector<32x1xf32>
    %100 = vector.broadcast %99 : vector<32x1xf32> to vector<32x32xf32>
    %101 = arith.subf %97, %100 : vector<32x32xf32>
    %102 = math.exp %101 : vector<32x32xf32>
    %cst_70 = arith.constant dense<0.000000e+00> : vector<32xf32>
    %103 = vector.multi_reduction <add>, %102, %cst_70 [1] : vector<32x32xf32> to vector<32xf32>
    %104 = vector.shape_cast %103 : vector<32xf32> to vector<32x1xf32>
    %105 = vector.broadcast %104 : vector<32x1xf32> to vector<32x32xf32>
    %106 = arith.divf %102, %105 : vector<32x32xf32>
    %cst_71 = arith.constant dense<0.000000e+00> : vector<32x16xf32>
    %107 = tpu.matmul %106, %95, %cst_71 {dimension_numbers = #tpu.dot_dimension_numbers<[1], [0], [0], [1], [0, 0, 1, 1], [], []>} : vector<32x32xf32>, vector<32x16xf32>, vector<32x16xf32> -> vector<32x16xf32>
    %c1_72 = arith.constant 1 : index
    %c0_73 = arith.constant 0 : index
    %c0_74 = arith.constant 0 : index
    %108 = vector.load %arg14[%c1_72, %c0_73, %c0_74] : memref<4x16x32xf32, #tpu.memory_space<vmem>>, vector<1x16x32xf32>
    %109 = vector.shape_cast %108 : vector<1x16x32xf32> to vector<16x32xf32>
    %cst_75 = arith.constant dense<0.000000e+00> : vector<32x32xf32>
    %110 = tpu.matmul %107, %109, %cst_75 {dimension_numbers = #tpu.dot_dimension_numbers<[1], [0], [0], [1], [0, 0, 1, 1], [], []>} : vector<32x16xf32>, vector<16x32xf32>, vector<32x32xf32> -> vector<32x32xf32>
    %111 = arith.addf %74, %110 : vector<32x32xf32>
    %112 = arith.addf %111, %26 : vector<32x32xf32>
    %c0_76 = arith.constant 0 : index
    %c0_77 = arith.constant 0 : index
    %c0_78 = arith.constant 0 : index
    %113 = vector.load %arg16[%c0_76, %c0_77, %c0_78] : memref<2x1x32xf32, #tpu.memory_space<vmem>>, vector<1x1x32xf32>
    %114 = vector.shape_cast %113 : vector<1x1x32xf32> to vector<1x32xf32>
    %c0_79 = arith.constant 0 : index
    %c0_80 = arith.constant 0 : index
    %c0_81 = arith.constant 0 : index
    %115 = vector.load %arg17[%c0_79, %c0_80, %c0_81] : memref<2x1x32xf32, #tpu.memory_space<vmem>>, vector<1x1x32xf32>
    %116 = vector.shape_cast %115 : vector<1x1x32xf32> to vector<1x32xf32>
    %cst_82 = arith.constant dense<0.000000e+00> : vector<32xf32>
    %117 = vector.multi_reduction <add>, %112, %cst_82 [1] : vector<32x32xf32> to vector<32xf32>
    %118 = vector.shape_cast %117 : vector<32xf32> to vector<32x1xf32>
    %cst_83 = arith.constant 3.200000e+01 : f32
    %119 = vector.broadcast %cst_83 : f32 to vector<32x1xf32>
    %120 = arith.divf %118, %119 : vector<32x1xf32>
    %121 = arith.mulf %112, %112 : vector<32x32xf32>
    %cst_84 = arith.constant dense<0.000000e+00> : vector<32xf32>
    %122 = vector.multi_reduction <add>, %121, %cst_84 [1] : vector<32x32xf32> to vector<32xf32>
    %123 = vector.shape_cast %122 : vector<32xf32> to vector<32x1xf32>
    %cst_85 = arith.constant 3.200000e+01 : f32
    %124 = vector.broadcast %cst_85 : f32 to vector<32x1xf32>
    %125 = arith.divf %123, %124 : vector<32x1xf32>
    %126 = arith.mulf %120, %120 : vector<32x1xf32>
    %127 = arith.subf %125, %126 : vector<32x1xf32>
    %cst_86 = arith.constant 0.000000e+00 : f32
    %128 = vector.broadcast %cst_86 : f32 to vector<32x1xf32>
    %129 = arith.maximumf %127, %128 : vector<32x1xf32>
    %130 = vector.broadcast %120 : vector<32x1xf32> to vector<32x32xf32>
    %131 = arith.subf %112, %130 : vector<32x32xf32>
    %cst_87 = arith.constant 9.99999996E-13 : f32
    %132 = vector.broadcast %cst_87 : f32 to vector<32x1xf32>
    %133 = arith.addf %129, %132 : vector<32x1xf32>
    %134 = math.rsqrt %133 : vector<32x1xf32>
    %135 = vector.broadcast %134 : vector<32x1xf32> to vector<32x32xf32>
    %136 = arith.mulf %131, %135 : vector<32x32xf32>
    %137 = vector.broadcast %114 : vector<1x32xf32> to vector<32x32xf32>
    %138 = arith.mulf %136, %137 : vector<32x32xf32>
    %139 = vector.broadcast %116 : vector<1x32xf32> to vector<32x32xf32>
    %140 = arith.addf %138, %139 : vector<32x32xf32>
    %c0_88 = arith.constant 0 : index
    %c0_89 = arith.constant 0 : index
    %c0_90 = arith.constant 0 : index
    %141 = vector.load %arg18[%c0_88, %c0_89, %c0_90] : memref<2x32x64xf32, #tpu.memory_space<vmem>>, vector<1x32x64xf32>
    %142 = vector.shape_cast %141 : vector<1x32x64xf32> to vector<32x64xf32>
    %cst_91 = arith.constant dense<0.000000e+00> : vector<32x64xf32>
    %143 = tpu.matmul %140, %142, %cst_91 {dimension_numbers = #tpu.dot_dimension_numbers<[1], [0], [0], [1], [0, 0, 1, 1], [], []>} : vector<32x32xf32>, vector<32x64xf32>, vector<32x64xf32> -> vector<32x64xf32>
    %c0_92 = arith.constant 0 : index
    %c0_93 = arith.constant 0 : index
    %c0_94 = arith.constant 0 : index
    %144 = vector.load %arg19[%c0_92, %c0_93, %c0_94] : memref<2x1x64xf32, #tpu.memory_space<vmem>>, vector<1x1x64xf32>
    %145 = vector.shape_cast %144 : vector<1x1x64xf32> to vector<1x64xf32>
    %146 = vector.broadcast %145 : vector<1x64xf32> to vector<32x64xf32>
    %147 = arith.addf %143, %146 : vector<32x64xf32>
    %cst_95 = arith.constant 5.000000e-01 : f32
    %148 = vector.broadcast %cst_95 : f32 to vector<32x64xf32>
    %149 = arith.mulf %148, %147 : vector<32x64xf32>
    %cst_96 = arith.constant 4.471500e-02 : f32
    %150 = vector.broadcast %cst_96 : f32 to vector<32x64xf32>
    %151 = arith.mulf %150, %147 : vector<32x64xf32>
    %152 = arith.mulf %151, %147 : vector<32x64xf32>
    %153 = arith.mulf %152, %147 : vector<32x64xf32>
    %154 = arith.addf %147, %153 : vector<32x64xf32>
    %cst_97 = arith.constant 0.797884583 : f32
    %155 = vector.broadcast %cst_97 : f32 to vector<32x64xf32>
    %156 = arith.mulf %155, %154 : vector<32x64xf32>
    %157 = math.tanh %156 : vector<32x64xf32>
    %cst_98 = arith.constant 1.000000e+00 : f32
    %158 = vector.broadcast %cst_98 : f32 to vector<32x64xf32>
    %159 = arith.addf %158, %157 : vector<32x64xf32>
    %160 = arith.mulf %149, %159 : vector<32x64xf32>
    %c0_99 = arith.constant 0 : index
    %c0_100 = arith.constant 0 : index
    %c0_101 = arith.constant 0 : index
    %161 = vector.load %arg20[%c0_99, %c0_100, %c0_101] : memref<2x64x32xf32, #tpu.memory_space<vmem>>, vector<1x64x32xf32>
    %162 = vector.shape_cast %161 : vector<1x64x32xf32> to vector<64x32xf32>
    %cst_102 = arith.constant dense<0.000000e+00> : vector<32x32xf32>
    %163 = tpu.matmul %160, %162, %cst_102 {dimension_numbers = #tpu.dot_dimension_numbers<[1], [0], [0], [1], [0, 0, 1, 1], [], []>} : vector<32x64xf32>, vector<64x32xf32>, vector<32x32xf32> -> vector<32x32xf32>
    %c0_103 = arith.constant 0 : index
    %c0_104 = arith.constant 0 : index
    %c0_105 = arith.constant 0 : index
    %164 = vector.load %arg21[%c0_103, %c0_104, %c0_105] : memref<2x1x32xf32, #tpu.memory_space<vmem>>, vector<1x1x32xf32>
    %165 = vector.shape_cast %164 : vector<1x1x32xf32> to vector<1x32xf32>
    %166 = vector.broadcast %165 : vector<1x32xf32> to vector<32x32xf32>
    %167 = arith.addf %163, %166 : vector<32x32xf32>
    %168 = arith.addf %167, %140 : vector<32x32xf32>
    %c0_106 = arith.constant 0 : index
    %c0_107 = arith.constant 0 : index
    %c0_108 = arith.constant 0 : index
    %169 = vector.load %arg22[%c0_106, %c0_107, %c0_108] : memref<2x1x32xf32, #tpu.memory_space<vmem>>, vector<1x1x32xf32>
    %170 = vector.shape_cast %169 : vector<1x1x32xf32> to vector<1x32xf32>
    %c0_109 = arith.constant 0 : index
    %c0_110 = arith.constant 0 : index
    %c0_111 = arith.constant 0 : index
    %171 = vector.load %arg23[%c0_109, %c0_110, %c0_111] : memref<2x1x32xf32, #tpu.memory_space<vmem>>, vector<1x1x32xf32>
    %172 = vector.shape_cast %171 : vector<1x1x32xf32> to vector<1x32xf32>
    %cst_112 = arith.constant dense<0.000000e+00> : vector<32xf32>
    %173 = vector.multi_reduction <add>, %168, %cst_112 [1] : vector<32x32xf32> to vector<32xf32>
    %174 = vector.shape_cast %173 : vector<32xf32> to vector<32x1xf32>
    %cst_113 = arith.constant 3.200000e+01 : f32
    %175 = vector.broadcast %cst_113 : f32 to vector<32x1xf32>
    %176 = arith.divf %174, %175 : vector<32x1xf32>
    %177 = arith.mulf %168, %168 : vector<32x32xf32>
    %cst_114 = arith.constant dense<0.000000e+00> : vector<32xf32>
    %178 = vector.multi_reduction <add>, %177, %cst_114 [1] : vector<32x32xf32> to vector<32xf32>
    %179 = vector.shape_cast %178 : vector<32xf32> to vector<32x1xf32>
    %cst_115 = arith.constant 3.200000e+01 : f32
    %180 = vector.broadcast %cst_115 : f32 to vector<32x1xf32>
    %181 = arith.divf %179, %180 : vector<32x1xf32>
    %182 = arith.mulf %176, %176 : vector<32x1xf32>
    %183 = arith.subf %181, %182 : vector<32x1xf32>
    %cst_116 = arith.constant 0.000000e+00 : f32
    %184 = vector.broadcast %cst_116 : f32 to vector<32x1xf32>
    %185 = arith.maximumf %183, %184 : vector<32x1xf32>
    %186 = vector.broadcast %176 : vector<32x1xf32> to vector<32x32xf32>
    %187 = arith.subf %168, %186 : vector<32x32xf32>
    %cst_117 = arith.constant 9.99999996E-13 : f32
    %188 = vector.broadcast %cst_117 : f32 to vector<32x1xf32>
    %189 = arith.addf %185, %188 : vector<32x1xf32>
    %190 = math.rsqrt %189 : vector<32x1xf32>
    %191 = vector.broadcast %190 : vector<32x1xf32> to vector<32x32xf32>
    %192 = arith.mulf %187, %191 : vector<32x32xf32>
    %193 = vector.broadcast %170 : vector<1x32xf32> to vector<32x32xf32>
    %194 = arith.mulf %192, %193 : vector<32x32xf32>
    %195 = vector.broadcast %172 : vector<1x32xf32> to vector<32x32xf32>
    %196 = arith.addf %194, %195 : vector<32x32xf32>
    %c1_118 = arith.constant 1 : index
    %c0_119 = arith.constant 0 : index
    %c0_120 = arith.constant 0 : index
    %197 = vector.load %arg15[%c1_118, %c0_119, %c0_120] : memref<2x1x32xf32, #tpu.memory_space<vmem>>, vector<1x1x32xf32>
    %198 = vector.shape_cast %197 : vector<1x1x32xf32> to vector<1x32xf32>
    %c2 = arith.constant 2 : index
    %c0_121 = arith.constant 0 : index
    %c0_122 = arith.constant 0 : index
    %199 = vector.load %arg8[%c2, %c0_121, %c0_122] : memref<4x32x16xf32, #tpu.memory_space<vmem>>, vector<1x32x16xf32>
    %200 = vector.shape_cast %199 : vector<1x32x16xf32> to vector<32x16xf32>
    %cst_123 = arith.constant dense<0.000000e+00> : vector<32x16xf32>
    %201 = tpu.matmul %196, %200, %cst_123 {dimension_numbers = #tpu.dot_dimension_numbers<[1], [0], [0], [1], [0, 0, 1, 1], [], []>} : vector<32x32xf32>, vector<32x16xf32>, vector<32x16xf32> -> vector<32x16xf32>
    %c2_124 = arith.constant 2 : index
    %c0_125 = arith.constant 0 : index
    %c0_126 = arith.constant 0 : index
    %202 = vector.load %arg9[%c2_124, %c0_125, %c0_126] : memref<4x1x16xf32, #tpu.memory_space<vmem>>, vector<1x1x16xf32>
    %203 = vector.shape_cast %202 : vector<1x1x16xf32> to vector<1x16xf32>
    %204 = vector.broadcast %203 : vector<1x16xf32> to vector<32x16xf32>
    %205 = arith.addf %201, %204 : vector<32x16xf32>
    %c2_127 = arith.constant 2 : index
    %c0_128 = arith.constant 0 : index
    %c0_129 = arith.constant 0 : index
    %206 = vector.load %arg10[%c2_127, %c0_128, %c0_129] : memref<4x32x16xf32, #tpu.memory_space<vmem>>, vector<1x32x16xf32>
    %207 = vector.shape_cast %206 : vector<1x32x16xf32> to vector<32x16xf32>
    %cst_130 = arith.constant dense<0.000000e+00> : vector<32x16xf32>
    %208 = tpu.matmul %196, %207, %cst_130 {dimension_numbers = #tpu.dot_dimension_numbers<[1], [0], [0], [1], [0, 0, 1, 1], [], []>} : vector<32x32xf32>, vector<32x16xf32>, vector<32x16xf32> -> vector<32x16xf32>
    %c2_131 = arith.constant 2 : index
    %c0_132 = arith.constant 0 : index
    %c0_133 = arith.constant 0 : index
    %209 = vector.load %arg11[%c2_131, %c0_132, %c0_133] : memref<4x1x16xf32, #tpu.memory_space<vmem>>, vector<1x1x16xf32>
    %210 = vector.shape_cast %209 : vector<1x1x16xf32> to vector<1x16xf32>
    %211 = vector.broadcast %210 : vector<1x16xf32> to vector<32x16xf32>
    %212 = arith.addf %208, %211 : vector<32x16xf32>
    %c2_134 = arith.constant 2 : index
    %c0_135 = arith.constant 0 : index
    %c0_136 = arith.constant 0 : index
    %213 = vector.load %arg12[%c2_134, %c0_135, %c0_136] : memref<4x32x16xf32, #tpu.memory_space<vmem>>, vector<1x32x16xf32>
    %214 = vector.shape_cast %213 : vector<1x32x16xf32> to vector<32x16xf32>
    %cst_137 = arith.constant dense<0.000000e+00> : vector<32x16xf32>
    %215 = tpu.matmul %196, %214, %cst_137 {dimension_numbers = #tpu.dot_dimension_numbers<[1], [0], [0], [1], [0, 0, 1, 1], [], []>} : vector<32x32xf32>, vector<32x16xf32>, vector<32x16xf32> -> vector<32x16xf32>
    %c2_138 = arith.constant 2 : index
    %c0_139 = arith.constant 0 : index
    %c0_140 = arith.constant 0 : index
    %216 = vector.load %arg13[%c2_138, %c0_139, %c0_140] : memref<4x1x16xf32, #tpu.memory_space<vmem>>, vector<1x1x16xf32>
    %217 = vector.shape_cast %216 : vector<1x1x16xf32> to vector<1x16xf32>
    %218 = vector.broadcast %217 : vector<1x16xf32> to vector<32x16xf32>
    %219 = arith.addf %215, %218 : vector<32x16xf32>
    %cst_141 = arith.constant dense<0.000000e+00> : vector<32x32xf32>
    %220 = tpu.matmul %205, %212, %cst_141 {dimension_numbers = #tpu.dot_dimension_numbers<[1], [1], [0], [0], [0, 0, 1, 0], [], []>} : vector<32x16xf32>, vector<32x16xf32>, vector<32x32xf32> -> vector<32x32xf32>
    %221 = arith.addf %220, %34 : vector<32x32xf32>
    %cst_142 = arith.constant dense<0xFF800000> : vector<32xf32>
    %222 = vector.multi_reduction <maximumf>, %221, %cst_142 [1] : vector<32x32xf32> to vector<32xf32>
    %223 = vector.shape_cast %222 : vector<32xf32> to vector<32x1xf32>
    %224 = vector.broadcast %223 : vector<32x1xf32> to vector<32x32xf32>
    %225 = arith.subf %221, %224 : vector<32x32xf32>
    %226 = math.exp %225 : vector<32x32xf32>
    %cst_143 = arith.constant dense<0.000000e+00> : vector<32xf32>
    %227 = vector.multi_reduction <add>, %226, %cst_143 [1] : vector<32x32xf32> to vector<32xf32>
    %228 = vector.shape_cast %227 : vector<32xf32> to vector<32x1xf32>
    %229 = vector.broadcast %228 : vector<32x1xf32> to vector<32x32xf32>
    %230 = arith.divf %226, %229 : vector<32x32xf32>
    %cst_144 = arith.constant dense<0.000000e+00> : vector<32x16xf32>
    %231 = tpu.matmul %230, %219, %cst_144 {dimension_numbers = #tpu.dot_dimension_numbers<[1], [0], [0], [1], [0, 0, 1, 1], [], []>} : vector<32x32xf32>, vector<32x16xf32>, vector<32x16xf32> -> vector<32x16xf32>
    %c2_145 = arith.constant 2 : index
    %c0_146 = arith.constant 0 : index
    %c0_147 = arith.constant 0 : index
    %232 = vector.load %arg14[%c2_145, %c0_146, %c0_147] : memref<4x16x32xf32, #tpu.memory_space<vmem>>, vector<1x16x32xf32>
    %233 = vector.shape_cast %232 : vector<1x16x32xf32> to vector<16x32xf32>
    %cst_148 = arith.constant dense<0.000000e+00> : vector<32x32xf32>
    %234 = tpu.matmul %231, %233, %cst_148 {dimension_numbers = #tpu.dot_dimension_numbers<[1], [0], [0], [1], [0, 0, 1, 1], [], []>} : vector<32x16xf32>, vector<16x32xf32>, vector<32x32xf32> -> vector<32x32xf32>
    %235 = vector.broadcast %198 : vector<1x32xf32> to vector<32x32xf32>
    %236 = arith.addf %235, %234 : vector<32x32xf32>
    %c3 = arith.constant 3 : index
    %c0_149 = arith.constant 0 : index
    %c0_150 = arith.constant 0 : index
    %237 = vector.load %arg8[%c3, %c0_149, %c0_150] : memref<4x32x16xf32, #tpu.memory_space<vmem>>, vector<1x32x16xf32>
    %238 = vector.shape_cast %237 : vector<1x32x16xf32> to vector<32x16xf32>
    %cst_151 = arith.constant dense<0.000000e+00> : vector<32x16xf32>
    %239 = tpu.matmul %196, %238, %cst_151 {dimension_numbers = #tpu.dot_dimension_numbers<[1], [0], [0], [1], [0, 0, 1, 1], [], []>} : vector<32x32xf32>, vector<32x16xf32>, vector<32x16xf32> -> vector<32x16xf32>
    %c3_152 = arith.constant 3 : index
    %c0_153 = arith.constant 0 : index
    %c0_154 = arith.constant 0 : index
    %240 = vector.load %arg9[%c3_152, %c0_153, %c0_154] : memref<4x1x16xf32, #tpu.memory_space<vmem>>, vector<1x1x16xf32>
    %241 = vector.shape_cast %240 : vector<1x1x16xf32> to vector<1x16xf32>
    %242 = vector.broadcast %241 : vector<1x16xf32> to vector<32x16xf32>
    %243 = arith.addf %239, %242 : vector<32x16xf32>
    %c3_155 = arith.constant 3 : index
    %c0_156 = arith.constant 0 : index
    %c0_157 = arith.constant 0 : index
    %244 = vector.load %arg10[%c3_155, %c0_156, %c0_157] : memref<4x32x16xf32, #tpu.memory_space<vmem>>, vector<1x32x16xf32>
    %245 = vector.shape_cast %244 : vector<1x32x16xf32> to vector<32x16xf32>
    %cst_158 = arith.constant dense<0.000000e+00> : vector<32x16xf32>
    %246 = tpu.matmul %196, %245, %cst_158 {dimension_numbers = #tpu.dot_dimension_numbers<[1], [0], [0], [1], [0, 0, 1, 1], [], []>} : vector<32x32xf32>, vector<32x16xf32>, vector<32x16xf32> -> vector<32x16xf32>
    %c3_159 = arith.constant 3 : index
    %c0_160 = arith.constant 0 : index
    %c0_161 = arith.constant 0 : index
    %247 = vector.load %arg11[%c3_159, %c0_160, %c0_161] : memref<4x1x16xf32, #tpu.memory_space<vmem>>, vector<1x1x16xf32>
    %248 = vector.shape_cast %247 : vector<1x1x16xf32> to vector<1x16xf32>
    %249 = vector.broadcast %248 : vector<1x16xf32> to vector<32x16xf32>
    %250 = arith.addf %246, %249 : vector<32x16xf32>
    %c3_162 = arith.constant 3 : index
    %c0_163 = arith.constant 0 : index
    %c0_164 = arith.constant 0 : index
    %251 = vector.load %arg12[%c3_162, %c0_163, %c0_164] : memref<4x32x16xf32, #tpu.memory_space<vmem>>, vector<1x32x16xf32>
    %252 = vector.shape_cast %251 : vector<1x32x16xf32> to vector<32x16xf32>
    %cst_165 = arith.constant dense<0.000000e+00> : vector<32x16xf32>
    %253 = tpu.matmul %196, %252, %cst_165 {dimension_numbers = #tpu.dot_dimension_numbers<[1], [0], [0], [1], [0, 0, 1, 1], [], []>} : vector<32x32xf32>, vector<32x16xf32>, vector<32x16xf32> -> vector<32x16xf32>
    %c3_166 = arith.constant 3 : index
    %c0_167 = arith.constant 0 : index
    %c0_168 = arith.constant 0 : index
    %254 = vector.load %arg13[%c3_166, %c0_167, %c0_168] : memref<4x1x16xf32, #tpu.memory_space<vmem>>, vector<1x1x16xf32>
    %255 = vector.shape_cast %254 : vector<1x1x16xf32> to vector<1x16xf32>
    %256 = vector.broadcast %255 : vector<1x16xf32> to vector<32x16xf32>
    %257 = arith.addf %253, %256 : vector<32x16xf32>
    %cst_169 = arith.constant dense<0.000000e+00> : vector<32x32xf32>
    %258 = tpu.matmul %243, %250, %cst_169 {dimension_numbers = #tpu.dot_dimension_numbers<[1], [1], [0], [0], [0, 0, 1, 0], [], []>} : vector<32x16xf32>, vector<32x16xf32>, vector<32x32xf32> -> vector<32x32xf32>
    %259 = arith.addf %258, %34 : vector<32x32xf32>
    %cst_170 = arith.constant dense<0xFF800000> : vector<32xf32>
    %260 = vector.multi_reduction <maximumf>, %259, %cst_170 [1] : vector<32x32xf32> to vector<32xf32>
    %261 = vector.shape_cast %260 : vector<32xf32> to vector<32x1xf32>
    %262 = vector.broadcast %261 : vector<32x1xf32> to vector<32x32xf32>
    %263 = arith.subf %259, %262 : vector<32x32xf32>
    %264 = math.exp %263 : vector<32x32xf32>
    %cst_171 = arith.constant dense<0.000000e+00> : vector<32xf32>
    %265 = vector.multi_reduction <add>, %264, %cst_171 [1] : vector<32x32xf32> to vector<32xf32>
    %266 = vector.shape_cast %265 : vector<32xf32> to vector<32x1xf32>
    %267 = vector.broadcast %266 : vector<32x1xf32> to vector<32x32xf32>
    %268 = arith.divf %264, %267 : vector<32x32xf32>
    %cst_172 = arith.constant dense<0.000000e+00> : vector<32x16xf32>
    %269 = tpu.matmul %268, %257, %cst_172 {dimension_numbers = #tpu.dot_dimension_numbers<[1], [0], [0], [1], [0, 0, 1, 1], [], []>} : vector<32x32xf32>, vector<32x16xf32>, vector<32x16xf32> -> vector<32x16xf32>
    %c3_173 = arith.constant 3 : index
    %c0_174 = arith.constant 0 : index
    %c0_175 = arith.constant 0 : index
    %270 = vector.load %arg14[%c3_173, %c0_174, %c0_175] : memref<4x16x32xf32, #tpu.memory_space<vmem>>, vector<1x16x32xf32>
    %271 = vector.shape_cast %270 : vector<1x16x32xf32> to vector<16x32xf32>
    %cst_176 = arith.constant dense<0.000000e+00> : vector<32x32xf32>
    %272 = tpu.matmul %269, %271, %cst_176 {dimension_numbers = #tpu.dot_dimension_numbers<[1], [0], [0], [1], [0, 0, 1, 1], [], []>} : vector<32x16xf32>, vector<16x32xf32>, vector<32x32xf32> -> vector<32x32xf32>
    %273 = arith.addf %236, %272 : vector<32x32xf32>
    %274 = arith.addf %273, %196 : vector<32x32xf32>
    %c1_177 = arith.constant 1 : index
    %c0_178 = arith.constant 0 : index
    %c0_179 = arith.constant 0 : index
    %275 = vector.load %arg16[%c1_177, %c0_178, %c0_179] : memref<2x1x32xf32, #tpu.memory_space<vmem>>, vector<1x1x32xf32>
    %276 = vector.shape_cast %275 : vector<1x1x32xf32> to vector<1x32xf32>
    %c1_180 = arith.constant 1 : index
    %c0_181 = arith.constant 0 : index
    %c0_182 = arith.constant 0 : index
    %277 = vector.load %arg17[%c1_180, %c0_181, %c0_182] : memref<2x1x32xf32, #tpu.memory_space<vmem>>, vector<1x1x32xf32>
    %278 = vector.shape_cast %277 : vector<1x1x32xf32> to vector<1x32xf32>
    %cst_183 = arith.constant dense<0.000000e+00> : vector<32xf32>
    %279 = vector.multi_reduction <add>, %274, %cst_183 [1] : vector<32x32xf32> to vector<32xf32>
    %280 = vector.shape_cast %279 : vector<32xf32> to vector<32x1xf32>
    %cst_184 = arith.constant 3.200000e+01 : f32
    %281 = vector.broadcast %cst_184 : f32 to vector<32x1xf32>
    %282 = arith.divf %280, %281 : vector<32x1xf32>
    %283 = arith.mulf %274, %274 : vector<32x32xf32>
    %cst_185 = arith.constant dense<0.000000e+00> : vector<32xf32>
    %284 = vector.multi_reduction <add>, %283, %cst_185 [1] : vector<32x32xf32> to vector<32xf32>
    %285 = vector.shape_cast %284 : vector<32xf32> to vector<32x1xf32>
    %cst_186 = arith.constant 3.200000e+01 : f32
    %286 = vector.broadcast %cst_186 : f32 to vector<32x1xf32>
    %287 = arith.divf %285, %286 : vector<32x1xf32>
    %288 = arith.mulf %282, %282 : vector<32x1xf32>
    %289 = arith.subf %287, %288 : vector<32x1xf32>
    %cst_187 = arith.constant 0.000000e+00 : f32
    %290 = vector.broadcast %cst_187 : f32 to vector<32x1xf32>
    %291 = arith.maximumf %289, %290 : vector<32x1xf32>
    %292 = vector.broadcast %282 : vector<32x1xf32> to vector<32x32xf32>
    %293 = arith.subf %274, %292 : vector<32x32xf32>
    %cst_188 = arith.constant 9.99999996E-13 : f32
    %294 = vector.broadcast %cst_188 : f32 to vector<32x1xf32>
    %295 = arith.addf %291, %294 : vector<32x1xf32>
    %296 = math.rsqrt %295 : vector<32x1xf32>
    %297 = vector.broadcast %296 : vector<32x1xf32> to vector<32x32xf32>
    %298 = arith.mulf %293, %297 : vector<32x32xf32>
    %299 = vector.broadcast %276 : vector<1x32xf32> to vector<32x32xf32>
    %300 = arith.mulf %298, %299 : vector<32x32xf32>
    %301 = vector.broadcast %278 : vector<1x32xf32> to vector<32x32xf32>
    %302 = arith.addf %300, %301 : vector<32x32xf32>
    %c1_189 = arith.constant 1 : index
    %c0_190 = arith.constant 0 : index
    %c0_191 = arith.constant 0 : index
    %303 = vector.load %arg18[%c1_189, %c0_190, %c0_191] : memref<2x32x64xf32, #tpu.memory_space<vmem>>, vector<1x32x64xf32>
    %304 = vector.shape_cast %303 : vector<1x32x64xf32> to vector<32x64xf32>
    %cst_192 = arith.constant dense<0.000000e+00> : vector<32x64xf32>
    %305 = tpu.matmul %302, %304, %cst_192 {dimension_numbers = #tpu.dot_dimension_numbers<[1], [0], [0], [1], [0, 0, 1, 1], [], []>} : vector<32x32xf32>, vector<32x64xf32>, vector<32x64xf32> -> vector<32x64xf32>
    %c1_193 = arith.constant 1 : index
    %c0_194 = arith.constant 0 : index
    %c0_195 = arith.constant 0 : index
    %306 = vector.load %arg19[%c1_193, %c0_194, %c0_195] : memref<2x1x64xf32, #tpu.memory_space<vmem>>, vector<1x1x64xf32>
    %307 = vector.shape_cast %306 : vector<1x1x64xf32> to vector<1x64xf32>
    %308 = vector.broadcast %307 : vector<1x64xf32> to vector<32x64xf32>
    %309 = arith.addf %305, %308 : vector<32x64xf32>
    %cst_196 = arith.constant 5.000000e-01 : f32
    %310 = vector.broadcast %cst_196 : f32 to vector<32x64xf32>
    %311 = arith.mulf %310, %309 : vector<32x64xf32>
    %cst_197 = arith.constant 4.471500e-02 : f32
    %312 = vector.broadcast %cst_197 : f32 to vector<32x64xf32>
    %313 = arith.mulf %312, %309 : vector<32x64xf32>
    %314 = arith.mulf %313, %309 : vector<32x64xf32>
    %315 = arith.mulf %314, %309 : vector<32x64xf32>
    %316 = arith.addf %309, %315 : vector<32x64xf32>
    %cst_198 = arith.constant 0.797884583 : f32
    %317 = vector.broadcast %cst_198 : f32 to vector<32x64xf32>
    %318 = arith.mulf %317, %316 : vector<32x64xf32>
    %319 = math.tanh %318 : vector<32x64xf32>
    %cst_199 = arith.constant 1.000000e+00 : f32
    %320 = vector.broadcast %cst_199 : f32 to vector<32x64xf32>
    %321 = arith.addf %320, %319 : vector<32x64xf32>
    %322 = arith.mulf %311, %321 : vector<32x64xf32>
    %c1_200 = arith.constant 1 : index
    %c0_201 = arith.constant 0 : index
    %c0_202 = arith.constant 0 : index
    %323 = vector.load %arg20[%c1_200, %c0_201, %c0_202] : memref<2x64x32xf32, #tpu.memory_space<vmem>>, vector<1x64x32xf32>
    %324 = vector.shape_cast %323 : vector<1x64x32xf32> to vector<64x32xf32>
    %cst_203 = arith.constant dense<0.000000e+00> : vector<32x32xf32>
    %325 = tpu.matmul %322, %324, %cst_203 {dimension_numbers = #tpu.dot_dimension_numbers<[1], [0], [0], [1], [0, 0, 1, 1], [], []>} : vector<32x64xf32>, vector<64x32xf32>, vector<32x32xf32> -> vector<32x32xf32>
    %c1_204 = arith.constant 1 : index
    %c0_205 = arith.constant 0 : index
    %c0_206 = arith.constant 0 : index
    %326 = vector.load %arg21[%c1_204, %c0_205, %c0_206] : memref<2x1x32xf32, #tpu.memory_space<vmem>>, vector<1x1x32xf32>
    %327 = vector.shape_cast %326 : vector<1x1x32xf32> to vector<1x32xf32>
    %328 = vector.broadcast %327 : vector<1x32xf32> to vector<32x32xf32>
    %329 = arith.addf %325, %328 : vector<32x32xf32>
    %330 = arith.addf %329, %302 : vector<32x32xf32>
    %c1_207 = arith.constant 1 : index
    %c0_208 = arith.constant 0 : index
    %c0_209 = arith.constant 0 : index
    %331 = vector.load %arg22[%c1_207, %c0_208, %c0_209] : memref<2x1x32xf32, #tpu.memory_space<vmem>>, vector<1x1x32xf32>
    %332 = vector.shape_cast %331 : vector<1x1x32xf32> to vector<1x32xf32>
    %c1_210 = arith.constant 1 : index
    %c0_211 = arith.constant 0 : index
    %c0_212 = arith.constant 0 : index
    %333 = vector.load %arg23[%c1_210, %c0_211, %c0_212] : memref<2x1x32xf32, #tpu.memory_space<vmem>>, vector<1x1x32xf32>
    %334 = vector.shape_cast %333 : vector<1x1x32xf32> to vector<1x32xf32>
    %cst_213 = arith.constant dense<0.000000e+00> : vector<32xf32>
    %335 = vector.multi_reduction <add>, %330, %cst_213 [1] : vector<32x32xf32> to vector<32xf32>
    %336 = vector.shape_cast %335 : vector<32xf32> to vector<32x1xf32>
    %cst_214 = arith.constant 3.200000e+01 : f32
    %337 = vector.broadcast %cst_214 : f32 to vector<32x1xf32>
    %338 = arith.divf %336, %337 : vector<32x1xf32>
    %339 = arith.mulf %330, %330 : vector<32x32xf32>
    %cst_215 = arith.constant dense<0.000000e+00> : vector<32xf32>
    %340 = vector.multi_reduction <add>, %339, %cst_215 [1] : vector<32x32xf32> to vector<32xf32>
    %341 = vector.shape_cast %340 : vector<32xf32> to vector<32x1xf32>
    %cst_216 = arith.constant 3.200000e+01 : f32
    %342 = vector.broadcast %cst_216 : f32 to vector<32x1xf32>
    %343 = arith.divf %341, %342 : vector<32x1xf32>
    %344 = arith.mulf %338, %338 : vector<32x1xf32>
    %345 = arith.subf %343, %344 : vector<32x1xf32>
    %cst_217 = arith.constant 0.000000e+00 : f32
    %346 = vector.broadcast %cst_217 : f32 to vector<32x1xf32>
    %347 = arith.maximumf %345, %346 : vector<32x1xf32>
    %348 = vector.broadcast %338 : vector<32x1xf32> to vector<32x32xf32>
    %349 = arith.subf %330, %348 : vector<32x32xf32>
    %cst_218 = arith.constant 9.99999996E-13 : f32
    %350 = vector.broadcast %cst_218 : f32 to vector<32x1xf32>
    %351 = arith.addf %347, %350 : vector<32x1xf32>
    %352 = math.rsqrt %351 : vector<32x1xf32>
    %353 = vector.broadcast %352 : vector<32x1xf32> to vector<32x32xf32>
    %354 = arith.mulf %349, %353 : vector<32x32xf32>
    %355 = vector.broadcast %332 : vector<1x32xf32> to vector<32x32xf32>
    %356 = arith.mulf %354, %355 : vector<32x32xf32>
    %357 = vector.broadcast %334 : vector<1x32xf32> to vector<32x32xf32>
    %358 = arith.addf %356, %357 : vector<32x32xf32>
    %c0_219 = arith.constant 0 : index
    %c0_220 = arith.constant 0 : index
    %359 = vector.load %arg4[%c0_219, %c0_220] : memref<4x32xf32, #tpu.memory_space<vmem>>, vector<4x32xf32>
    %cst_221 = arith.constant dense<0.000000e+00> : vector<4x32xf32>
    %360 = tpu.matmul %359, %358, %cst_221 {dimension_numbers = #tpu.dot_dimension_numbers<[1], [0], [0], [1], [0, 0, 1, 1], [], []>} : vector<4x32xf32>, vector<32x32xf32>, vector<4x32xf32> -> vector<4x32xf32>
    %c0_222 = arith.constant 0 : index
    %c0_223 = arith.constant 0 : index
    %361 = vector.load %arg4[%c0_222, %c0_223] : memref<4x32xf32, #tpu.memory_space<vmem>>, vector<4x32xf32>
    %362 = vector.broadcast %27 : vector<1x32xf32> to vector<4x32xf32>
    %363 = arith.mulf %361, %362 : vector<4x32xf32>
    %cst_224 = arith.constant dense<0.000000e+00> : vector<4xf32>
    %364 = vector.multi_reduction <add>, %363, %cst_224 [1] : vector<4x32xf32> to vector<4xf32>
    %365 = vector.shape_cast %364 : vector<4xf32> to vector<4x1xf32>
    %366 = vector.broadcast %365 : vector<4x1xf32> to vector<4x32xf32>
    %367 = arith.divf %360, %366 : vector<4x32xf32>
    %368 = vector.extract_strided_slice %367 {offsets = [0, 0], sizes = [2, 32], strides = [1, 1]} : vector<4x32xf32> to vector<2x32xf32>
    %369 = vector.extract_strided_slice %367 {offsets = [2, 0], sizes = [2, 32], strides = [1, 1]} : vector<4x32xf32> to vector<2x32xf32>
    %370 = arith.subf %368, %369 : vector<2x32xf32>
    %371 = math.absf %370 : vector<2x32xf32>
    %372 = arith.mulf %368, %368 : vector<2x32xf32>
    %cst_225 = arith.constant dense<0.000000e+00> : vector<2xf32>
    %373 = vector.multi_reduction <add>, %372, %cst_225 [1] : vector<2x32xf32> to vector<2xf32>
    %374 = vector.shape_cast %373 : vector<2xf32> to vector<2x1xf32>
    %375 = arith.mulf %369, %369 : vector<2x32xf32>
    %cst_226 = arith.constant dense<0.000000e+00> : vector<2xf32>
    %376 = vector.multi_reduction <add>, %375, %cst_226 [1] : vector<2x32xf32> to vector<2xf32>
    %377 = vector.shape_cast %376 : vector<2xf32> to vector<2x1xf32>
    %378 = arith.addf %374, %377 : vector<2x1xf32>
    %379 = arith.mulf %371, %371 : vector<2x32xf32>
    %cst_227 = arith.constant dense<0.000000e+00> : vector<2xf32>
    %380 = vector.multi_reduction <add>, %379, %cst_227 [1] : vector<2x32xf32> to vector<2xf32>
    %381 = vector.shape_cast %380 : vector<2xf32> to vector<2x1xf32>
    %382 = arith.addf %378, %381 : vector<2x1xf32>
    %383 = math.sqrt %382 : vector<2x1xf32>
    %c0_228 = arith.constant 0 : index
    %c0_229 = arith.constant 0 : index
    %c0_230 = arith.constant 0 : index
    %384 = vector.load %arg24[%c0_228, %c0_229, %c0_230] : memref<3x32x3xf32, #tpu.memory_space<vmem>>, vector<1x32x3xf32>
    %385 = vector.shape_cast %384 : vector<1x32x3xf32> to vector<32x3xf32>
    %cst_231 = arith.constant dense<0.000000e+00> : vector<2x3xf32>
    %386 = tpu.matmul %368, %385, %cst_231 {dimension_numbers = #tpu.dot_dimension_numbers<[1], [0], [0], [1], [0, 0, 1, 1], [], []>} : vector<2x32xf32>, vector<32x3xf32>, vector<2x3xf32> -> vector<2x3xf32>
    %c1_232 = arith.constant 1 : index
    %c0_233 = arith.constant 0 : index
    %c0_234 = arith.constant 0 : index
    %387 = vector.load %arg24[%c1_232, %c0_233, %c0_234] : memref<3x32x3xf32, #tpu.memory_space<vmem>>, vector<1x32x3xf32>
    %388 = vector.shape_cast %387 : vector<1x32x3xf32> to vector<32x3xf32>
    %cst_235 = arith.constant dense<0.000000e+00> : vector<2x3xf32>
    %389 = tpu.matmul %369, %388, %cst_235 {dimension_numbers = #tpu.dot_dimension_numbers<[1], [0], [0], [1], [0, 0, 1, 1], [], []>} : vector<2x32xf32>, vector<32x3xf32>, vector<2x3xf32> -> vector<2x3xf32>
    %390 = arith.addf %386, %389 : vector<2x3xf32>
    %c2_236 = arith.constant 2 : index
    %c0_237 = arith.constant 0 : index
    %c0_238 = arith.constant 0 : index
    %391 = vector.load %arg24[%c2_236, %c0_237, %c0_238] : memref<3x32x3xf32, #tpu.memory_space<vmem>>, vector<1x32x3xf32>
    %392 = vector.shape_cast %391 : vector<1x32x3xf32> to vector<32x3xf32>
    %cst_239 = arith.constant dense<0.000000e+00> : vector<2x3xf32>
    %393 = tpu.matmul %371, %392, %cst_239 {dimension_numbers = #tpu.dot_dimension_numbers<[1], [0], [0], [1], [0, 0, 1, 1], [], []>} : vector<2x32xf32>, vector<32x3xf32>, vector<2x3xf32> -> vector<2x3xf32>
    %394 = arith.addf %390, %393 : vector<2x3xf32>
    %395 = vector.broadcast %383 : vector<2x1xf32> to vector<2x3xf32>
    %396 = arith.divf %394, %395 : vector<2x3xf32>
    %c0_240 = arith.constant 0 : index
    %c0_241 = arith.constant 0 : index
    %397 = vector.load %arg25[%c0_240, %c0_241] : memref<1x3xf32, #tpu.memory_space<vmem>>, vector<1x3xf32>
    %398 = vector.broadcast %397 : vector<1x3xf32> to vector<2x3xf32>
    %399 = arith.addf %396, %398 : vector<2x3xf32>
    %cst_242 = arith.constant dense<0xFF800000> : vector<2xf32>
    %400 = vector.multi_reduction <maximumf>, %399, %cst_242 [1] : vector<2x3xf32> to vector<2xf32>
    %401 = vector.shape_cast %400 : vector<2xf32> to vector<2x1xf32>
    %402 = vector.broadcast %401 : vector<2x1xf32> to vector<2x3xf32>
    %403 = arith.subf %399, %402 : vector<2x3xf32>
    %404 = math.exp %403 : vector<2x3xf32>
    %cst_243 = arith.constant dense<0.000000e+00> : vector<2xf32>
    %405 = vector.multi_reduction <add>, %404, %cst_243 [1] : vector<2x3xf32> to vector<2xf32>
    %406 = vector.shape_cast %405 : vector<2xf32> to vector<2x1xf32>
    %407 = math.log %406 : vector<2x1xf32>
    %408 = vector.broadcast %407 : vector<2x1xf32> to vector<2x3xf32>
    %409 = arith.subf %403, %408 : vector<2x3xf32>
    %410 = tpu.iota {dimensions = array<i32: 1>} : vector<2x3xi32>
    %c0_244 = arith.constant 0 : index
    %c0_245 = arith.constant 0 : index
    %411 = vector.load %arg3[%c0_244, %c0_245] : memref<2x1xi32, #tpu.memory_space<vmem>>, vector<2x1xi32>
    %412 = vector.broadcast %411 : vector<2x1xi32> to vector<2x3xi32>
    %413 = arith.cmpi eq, %410, %412 : vector<2x3xi32>
    %cst_246 = arith.constant 1.000000e+00 : f32
    %cst_247 = arith.constant 0.000000e+00 : f32
    %414 = vector.broadcast %cst_246 : f32 to vector<2x3xf32>
    %415 = vector.broadcast %cst_247 : f32 to vector<2x3xf32>
    %416 = arith.select %413, %414, %415 : vector<2x3xi1>, vector<2x3xf32>
    %417 = arith.mulf %416, %409 : vector<2x3xf32>
    %418 = vector.shape_cast %417 : vector<2x3xf32> to vector<1x2x3xf32>
    %cst_248 = arith.constant dense<0.000000e+00> : vector<1xf32>
    %419 = vector.multi_reduction <add>, %418, %cst_248 [1, 2] : vector<1x2x3xf32> to vector<1xf32>
    %420 = vector.shape_cast %419 : vector<1xf32> to vector<1x1x1xf32>
    %421 = vector.extract %420[0, 0, 0] : f32 from vector<1x1x1xf32>
    %cst_249 = arith.constant 0.000000e+00 : f32
    %422 = arith.subf %cst_249, %421 : f32
    %cst_250 = arith.constant 2.000000e+00 : f32
    %423 = arith.divf %422, %cst_250 : f32
    %424 = vector.broadcast %423 : f32 to vector<1x1xf32>
    %c0_251 = arith.constant 0 : index
    %c0_252 = arith.constant 0 : index
    %425 = vector.load %arg26[%c0_251, %c0_252] : memref<1x1xf32, #tpu.memory_space<vmem>>, vector<1x1xf32>
    tpu.vector_store %arg26[%c0_251, %c0_252], %424 {strides = array<i32>} : memref<1x1xf32, #tpu.memory_space<vmem>>, vector<1x1xf32>,
    return
  }
  func.func @transform_0(%arg0: i32) -> (i32, i32) {
    %c0_i32 = arith.constant 0 : i32
    %c0_i32_0 = arith.constant 0 : i32
    %c0_i32_1 = arith.constant 0 : i32
    return %c0_i32, %c0_i32_0 : i32, i32
  }
  func.func @transform_1(%arg0: i32) -> (i32, i32) {
    %c0_i32 = arith.constant 0 : i32
    %c0_i32_0 = arith.constant 0 : i32
    %c0_i32_1 = arith.constant 0 : i32
    return %c0_i32, %c0_i32_0 : i32, i32
  }
  func.func @transform_2(%arg0: i32) -> (i32, i32) {
    %c0_i32 = arith.constant 0 : i32
    %c0_i32_0 = arith.constant 0 : i32
    %c0_i32_1 = arith.constant 0 : i32
    return %c0_i32, %c0_i32_0 : i32, i32
  }
  func.func @transform_3(%arg0: i32) -> (i32, i32) {
    %c0_i32 = arith.constant 0 : i32
    %c0_i32_0 = arith.constant 0 : i32
    %c0_i32_1 = arith.constant 0 : i32
    return %c0_i32, %c0_i32_0 : i32, i32
  }
  func.func @transform_4(%arg0: i32) -> (i32, i32) {
    %c0_i32 = arith.constant 0 : i32
    %c0_i32_0 = arith.constant 0 : i32
    %c0_i32_1 = arith.constant 0 : i32
    return %c0_i32, %c0_i32_0 : i32, i32
  }
  func.func @transform_5(%arg0: i32) -> (i32, i32) {
    %c0_i32 = arith.constant 0 : i32
    %c0_i32_0 = arith.constant 0 : i32
    %c0_i32_1 = arith.constant 0 : i32
    return %c0_i32, %c0_i32_0 : i32, i32
  }
  func.func @transform_6(%arg0: i32) -> (i32, i32) {
    %c0_i32 = arith.constant 0 : i32
    %c0_i32_0 = arith.constant 0 : i32
    %c0_i32_1 = arith.constant 0 : i32
    return %c0_i32, %c0_i32_0 : i32, i32
  }
  func.func @transform_7(%arg0: i32) -> (i32, i32, i32) {
    %c0_i32 = arith.constant 0 : i32
    %c0_i32_0 = arith.constant 0 : i32
    %c0_i32_1 = arith.constant 0 : i32
    %c0_i32_2 = arith.constant 0 : i32
    return %c0_i32, %c0_i32_0, %c0_i32_1 : i32, i32, i32
  }
  func.func @transform_8(%arg0: i32) -> (i32, i32, i32) {
    %c0_i32 = arith.constant 0 : i32
    %c0_i32_0 = arith.constant 0 : i32
    %c0_i32_1 = arith.constant 0 : i32
    %c0_i32_2 = arith.constant 0 : i32
    return %c0_i32, %c0_i32_0, %c0_i32_1 : i32, i32, i32
  }
  func.func @transform_9(%arg0: i32) -> (i32, i32, i32) {
    %c0_i32 = arith.constant 0 : i32
    %c0_i32_0 = arith.constant 0 : i32
    %c0_i32_1 = arith.constant 0 : i32
    %c0_i32_2 = arith.constant 0 : i32
    return %c0_i32, %c0_i32_0, %c0_i32_1 : i32, i32, i32
  }
  func.func @transform_10(%arg0: i32) -> (i32, i32, i32) {
    %c0_i32 = arith.constant 0 : i32
    %c0_i32_0 = arith.constant 0 : i32
    %c0_i32_1 = arith.constant 0 : i32
    %c0_i32_2 = arith.constant 0 : i32
    return %c0_i32, %c0_i32_0, %c0_i32_1 : i32, i32, i32
  }
  func.func @transform_11(%arg0: i32) -> (i32, i32, i32) {
    %c0_i32 = arith.constant 0 : i32
    %c0_i32_0 = arith.constant 0 : i32
    %c0_i32_1 = arith.constant 0 : i32
    %c0_i32_2 = arith.constant 0 : i32
    return %c0_i32, %c0_i32_0, %c0_i32_1 : i32, i32, i32
  }
  func.func @transform_12(%arg0: i32) -> (i32, i32, i32) {
    %c0_i32 = arith.constant 0 : i32
    %c0_i32_0 = arith.constant 0 : i32
    %c0_i32_1 = arith.constant 0 : i32
    %c0_i32_2 = arith.constant 0 : i32
    return %c0_i32, %c0_i32_0, %c0_i32_1 : i32, i32, i32
  }
  func.func @transform_13(%arg0: i32) -> (i32, i32, i32) {
    %c0_i32 = arith.constant 0 : i32
    %c0_i32_0 = arith.constant 0 : i32
    %c0_i32_1 = arith.constant 0 : i32
    %c0_i32_2 = arith.constant 0 : i32
    return %c0_i32, %c0_i32_0, %c0_i32_1 : i32, i32, i32
  }
  func.func @transform_14(%arg0: i32) -> (i32, i32, i32) {
    %c0_i32 = arith.constant 0 : i32
    %c0_i32_0 = arith.constant 0 : i32
    %c0_i32_1 = arith.constant 0 : i32
    %c0_i32_2 = arith.constant 0 : i32
    return %c0_i32, %c0_i32_0, %c0_i32_1 : i32, i32, i32
  }
  func.func @transform_15(%arg0: i32) -> (i32, i32, i32) {
    %c0_i32 = arith.constant 0 : i32
    %c0_i32_0 = arith.constant 0 : i32
    %c0_i32_1 = arith.constant 0 : i32
    %c0_i32_2 = arith.constant 0 : i32
    return %c0_i32, %c0_i32_0, %c0_i32_1 : i32, i32, i32
  }
  func.func @transform_16(%arg0: i32) -> (i32, i32, i32) {
    %c0_i32 = arith.constant 0 : i32
    %c0_i32_0 = arith.constant 0 : i32
    %c0_i32_1 = arith.constant 0 : i32
    %c0_i32_2 = arith.constant 0 : i32
    return %c0_i32, %c0_i32_0, %c0_i32_1 : i32, i32, i32
  }
  func.func @transform_17(%arg0: i32) -> (i32, i32, i32) {
    %c0_i32 = arith.constant 0 : i32
    %c0_i32_0 = arith.constant 0 : i32
    %c0_i32_1 = arith.constant 0 : i32
    %c0_i32_2 = arith.constant 0 : i32
    return %c0_i32, %c0_i32_0, %c0_i32_1 : i32, i32, i32
  }
  func.func @transform_18(%arg0: i32) -> (i32, i32, i32) {
    %c0_i32 = arith.constant 0 : i32
    %c0_i32_0 = arith.constant 0 : i32
    %c0_i32_1 = arith.constant 0 : i32
    %c0_i32_2 = arith.constant 0 : i32
    return %c0_i32, %c0_i32_0, %c0_i32_1 : i32, i32, i32
  }
  func.func @transform_19(%arg0: i32) -> (i32, i32, i32) {
    %c0_i32 = arith.constant 0 : i32
    %c0_i32_0 = arith.constant 0 : i32
    %c0_i32_1 = arith.constant 0 : i32
    %c0_i32_2 = arith.constant 0 : i32
    return %c0_i32, %c0_i32_0, %c0_i32_1 : i32, i32, i32
  }
  func.func @transform_20(%arg0: i32) -> (i32, i32, i32) {
    %c0_i32 = arith.constant 0 : i32
    %c0_i32_0 = arith.constant 0 : i32
    %c0_i32_1 = arith.constant 0 : i32
    %c0_i32_2 = arith.constant 0 : i32
    return %c0_i32, %c0_i32_0, %c0_i32_1 : i32, i32, i32
  }
  func.func @transform_21(%arg0: i32) -> (i32, i32, i32) {
    %c0_i32 = arith.constant 0 : i32
    %c0_i32_0 = arith.constant 0 : i32
    %c0_i32_1 = arith.constant 0 : i32
    %c0_i32_2 = arith.constant 0 : i32
    return %c0_i32, %c0_i32_0, %c0_i32_1 : i32, i32, i32
  }
  func.func @transform_22(%arg0: i32) -> (i32, i32, i32) {
    %c0_i32 = arith.constant 0 : i32
    %c0_i32_0 = arith.constant 0 : i32
    %c0_i32_1 = arith.constant 0 : i32
    %c0_i32_2 = arith.constant 0 : i32
    return %c0_i32, %c0_i32_0, %c0_i32_1 : i32, i32, i32
  }
  func.func @transform_23(%arg0: i32) -> (i32, i32, i32) {
    %c0_i32 = arith.constant 0 : i32
    %c0_i32_0 = arith.constant 0 : i32
    %c0_i32_1 = arith.constant 0 : i32
    %c0_i32_2 = arith.constant 0 : i32
    return %c0_i32, %c0_i32_0, %c0_i32_1 : i32, i32, i32
  }
  func.func @transform_24(%arg0: i32) -> (i32, i32) {
    %c0_i32 = arith.constant 0 : i32
    %c0_i32_0 = arith.constant 0 : i32
    %c0_i32_1 = arith.constant 0 : i32
    return %c0_i32, %c0_i32_0 : i32, i32
  }
  func.func @transform_25(%arg0: i32) -> (i32, i32) {
    %c0_i32 = arith.constant 0 : i32
    %c0_i32_0 = arith.constant 0 : i32
    %c0_i32_1 = arith.constant 0 : i32
    return %c0_i32, %c0_i32_0 : i32, i32
  }
}

</mosaic_0001>

<llo_original>
// kernel: bert_for_sb_forward.1
$region0: #{bert_for_sb_forward.1}
  #allocation0 [shape = 'u32[]', space=smem, size = 0x4, offset = 0x4, fixed_abs, tag = 'smem constant byte address 0x4 - core index']
  #allocation1 [shape = 'u32[144,128]{1,0:T(1,128)}', space=vmem, size = 0x12000, scoped, tag = 'internal scratch']
  %s0 = inlined_call_operand.vmem [shape: f32[32,32], index: 0, kind: input, shape index: {}]
  %s1 = inlined_call_operand.vmem [shape: f32[1,32], index: 1, kind: input, shape index: {}]
  %s2 = inlined_call_operand.vmem [shape: s32[2,1], index: 2, kind: input, shape index: {}]
  %s3 = inlined_call_operand.vmem [shape: f32[4,32], index: 3, kind: input, shape index: {}]
  %s4 = inlined_call_operand.vmem [shape: f32[32,32], index: 4, kind: input, shape index: {}]
  %s5 = inlined_call_operand.vmem [shape: f32[1,32], index: 5, kind: input, shape index: {}]
  %s6 = inlined_call_operand.vmem [shape: f32[1,32], index: 6, kind: input, shape index: {}]
  %s7 = inlined_call_operand.vmem [shape: f32[4,32,16], index: 7, kind: input, shape index: {}]
  %s8 = inlined_call_operand.vmem [shape: f32[4,1,16], index: 8, kind: input, shape index: {}, may-alias: {8,10,12}]
  %s9 = inlined_call_operand.vmem [shape: f32[4,32,16], index: 9, kind: input, shape index: {}]
  %s10 = inlined_call_operand.vmem [shape: f32[4,1,16], index: 10, kind: input, shape index: {}, may-alias: {8,10,12}]
  %s11 = inlined_call_operand.vmem [shape: f32[4,32,16], index: 11, kind: input, shape index: {}]
  %s12 = inlined_call_operand.vmem [shape: f32[4,1,16], index: 12, kind: input, shape index: {}, may-alias: {8,10,12}]
  %s13 = inlined_call_operand.vmem [shape: f32[4,16,32], index: 13, kind: input, shape index: {}]
  %s14 = inlined_call_operand.vmem [shape: f32[2,1,32], index: 14, kind: input, shape index: {}, may-alias: {14,16,20,22}]
  %s15 = inlined_call_operand.vmem [shape: f32[2,1,32], index: 15, kind: input, shape index: {}, may-alias: {15,21}]
  %s16 = inlined_call_operand.vmem [shape: f32[2,1,32], index: 16, kind: input, shape index: {}, may-alias: {14,16,20,22}]
  %s17 = inlined_call_operand.hbm [shape: f32[2,32,64], index: 17, kind: input, shape index: {}]
  %s18 = inlined_call_operand.vmem [shape: f32[2,1,64], index: 18, kind: input, shape index: {}]
  %s19 = inlined_call_operand.vmem [shape: f32[2,64,32], index: 19, kind: input, shape index: {}]
  %s20 = inlined_call_operand.vmem [shape: f32[2,1,32], index: 20, kind: input, shape index: {}, may-alias: {14,16,20,22}]
  %s21 = inlined_call_operand.vmem [shape: f32[2,1,32], index: 21, kind: input, shape index: {}, may-alias: {15,21}]
  %s22 = inlined_call_operand.vmem [shape: f32[2,1,32], index: 22, kind: input, shape index: {}, may-alias: {14,16,20,22}]
  %s23 = inlined_call_operand.vmem [shape: f32[3,32,3], index: 23, kind: input, shape index: {}]
  %s24 = inlined_call_operand.vmem [shape: f32[1,3], index: 24, kind: input, shape index: {}]
  %s25 = inlined_call_operand.hbm [shape: f32[1,1], index: 25, kind: output, shape index: {}]
  %s26 = sld [smem:[#allocation0]]
  $region114: #{bert_for_sb_forward.1} parent=0
    _
  %s28 = ssub.s32 1, %s26
  %s29 = scalar_select 0, %s28, %s26
  $region1: #{bert_for_sb_forward.1} parent=0
    #allocation2 [shape = 'u8[32768]{0}', space=vmem, size = 0x8000, scoped, tag = 'input window, operand 17, single buffered']
    #allocation3 [shape = 's32[1]{0}', space=sflag, size = 0x4, scoped, tag = 'scoped memory for bert_for_sb_forward.1']
    #allocation4 [shape = 's32[1]{0}', space=sflag, size = 0x4, scoped, tag = 'scoped memory for bert_for_sb_forward.1']
    #allocation5 [shape = 'u8[512]{0}', space=vmem, size = 0x400, scoped, tag = 'output window, operand 0, single buffered']
    %30 = vsyncpa [#allocation3], 0
    %31 = vsyncpa [#allocation4], 0
    // Predicated region
    $region2: #{bert_for_sb_forward.1} parent=1 // pred_check
      _
    $region3: #{bert_for_sb_forward.1} parent=1 // pred_check_branch
      %33 = sbr.rel (0) target = $region5
    $region4: #{bert_for_sb_forward.1} parent=1 // pred_region
      _
    $region5: #{bert_for_sb_forward.1} parent=1 // pred_fallthru
      _
    // Predicated region
    $region6: #{bert_for_sb_forward.1} parent=1 // pred_check
      _
    $region7: #{bert_for_sb_forward.1} parent=1 // pred_check_branch
      %35 = sbr.rel (0) target = $region9
    $region8: #{bert_for_sb_forward.1} parent=1 // pred_region
      _
    $region9: #{bert_for_sb_forward.1} parent=1 // pred_fallthru
      _
    // Predicated region
    $region10: #{bert_for_sb_forward.1} parent=1 // pred_check
      _
    $region11: #{bert_for_sb_forward.1} parent=1 // pred_check_branch
      %37 = sbr.rel (0) target = $region13
    $region12: #{bert_for_sb_forward.1} parent=1 // pred_region
      _
    $region13: #{bert_for_sb_forward.1} parent=1 // pred_fallthru
      _
    // Predicated region
    $region14: #{bert_for_sb_forward.1} parent=1 // pred_check
      _
    $region15: #{bert_for_sb_forward.1} parent=1 // pred_check_branch
      %39 = sbr.rel (0) target = $region17
    $region16: #{bert_for_sb_forward.1} parent=1 // pred_region
      _
    $region17: #{bert_for_sb_forward.1} parent=1 // pred_fallthru
      _
    // Predicated region
    $region18: #{bert_for_sb_forward.1} parent=1 // pred_check
      _
    $region19: #{bert_for_sb_forward.1} parent=1 // pred_check_branch
      %41 = sbr.rel (0) target = $region21
    $region20: #{bert_for_sb_forward.1} parent=1 // pred_region
      _
    $region21: #{bert_for_sb_forward.1} parent=1 // pred_fallthru
      _
    // Predicated region
    $region22: #{bert_for_sb_forward.1} parent=1 // pred_check
      _
    $region23: #{bert_for_sb_forward.1} parent=1 // pred_check_branch
      %43 = sbr.rel (0) target = $region25
    $region24: #{bert_for_sb_forward.1} parent=1 // pred_region
      _
    $region25: #{bert_for_sb_forward.1} parent=1 // pred_fallthru
      _
    // Predicated region
    $region26: #{bert_for_sb_forward.1} parent=1 // pred_check
      _
    $region27: #{bert_for_sb_forward.1} parent=1 // pred_check_branch
      %45 = sbr.rel (0) target = $region29
    $region28: #{bert_for_sb_forward.1} parent=1 // pred_region
      _
    $region29: #{bert_for_sb_forward.1} parent=1 // pred_fallthru
      _
    // Predicated region
    $region30: #{bert_for_sb_forward.1} parent=1 // pred_check
      _
    $region31: #{bert_for_sb_forward.1} parent=1 // pred_check_branch
      %47 = sbr.rel (0) target = $region33
    $region32: #{bert_for_sb_forward.1} parent=1 // pred_region
      _
    $region33: #{bert_for_sb_forward.1} parent=1 // pred_fallthru
      _
    // Predicated region
    $region34: #{bert_for_sb_forward.1} parent=1 // pred_check
      _
    $region35: #{bert_for_sb_forward.1} parent=1 // pred_check_branch
      %49 = sbr.rel (0) target = $region37
    $region36: #{bert_for_sb_forward.1} parent=1 // pred_region
      _
    $region37: #{bert_for_sb_forward.1} parent=1 // pred_fallthru
      _
    // Predicated region
    $region38: #{bert_for_sb_forward.1} parent=1 // pred_check
      _
    $region39: #{bert_for_sb_forward.1} parent=1 // pred_check_branch
      %51 = sbr.rel (0) target = $region41
    $region40: #{bert_for_sb_forward.1} parent=1 // pred_region
      _
    $region41: #{bert_for_sb_forward.1} parent=1 // pred_fallthru
      _
    // Predicated region
    $region42: #{bert_for_sb_forward.1} parent=1 // pred_check
      _
    $region43: #{bert_for_sb_forward.1} parent=1 // pred_check_branch
      %53 = sbr.rel (0) target = $region45
    $region44: #{bert_for_sb_forward.1} parent=1 // pred_region
      _
    $region45: #{bert_for_sb_forward.1} parent=1 // pred_fallthru
      _
    // Predicated region
    $region46: #{bert_for_sb_forward.1} parent=1 // pred_check
      _
    $region47: #{bert_for_sb_forward.1} parent=1 // pred_check_branch
      %55 = sbr.rel (0) target = $region49
    $region48: #{bert_for_sb_forward.1} parent=1 // pred_region
      _
    $region49: #{bert_for_sb_forward.1} parent=1 // pred_fallthru
      _
    // Predicated region
    $region50: #{bert_for_sb_forward.1} parent=1 // pred_check
      _
    $region51: #{bert_for_sb_forward.1} parent=1 // pred_check_branch
      %57 = sbr.rel (0) target = $region53
    $region52: #{bert_for_sb_forward.1} parent=1 // pred_region
      _
    $region53: #{bert_for_sb_forward.1} parent=1 // pred_fallthru
      _
    // Predicated region
    $region54: #{bert_for_sb_forward.1} parent=1 // pred_check
      _
    $region55: #{bert_for_sb_forward.1} parent=1 // pred_check_branch
      %59 = sbr.rel (0) target = $region57
    $region56: #{bert_for_sb_forward.1} parent=1 // pred_region
      _
    $region57: #{bert_for_sb_forward.1} parent=1 // pred_fallthru
      _
    // Predicated region
    $region58: #{bert_for_sb_forward.1} parent=1 // pred_check
      _
    $region59: #{bert_for_sb_forward.1} parent=1 // pred_check_branch
      %61 = sbr.rel (0) target = $region61
    $region60: #{bert_for_sb_forward.1} parent=1 // pred_region
      _
    $region61: #{bert_for_sb_forward.1} parent=1 // pred_fallthru
      _
    // Predicated region
    $region62: #{bert_for_sb_forward.1} parent=1 // pred_check
      _
    $region63: #{bert_for_sb_forward.1} parent=1 // pred_check_branch
      %63 = sbr.rel (0) target = $region65
    $region64: #{bert_for_sb_forward.1} parent=1 // pred_region
      _
    $region65: #{bert_for_sb_forward.1} parent=1 // pred_fallthru
      _
    // Predicated region
    $region66: #{bert_for_sb_forward.1} parent=1 // pred_check
      _
    $region67: #{bert_for_sb_forward.1} parent=1 // pred_check_branch
      %65 = sbr.rel (0) target = $region69
    $region68: #{bert_for_sb_forward.1} parent=1 // pred_region
      _
    $region69: #{bert_for_sb_forward.1} parent=1 // pred_fallthru
      _
    // Predicated region
    $region70: #{bert_for_sb_forward.1} parent=1 // pred_check
      _
    $region71: #{bert_for_sb_forward.1} parent=1 // pred_check_branch
      %67 = sbr.rel (0) target = $region73
    $region72: #{bert_for_sb_forward.1} parent=1 // pred_region
      %s69 = ssub.s32 1024, 1024
      %70 = vsyncadd [#allocation3], %s69
      %s71 = sshll.u32 [#allocation2], 4
      %s72 = int_to_ptr.vmem [resolvable:$true] %s71
      %77 = dma.hbm_to_vmem [thread:$0]  %s17, 1024, %s72, [#allocation3], 128, 128, 8
    $region73: #{bert_for_sb_forward.1} parent=1 // pred_fallthru
      _
    // Predicated region
    $region74: #{bert_for_sb_forward.1} parent=1 // pred_check
      _
    $region75: #{bert_for_sb_forward.1} parent=1 // pred_check_branch
      %79 = sbr.rel (0) target = $region77
    $region76: #{bert_for_sb_forward.1} parent=1 // pred_region
      _
    $region77: #{bert_for_sb_forward.1} parent=1 // pred_fallthru
      _
    // Predicated region
    $region78: #{bert_for_sb_forward.1} parent=1 // pred_check
      _
    $region79: #{bert_for_sb_forward.1} parent=1 // pred_check_branch
      %81 = sbr.rel (0) target = $region81
    $region80: #{bert_for_sb_forward.1} parent=1 // pred_region
      _
    $region81: #{bert_for_sb_forward.1} parent=1 // pred_fallthru
      _
    // Predicated region
    $region82: #{bert_for_sb_forward.1} parent=1 // pred_check
      _
    $region83: #{bert_for_sb_forward.1} parent=1 // pred_check_branch
      %83 = sbr.rel (0) target = $region85
    $region84: #{bert_for_sb_forward.1} parent=1 // pred_region
      _
    $region85: #{bert_for_sb_forward.1} parent=1 // pred_fallthru
      _
    // Predicated region
    $region86: #{bert_for_sb_forward.1} parent=1 // pred_check
      _
    $region87: #{bert_for_sb_forward.1} parent=1 // pred_check_branch
      %85 = sbr.rel (0) target = $region89
    $region88: #{bert_for_sb_forward.1} parent=1 // pred_region
      _
    $region89: #{bert_for_sb_forward.1} parent=1 // pred_fallthru
      _
    // Predicated region
    $region90: #{bert_for_sb_forward.1} parent=1 // pred_check
      _
    $region91: #{bert_for_sb_forward.1} parent=1 // pred_check_branch
      %87 = sbr.rel (0) target = $region93
    $region92: #{bert_for_sb_forward.1} parent=1 // pred_region
      _
    $region93: #{bert_for_sb_forward.1} parent=1 // pred_fallthru
      _
    // Predicated region
    $region94: #{bert_for_sb_forward.1} parent=1 // pred_check
      _
    $region95: #{bert_for_sb_forward.1} parent=1 // pred_check_branch
      %89 = sbr.rel (0) target = $region97
    $region96: #{bert_for_sb_forward.1} parent=1 // pred_region
      _
    $region97: #{bert_for_sb_forward.1} parent=1 // pred_fallthru
      _
    // Predicated region
    $region98: #{bert_for_sb_forward.1} parent=1 // pred_check
      _
    $region99: #{bert_for_sb_forward.1} parent=1 // pred_check_branch
      %91 = sbr.rel (0) target = $region101
    $region100: #{bert_for_sb_forward.1} parent=1 // pred_region
      _
    $region101: #{bert_for_sb_forward.1} parent=1 // pred_fallthru
      _
    // Predicated region
    $region102: #{bert_for_sb_forward.1} parent=1 // pred_check
      _
    $region103: #{bert_for_sb_forward.1} parent=1 // pred_check_branch
      %93 = sbr.rel (0) target = $region105
    $region104: #{bert_for_sb_forward.1} parent=1 // pred_region
      %94 = dma.done [#allocation3], 1024
    $region105: #{bert_for_sb_forward.1} parent=1 // pred_fallthru
      _
    %v95 = vld [vmem:[%s0] sm:$0xff]
    %v96 = vld [vmem:[%s0 + $0x8] sm:$0xff]
    %v97 = vld [vmem:[%s0 + $0x10] sm:$0xff]
    %v98 = vld [vmem:[%s0 + $0x18] sm:$0xff]
    %v99 = vld [vmem:[%s5] sm:$0x1]
    %v100 = vld [vmem:[%s6] sm:$0x1]
    %vm101 = vcmask 261120
    %v102 = vsel %vm101, %v95, 0.0
    %103 = vadd.xlane.f32.xlu0 %v102
    %v104 = vpop.xlane.xlu0 %103
    %v105 = vsel %vm101, %v96, 0.0
    %106 = vadd.xlane.f32.xlu0 %v105
    %v107 = vpop.xlane.xlu0 %106
    %v108 = vsel %vm101, %v97, 0.0
    %109 = vadd.xlane.f32.xlu0 %v108
    %v110 = vpop.xlane.xlu0 %109
    %v111 = vsel %vm101, %v98, 0.0
    %112 = vadd.xlane.f32.xlu0 %v111
    %v113 = vpop.xlane.xlu0 %112
    %v114 = vrcp.pop 32.0
    %v115 = vmul.f32 %v104, %v114
    %v116 = vmul.f32 %v107, %v114
    %v117 = vmul.f32 %v110, %v114
    %v118 = vmul.f32 %v113, %v114
    %v119 = vmul.f32 %v95, %v95
    %v120 = vmul.f32 %v96, %v96
    %v121 = vmul.f32 %v97, %v97
    %v122 = vmul.f32 %v98, %v98
    %v123 = vsel %vm101, %v119, 0.0
    %124 = vadd.xlane.f32.xlu0 %v123
    %v125 = vpop.xlane.xlu0 %124
    %v126 = vsel %vm101, %v120, 0.0
    %127 = vadd.xlane.f32.xlu0 %v126
    %v128 = vpop.xlane.xlu0 %127
    %v129 = vsel %vm101, %v121, 0.0
    %130 = vadd.xlane.f32.xlu0 %v129
    %v131 = vpop.xlane.xlu0 %130
    %v132 = vsel %vm101, %v122, 0.0
    %133 = vadd.xlane.f32.xlu0 %v132
    %v134 = vpop.xlane.xlu0 %133
    %v135 = vmul.f32 %v125, %v114
    %v136 = vmul.f32 %v128, %v114
    %v137 = vmul.f32 %v131, %v114
    %v138 = vmul.f32 %v134, %v114
    %v139 = vmul.f32 %v115, %v115
    %v140 = vmul.f32 %v116, %v116
    %v141 = vmul.f32 %v117, %v117
    %v142 = vmul.f32 %v118, %v118
    %v143 = vsub.f32 %v135, %v139
    %v144 = vsub.f32 %v136, %v140
    %v145 = vsub.f32 %v137, %v141
    %v146 = vsub.f32 %v138, %v142
    %v147 = vmax.f32 %v143, 0.0
    %v148 = vmax.f32 %v144, 0.0
    %v149 = vmax.f32 %v145, 0.0
    %v150 = vmax.f32 %v146, 0.0
    %v151 = vsub.f32 %v95, %v115
    %v152 = vsub.f32 %v96, %v116
    %v153 = vsub.f32 %v97, %v117
    %v154 = vsub.f32 %v98, %v118
    %v155 = vadd.f32 %v147, 1e-12
    %v156 = vadd.f32 %v148, 1e-12
    %v157 = vadd.f32 %v149, 1e-12
    %v158 = vadd.f32 %v150, 1e-12
    %v159 = vrsqrt.pop %v155
    %v160 = vrsqrt.pop %v156
    %v161 = vrsqrt.pop %v157
    %v162 = vrsqrt.pop %v158
    %v163 = vmul.f32 %v151, %v159
    %v164 = vmul.f32 %v152, %v160
    %v165 = vmul.f32 %v153, %v161
    %v166 = vmul.f32 %v154, %v162
    %v168 = vlaneseq
    %v169 = vshrl.u32 %v168, 7
    %v170 = vsub.s32 0, %v169
    %v171 = vrot.slane %v99, %v170
    %v173 = vmul.f32 %v163, %v171
    %v174 = vmul.f32 %v164, %v171
    %v175 = vmul.f32 %v165, %v171
    %v176 = vmul.f32 %v166, %v171
    %v178 = vlaneseq
    %v179 = vshrl.u32 %v178, 7
    %v180 = vsub.s32 0, %v179
    %v181 = vrot.slane %v100, %v180
    %v183 = vadd.f32 %v173, %v181
    %v184 = vadd.f32 %v174, %v181
    %v185 = vadd.f32 %v175, %v181
    %v186 = vadd.f32 %v176, %v181
    %v187 = vld [vmem:[%s1] sm:$0x1]
    %v188 = vld [vmem:[%s4] sm:$0xff]
    %v189 = vld [vmem:[%s4 + $0x8] sm:$0xff]
    %v190 = vld [vmem:[%s4 + $0x10] sm:$0xff]
    %v191 = vld [vmem:[%s4 + $0x18] sm:$0xff]
    %v193 = vlaneseq
    %v194 = vshrl.u32 %v193, 7
    %v195 = vsub.s32 0, %v194
    %v196 = vrot.slane %v187, %v195
    %v198 = vmul.f32 %v188, %v196
    %v199 = vmul.f32 %v189, %v196
    %v200 = vmul.f32 %v190, %v196
    %v201 = vmul.f32 %v191, %v196
    %v202 = vsub.f32 %v198, 1.0
    %v203 = vsub.f32 %v199, 1.0
    %v204 = vsub.f32 %v200, 1.0
    %v205 = vsub.f32 %v201, 1.0
    %v206 = vmul.f32 %v202, 10000.0
    %v207 = vmul.f32 %v203, 10000.0
    %v208 = vmul.f32 %v204, 10000.0
    %v209 = vmul.f32 %v205, 10000.0
    %v210 = vld [vmem:[%s14] sm:$0x1]
    %v211 = vld [vmem:[%s7] sm:$0xff]
    %v212 = vld [vmem:[%s7 + $0x8] sm:$0xff]
    %v213 = vld [vmem:[%s7 + $0x10] sm:$0xff]
    %v214 = vld [vmem:[%s7 + $0x18] sm:$0xff]
    %v215 = vld [vmem:[%s8] sm:$0x1]
    %v217 = vlaneseq
    %v218 = vshrl.u32 %v217, 7
    %v219 = vsub.s32 0, %v218
    %v220 = vrot.slane %v215, %v219
    %v223 = vsel %vm101, %v183, 0
    %v226 = vsel %vm101, %v184, 0
    %v229 = vsel %vm101, %v185, 0
    %v232 = vsel %vm101, %v186, 0
    %234 = vmatprep.subr.mxu0 0.0
    %235 = vmatpush1.msra.mxu0 %v211
    %236 = vmatprep.subr.mxu0 0.0
    %237 = vmatpush1.msra.mxu0 %v212
    %238 = vmatprep.subr.mxu0 0.0
    %239 = vmatpush1.msra.mxu0 %v213
    %240 = vmatprep.subr.mxu0 0.0
    %241 = vmatpush1.msra.mxu0 %v214
    %242 = vmatprep.subr.mxu0 0.0
    %243 = vmatpush1.msra.mxu0 0.0
    %244 = vmatprep.subr.mxu0 0.0
    %245 = vmatpush1.msra.mxu0 0.0
    %246 = vmatprep.subr.mxu0 0.0
    %247 = vmatpush1.msra.mxu0 0.0
    %248 = vmatprep.subr.mxu0 0.0
    %249 = vmatpush1.msra.mxu0 0.0
    %250 = vmatprep.subr.mxu0 0.0
    %251 = vmatpush1.msra.mxu0 0.0
    %252 = vmatprep.subr.mxu0 0.0
    %253 = vmatpush1.msra.mxu0 0.0
    %254 = vmatprep.subr.mxu0 0.0
    %255 = vmatpush1.msra.mxu0 0.0
    %256 = vmatprep.subr.mxu0 0.0
    %257 = vmatpush1.msra.mxu0 0.0
    %258 = vmatprep.subr.mxu0 0.0
    %259 = vmatpush1.msra.mxu0 0.0
    %260 = vmatprep.subr.mxu0 0.0
    %261 = vmatpush1.msra.mxu0 0.0
    %262 = vmatprep.subr.mxu0 0.0
    %263 = vmatpush1.msra.mxu0 0.0
    %264 = vmatprep.subr.mxu0 0.0
    %265 = vmatpush1.msra.mxu0 0.0
    %266 = vmatprep.subr.mxu0 0.0
    %267 = vmatpush1.msra.mxu0 0.0
    %268 = vmatprep.subr.mxu0 0.0
    %269 = vmatpush1.msra.mxu0 0.0
    %270 = vmatprep.subr.mxu0 0.0
    %271 = vmatpush1.msra.mxu0 0.0
    %272 = vmatprep.subr.mxu0 0.0
    %273 = vmatpush1.msra.mxu0 0.0
    %274 = vmatprep.subr.mxu0 0.0
    %275 = vmatpush1.msra.mxu0 0.0
    %276 = vmatprep.subr.mxu0 0.0
    %277 = vmatpush1.msra.mxu0 0.0
    %278 = vmatprep.subr.mxu0 0.0
    %279 = vmatpush1.msra.mxu0 0.0
    %280 = vmatprep.subr.mxu0 0.0
    %281 = vmatpush1.msra.mxu0 0.0
    %282 = vmatprep.subr.mxu0 0.0
    %283 = vmatpush1.msra.mxu0 0.0
    %284 = vmatprep.subr.mxu0 0.0
    %285 = vmatpush1.msra.mxu0 0.0
    %286 = vmatprep.subr.mxu0 0.0
    %287 = vmatpush1.msra.mxu0 0.0
    %288 = vmatprep.subr.mxu0 0.0
    %289 = vmatpush1.msra.mxu0 0.0
    %290 = vmatprep.subr.mxu0 0.0
    %291 = vmatpush1.msra.mxu0 0.0
    %292 = vmatprep.subr.mxu0 0.0
    %293 = vmatpush1.msra.mxu0 0.0
    %294 = vmatprep.subr.mxu0 0.0
    %295 = vmatpush1.msra.mxu0 0.0
    %296 = vmatprep.subr.mxu0 0.0
    %297 = vmatpush1.msra.mxu0 0.0
    %298 = vmatprep.mubr.f32.mxu0 0.0
    %299 = vmatmul.mubr.f32.gmra.mrb[0].mxu0 %v223
    %v300 = vpop.f32.mrb[0].mxu0
    %v301 = vadd.f32 %v220, %v300
    %v302 = vpop.f32.mrb[0].mxu0
    %303 = vmatprep.mubr.f32.mxu0 0.0
    %304 = vmatmul.mubr.f32.gmra.mrb[0].mxu0 %v226
    %v305 = vpop.f32.mrb[0].mxu0
    %v306 = vadd.f32 %v220, %v305
    %v307 = vpop.f32.mrb[0].mxu0
    %308 = vmatprep.mubr.f32.mxu0 0.0
    %309 = vmatmul.mubr.f32.gmra.mrb[0].mxu0 %v229
    %v310 = vpop.f32.mrb[0].mxu0
    %v311 = vadd.f32 %v220, %v310
    %v312 = vpop.f32.mrb[0].mxu0
    %313 = vmatprep.mubr.f32.mxu0 0.0
    %314 = vmatmul.mubr.f32.gmra.mrb[0].mxu0 %v232
    %v315 = vpop.f32.mrb[0].mxu0
    %v316 = vadd.f32 %v220, %v315
    %v317 = vpop.f32.mrb[0].mxu0
    %318 = vdwg.mxu0
    %v319 = vld [vmem:[%s9] sm:$0xff]
    %v320 = vld [vmem:[%s9 + $0x8] sm:$0xff]
    %v321 = vld [vmem:[%s9 + $0x10] sm:$0xff]
    %v322 = vld [vmem:[%s9 + $0x18] sm:$0xff]
    %v323 = vld [vmem:[%s10] sm:$0x1]
    %v325 = vlaneseq
    %v326 = vshrl.u32 %v325, 7
    %v327 = vsub.s32 0, %v326
    %v328 = vrot.slane %v323, %v327
    %330 = vmatprep.subr.mxu0 0.0
    %331 = vmatpush1.msra.mxu0 %v319
    %332 = vmatprep.subr.mxu0 0.0
    %333 = vmatpush1.msra.mxu0 %v320
    %334 = vmatprep.subr.mxu0 0.0
    %335 = vmatpush1.msra.mxu0 %v321
    %336 = vmatprep.subr.mxu0 0.0
    %337 = vmatpush1.msra.mxu0 %v322
    %338 = vmatprep.subr.mxu0 0.0
    %339 = vmatpush1.msra.mxu0 0.0
    %340 = vmatprep.subr.mxu0 0.0
    %341 = vmatpush1.msra.mxu0 0.0
    %342 = vmatprep.subr.mxu0 0.0
    %343 = vmatpush1.msra.mxu0 0.0
    %344 = vmatprep.subr.mxu0 0.0
    %345 = vmatpush1.msra.mxu0 0.0
    %346 = vmatprep.subr.mxu0 0.0
    %347 = vmatpush1.msra.mxu0 0.0
    %348 = vmatprep.subr.mxu0 0.0
    %349 = vmatpush1.msra.mxu0 0.0
    %350 = vmatprep.subr.mxu0 0.0
    %351 = vmatpush1.msra.mxu0 0.0
    %352 = vmatprep.subr.mxu0 0.0
    %353 = vmatpush1.msra.mxu0 0.0
    %354 = vmatprep.subr.mxu0 0.0
    %355 = vmatpush1.msra.mxu0 0.0
    %356 = vmatprep.subr.mxu0 0.0
    %357 = vmatpush1.msra.mxu0 0.0
    %358 = vmatprep.subr.mxu0 0.0
    %359 = vmatpush1.msra.mxu0 0.0
    %360 = vmatprep.subr.mxu0 0.0
    %361 = vmatpush1.msra.mxu0 0.0
    %362 = vmatprep.subr.mxu0 0.0
    %363 = vmatpush1.msra.mxu0 0.0
    %364 = vmatprep.subr.mxu0 0.0
    %365 = vmatpush1.msra.mxu0 0.0
    %366 = vmatprep.subr.mxu0 0.0
    %367 = vmatpush1.msra.mxu0 0.0
    %368 = vmatprep.subr.mxu0 0.0
    %369 = vmatpush1.msra.mxu0 0.0
    %370 = vmatprep.subr.mxu0 0.0
    %371 = vmatpush1.msra.mxu0 0.0
    %372 = vmatprep.subr.mxu0 0.0
    %373 = vmatpush1.msra.mxu0 0.0
    %374 = vmatprep.subr.mxu0 0.0
    %375 = vmatpush1.msra.mxu0 0.0
    %376 = vmatprep.subr.mxu0 0.0
    %377 = vmatpush1.msra.mxu0 0.0
    %378 = vmatprep.subr.mxu0 0.0
    %379 = vmatpush1.msra.mxu0 0.0
    %380 = vmatprep.subr.mxu0 0.0
    %381 = vmatpush1.msra.mxu0 0.0
    %382 = vmatprep.subr.mxu0 0.0
    %383 = vmatpush1.msra.mxu0 0.0
    %384 = vmatprep.subr.mxu0 0.0
    %385 = vmatpush1.msra.mxu0 0.0
    %386 = vmatprep.subr.mxu0 0.0
    %387 = vmatpush1.msra.mxu0 0.0
    %388 = vmatprep.subr.mxu0 0.0
    %389 = vmatpush1.msra.mxu0 0.0
    %390 = vmatprep.subr.mxu0 0.0
    %391 = vmatpush1.msra.mxu0 0.0
    %392 = vmatprep.subr.mxu0 0.0
    %393 = vmatpush1.msra.mxu0 0.0
    %394 = vmatprep.mubr.f32.mxu0 0.0
    %395 = vmatmul.mubr.f32.gmra.mrb[0].mxu0 %v223
    %v396 = vpop.f32.mrb[0].mxu0
    %v397 = vadd.f32 %v328, %v396
    %v398 = vpop.f32.mrb[0].mxu0
    %399 = vmatprep.mubr.f32.mxu0 0.0
    %400 = vmatmul.mubr.f32.gmra.mrb[0].mxu0 %v226
    %v401 = vpop.f32.mrb[0].mxu0
    %v402 = vadd.f32 %v328, %v401
    %v403 = vpop.f32.mrb[0].mxu0
    %404 = vmatprep.mubr.f32.mxu0 0.0
    %405 = vmatmul.mubr.f32.gmra.mrb[0].mxu0 %v229
    %v406 = vpop.f32.mrb[0].mxu0
    %v407 = vadd.f32 %v328, %v406
    %v408 = vpop.f32.mrb[0].mxu0
    %409 = vmatprep.mubr.f32.mxu0 0.0
    %410 = vmatmul.mubr.f32.gmra.mrb[0].mxu0 %v232
    %v411 = vpop.f32.mrb[0].mxu0
    %v412 = vadd.f32 %v328, %v411
    %v413 = vpop.f32.mrb[0].mxu0
    %414 = vdwg.mxu0
    %v415 = vld [vmem:[%s11] sm:$0xff]
    %v416 = vld [vmem:[%s11 + $0x8] sm:$0xff]
    %v417 = vld [vmem:[%s11 + $0x10] sm:$0xff]
    %v418 = vld [vmem:[%s11 + $0x18] sm:$0xff]
    %v419 = vld [vmem:[%s12] sm:$0x1]
    %v421 = vlaneseq
    %v422 = vshrl.u32 %v421, 7
    %v423 = vsub.s32 0, %v422
    %v424 = vrot.slane %v419, %v423
    %426 = vmatprep.subr.mxu0 0.0
    %427 = vmatpush1.msra.mxu0 %v415
    %428 = vmatprep.subr.mxu0 0.0
    %429 = vmatpush1.msra.mxu0 %v416
    %430 = vmatprep.subr.mxu0 0.0
    %431 = vmatpush1.msra.mxu0 %v417
    %432 = vmatprep.subr.mxu0 0.0
    %433 = vmatpush1.msra.mxu0 %v418
    %434 = vmatprep.subr.mxu0 0.0
    %435 = vmatpush1.msra.mxu0 0.0
    %436 = vmatprep.subr.mxu0 0.0
    %437 = vmatpush1.msra.mxu0 0.0
    %438 = vmatprep.subr.mxu0 0.0
    %439 = vmatpush1.msra.mxu0 0.0
    %440 = vmatprep.subr.mxu0 0.0
    %441 = vmatpush1.msra.mxu0 0.0
    %442 = vmatprep.subr.mxu0 0.0
    %443 = vmatpush1.msra.mxu0 0.0
    %444 = vmatprep.subr.mxu0 0.0
    %445 = vmatpush1.msra.mxu0 0.0
    %446 = vmatprep.subr.mxu0 0.0
    %447 = vmatpush1.msra.mxu0 0.0
    %448 = vmatprep.subr.mxu0 0.0
    %449 = vmatpush1.msra.mxu0 0.0
    %450 = vmatprep.subr.mxu0 0.0
    %451 = vmatpush1.msra.mxu0 0.0
    %452 = vmatprep.subr.mxu0 0.0
    %453 = vmatpush1.msra.mxu0 0.0
    %454 = vmatprep.subr.mxu0 0.0
    %455 = vmatpush1.msra.mxu0 0.0
    %456 = vmatprep.subr.mxu0 0.0
    %457 = vmatpush1.msra.mxu0 0.0
    %458 = vmatprep.subr.mxu0 0.0
    %459 = vmatpush1.msra.mxu0 0.0
    %460 = vmatprep.subr.mxu0 0.0
    %461 = vmatpush1.msra.mxu0 0.0
    %462 = vmatprep.subr.mxu0 0.0
    %463 = vmatpush1.msra.mxu0 0.0
    %464 = vmatprep.subr.mxu0 0.0
    %465 = vmatpush1.msra.mxu0 0.0
    %466 = vmatprep.subr.mxu0 0.0
    %467 = vmatpush1.msra.mxu0 0.0
    %468 = vmatprep.subr.mxu0 0.0
    %469 = vmatpush1.msra.mxu0 0.0
    %470 = vmatprep.subr.mxu0 0.0
    %471 = vmatpush1.msra.mxu0 0.0
    %472 = vmatprep.subr.mxu0 0.0
    %473 = vmatpush1.msra.mxu0 0.0
    %474 = vmatprep.subr.mxu0 0.0
    %475 = vmatpush1.msra.mxu0 0.0
    %476 = vmatprep.subr.mxu0 0.0
    %477 = vmatpush1.msra.mxu0 0.0
    %478 = vmatprep.subr.mxu0 0.0
    %479 = vmatpush1.msra.mxu0 0.0
    %480 = vmatprep.subr.mxu0 0.0
    %481 = vmatpush1.msra.mxu0 0.0
    %482 = vmatprep.subr.mxu0 0.0
    %483 = vmatpush1.msra.mxu0 0.0
    %484 = vmatprep.subr.mxu0 0.0
    %485 = vmatpush1.msra.mxu0 0.0
    %486 = vmatprep.subr.mxu0 0.0
    %487 = vmatpush1.msra.mxu0 0.0
    %488 = vmatprep.subr.mxu0 0.0
    %489 = vmatpush1.msra.mxu0 0.0
    %490 = vmatprep.mubr.f32.mxu0 0.0
    %491 = vmatmul.mubr.f32.gmra.mrb[0].mxu0 %v223
    %v492 = vpop.f32.mrb[0].mxu0
    %v493 = vadd.f32 %v424, %v492
    %v494 = vpop.f32.mrb[0].mxu0
    %495 = vmatprep.mubr.f32.mxu0 0.0
    %496 = vmatmul.mubr.f32.gmra.mrb[0].mxu0 %v226
    %v497 = vpop.f32.mrb[0].mxu0
    %v498 = vadd.f32 %v424, %v497
    %v499 = vpop.f32.mrb[0].mxu0
    %500 = vmatprep.mubr.f32.mxu0 0.0
    %501 = vmatmul.mubr.f32.gmra.mrb[0].mxu0 %v229
    %v502 = vpop.f32.mrb[0].mxu0
    %v503 = vadd.f32 %v424, %v502
    %v504 = vpop.f32.mrb[0].mxu0
    %505 = vmatprep.mubr.f32.mxu0 0.0
    %506 = vmatmul.mubr.f32.gmra.mrb[0].mxu0 %v232
    %v507 = vpop.f32.mrb[0].mxu0
    %v508 = vadd.f32 %v424, %v507
    %v509 = vpop.f32.mrb[0].mxu0
    %510 = vdwg.mxu0
    %vm511 = vcmask 130048
    %v513 = vsel %vm511, %v301, 0
    %v516 = vsel %vm511, %v306, 0
    %v519 = vsel %vm511, %v311, 0
    %v522 = vsel %vm511, %v316, 0
    %v525 = vsel %vm511, %v397, 0
    %v528 = vsel %vm511, %v402, 0
    %v531 = vsel %vm511, %v407, 0
    %v534 = vsel %vm511, %v412, 0
    %536 = vmatprep.subr.mxu0 0.0
    %537 = vmatpush1.xpose.msra.mxu0 %v525
    %538 = vmatprep.subr.mxu0 0.0
    %539 = vmatpush1.xpose.msra.mxu0 %v528
    %540 = vmatprep.subr.mxu0 0.0
    %541 = vmatpush1.xpose.msra.mxu0 %v531
    %542 = vmatprep.subr.mxu0 0.0
    %543 = vmatpush1.xpose.msra.mxu0 %v534
    %544 = vmatprep.subr.mxu0 0.0
    %545 = vmatpush1.xpose.msra.mxu0 0.0
    %546 = vmatprep.subr.mxu0 0.0
    %547 = vmatpush1.xpose.msra.mxu0 0.0
    %548 = vmatprep.subr.mxu0 0.0
    %549 = vmatpush1.xpose.msra.mxu0 0.0
    %550 = vmatprep.subr.mxu0 0.0
    %551 = vmatpush1.xpose.msra.mxu0 0.0
    %552 = vmatprep.subr.mxu0 0.0
    %553 = vmatpush1.xpose.msra.mxu0 0.0
    %554 = vmatprep.subr.mxu0 0.0
    %555 = vmatpush1.xpose.msra.mxu0 0.0
    %556 = vmatprep.subr.mxu0 0.0
    %557 = vmatpush1.xpose.msra.mxu0 0.0
    %558 = vmatprep.subr.mxu0 0.0
    %559 = vmatpush1.xpose.msra.mxu0 0.0
    %560 = vmatprep.subr.mxu0 0.0
    %561 = vmatpush1.xpose.msra.mxu0 0.0
    %562 = vmatprep.subr.mxu0 0.0
    %563 = vmatpush1.xpose.msra.mxu0 0.0
    %564 = vmatprep.subr.mxu0 0.0
    %565 = vmatpush1.xpose.msra.mxu0 0.0
    %566 = vmatprep.subr.mxu0 0.0
    %567 = vmatpush1.xpose.msra.mxu0 0.0
    %568 = vmatprep.subr.mxu0 0.0
    %569 = vmatpush1.xpose.msra.mxu0 0.0
    %570 = vmatprep.subr.mxu0 0.0
    %571 = vmatpush1.xpose.msra.mxu0 0.0
    %572 = vmatprep.subr.mxu0 0.0
    %573 = vmatpush1.xpose.msra.mxu0 0.0
    %574 = vmatprep.subr.mxu0 0.0
    %575 = vmatpush1.xpose.msra.mxu0 0.0
    %576 = vmatprep.subr.mxu0 0.0
    %577 = vmatpush1.xpose.msra.mxu0 0.0
    %578 = vmatprep.subr.mxu0 0.0
    %579 = vmatpush1.xpose.msra.mxu0 0.0
    %580 = vmatprep.subr.mxu0 0.0
    %581 = vmatpush1.xpose.msra.mxu0 0.0
    %582 = vmatprep.subr.mxu0 0.0
    %583 = vmatpush1.xpose.msra.mxu0 0.0
    %584 = vmatprep.subr.mxu0 0.0
    %585 = vmatpush1.xpose.msra.mxu0 0.0
    %586 = vmatprep.subr.mxu0 0.0
    %587 = vmatpush1.xpose.msra.mxu0 0.0
    %588 = vmatprep.subr.mxu0 0.0
    %589 = vmatpush1.xpose.msra.mxu0 0.0
    %590 = vmatprep.subr.mxu0 0.0
    %591 = vmatpush1.xpose.msra.mxu0 0.0
    %592 = vmatprep.subr.mxu0 0.0
    %593 = vmatpush1.xpose.msra.mxu0 0.0
    %594 = vmatprep.subr.mxu0 0.0
    %595 = vmatpush1.xpose.msra.mxu0 0.0
    %596 = vmatprep.subr.mxu0 0.0
    %597 = vmatpush1.xpose.msra.mxu0 0.0
    %598 = vmatprep.subr.mxu0 0.0
    %599 = vmatpush1.xpose.msra.mxu0 0.0
    %600 = vmatprep.mubr.f32.mxu0 0.0
    %601 = vmatmul.mubr.f32.gmra.mrb[0].mxu0 %v513
    %v602 = vpop.f32.mrb[0].mxu0
    %v603 = vadd.f32 %v206, %v602
    %v604 = vpop.f32.mrb[0].mxu0
    %605 = vmatprep.mubr.f32.mxu0 0.0
    %606 = vmatmul.mubr.f32.gmra.mrb[0].mxu0 %v516
    %v607 = vpop.f32.mrb[0].mxu0
    %v608 = vadd.f32 %v207, %v607
    %v609 = vpop.f32.mrb[0].mxu0
    %610 = vmatprep.mubr.f32.mxu0 0.0
    %611 = vmatmul.mubr.f32.gmra.mrb[0].mxu0 %v519
    %v612 = vpop.f32.mrb[0].mxu0
    %v613 = vadd.f32 %v208, %v612
    %v614 = vpop.f32.mrb[0].mxu0
    %615 = vmatprep.mubr.f32.mxu0 0.0
    %616 = vmatmul.mubr.f32.gmra.mrb[0].mxu0 %v522
    %v617 = vpop.f32.mrb[0].mxu0
    %v618 = vadd.f32 %v209, %v617
    %v619 = vpop.f32.mrb[0].mxu0
    %620 = vdwg.mxu0
    %v621 = vsel %vm101, %v603, -inf
    %622 = vmax.xlane.f32.xlu0 %v621
    %v623 = vpop.xlane.xlu0 %622
    %v624 = vsel %vm101, %v608, -inf
    %625 = vmax.xlane.f32.xlu0 %v624
    %v626 = vpop.xlane.xlu0 %625
    %v627 = vsel %vm101, %v613, -inf
    %628 = vmax.xlane.f32.xlu0 %v627
    %v629 = vpop.xlane.xlu0 %628
    %v630 = vsel %vm101, %v618, -inf
    %631 = vmax.xlane.f32.xlu0 %v630
    %v632 = vpop.xlane.xlu0 %631
    %v633 = vsub.f32 %v603, %v623
    %v634 = vsub.f32 %v608, %v626
    %v635 = vsub.f32 %v613, %v629
    %v636 = vsub.f32 %v618, %v632
    %v637 = vmul.f32 %v633, 1.442695
    %v638 = vpow.pop %v637
    %v639 = vmul.f32 %v634, 1.442695
    %v640 = vpow.pop %v639
    %v641 = vmul.f32 %v635, 1.442695
    %v642 = vpow.pop %v641
    %v643 = vmul.f32 %v636, 1.442695
    %v644 = vpow.pop %v643
    %v645 = vsel %vm101, %v638, 0.0
    %646 = vadd.xlane.f32.xlu0 %v645
    %v647 = vpop.xlane.xlu0 %646
    %v648 = vsel %vm101, %v640, 0.0
    %649 = vadd.xlane.f32.xlu0 %v648
    %v650 = vpop.xlane.xlu0 %649
    %v651 = vsel %vm101, %v642, 0.0
    %652 = vadd.xlane.f32.xlu0 %v651
    %v653 = vpop.xlane.xlu0 %652
    %v654 = vsel %vm101, %v644, 0.0
    %655 = vadd.xlane.f32.xlu0 %v654
    %v656 = vpop.xlane.xlu0 %655
    %v657 = vrcp.pop %v647
    %v658 = vmul.f32 %v638, %v657
    %v659 = vrcp.pop %v650
    %v660 = vmul.f32 %v640, %v659
    %v661 = vrcp.pop %v653
    %v662 = vmul.f32 %v642, %v661
    %v663 = vrcp.pop %v656
    %v664 = vmul.f32 %v644, %v663
    %v666 = vsel %vm101, %v658, 0
    %v669 = vsel %vm101, %v660, 0
    %v672 = vsel %vm101, %v662, 0
    %v675 = vsel %vm101, %v664, 0
    %677 = vmatprep.subr.mxu0 0.0
    %678 = vmatpush1.msra.mxu0 %v493
    %679 = vmatprep.subr.mxu0 0.0
    %680 = vmatpush1.msra.mxu0 %v498
    %681 = vmatprep.subr.mxu0 0.0
    %682 = vmatpush1.msra.mxu0 %v503
    %683 = vmatprep.subr.mxu0 0.0
    %684 = vmatpush1.msra.mxu0 %v508
    %685 = vmatprep.subr.mxu0 0.0
    %686 = vmatpush1.msra.mxu0 0.0
    %687 = vmatprep.subr.mxu0 0.0
    %688 = vmatpush1.msra.mxu0 0.0
    %689 = vmatprep.subr.mxu0 0.0
    %690 = vmatpush1.msra.mxu0 0.0
    %691 = vmatprep.subr.mxu0 0.0
    %692 = vmatpush1.msra.mxu0 0.0
    %693 = vmatprep.subr.mxu0 0.0
    %694 = vmatpush1.msra.mxu0 0.0
    %695 = vmatprep.subr.mxu0 0.0
    %696 = vmatpush1.msra.mxu0 0.0
    %697 = vmatprep.subr.mxu0 0.0
    %698 = vmatpush1.msra.mxu0 0.0
    %699 = vmatprep.subr.mxu0 0.0
    %700 = vmatpush1.msra.mxu0 0.0
    %701 = vmatprep.subr.mxu0 0.0
    %702 = vmatpush1.msra.mxu0 0.0
    %703 = vmatprep.subr.mxu0 0.0
    %704 = vmatpush1.msra.mxu0 0.0
    %705 = vmatprep.subr.mxu0 0.0
    %706 = vmatpush1.msra.mxu0 0.0
    %707 = vmatprep.subr.mxu0 0.0
    %708 = vmatpush1.msra.mxu0 0.0
    %709 = vmatprep.subr.mxu0 0.0
    %710 = vmatpush1.msra.mxu0 0.0
    %711 = vmatprep.subr.mxu0 0.0
    %712 = vmatpush1.msra.mxu0 0.0
    %713 = vmatprep.subr.mxu0 0.0
    %714 = vmatpush1.msra.mxu0 0.0
    %715 = vmatprep.subr.mxu0 0.0
    %716 = vmatpush1.msra.mxu0 0.0
    %717 = vmatprep.subr.mxu0 0.0
    %718 = vmatpush1.msra.mxu0 0.0
    %719 = vmatprep.subr.mxu0 0.0
    %720 = vmatpush1.msra.mxu0 0.0
    %721 = vmatprep.subr.mxu0 0.0
    %722 = vmatpush1.msra.mxu0 0.0
    %723 = vmatprep.subr.mxu0 0.0
    %724 = vmatpush1.msra.mxu0 0.0
    %725 = vmatprep.subr.mxu0 0.0
    %726 = vmatpush1.msra.mxu0 0.0
    %727 = vmatprep.subr.mxu0 0.0
    %728 = vmatpush1.msra.mxu0 0.0
    %729 = vmatprep.subr.mxu0 0.0
    %730 = vmatpush1.msra.mxu0 0.0
    %731 = vmatprep.subr.mxu0 0.0
    %732 = vmatpush1.msra.mxu0 0.0
    %733 = vmatprep.subr.mxu0 0.0
    %734 = vmatpush1.msra.mxu0 0.0
    %735 = vmatprep.subr.mxu0 0.0
    %736 = vmatpush1.msra.mxu0 0.0
    %737 = vmatprep.subr.mxu0 0.0
    %738 = vmatpush1.msra.mxu0 0.0
    %739 = vmatprep.subr.mxu0 0.0
    %740 = vmatpush1.msra.mxu0 0.0
    %741 = vmatprep.mubr.f32.mxu0 0.0
    %742 = vmatmul.mubr.f32.gmra.mrb[0].mxu0 %v666
    %v743 = vpop.f32.mrb[0].mxu0
    %v744 = vadd.f32 0.0, %v743
    %v745 = vpop.f32.mrb[0].mxu0
    %746 = vmatprep.mubr.f32.mxu0 0.0
    %747 = vmatmul.mubr.f32.gmra.mrb[0].mxu0 %v669
    %v748 = vpop.f32.mrb[0].mxu0
    %v749 = vadd.f32 0.0, %v748
    %v750 = vpop.f32.mrb[0].mxu0
    %751 = vmatprep.mubr.f32.mxu0 0.0
    %752 = vmatmul.mubr.f32.gmra.mrb[0].mxu0 %v672
    %v753 = vpop.f32.mrb[0].mxu0
    %v754 = vadd.f32 0.0, %v753
    %v755 = vpop.f32.mrb[0].mxu0
    %756 = vmatprep.mubr.f32.mxu0 0.0
    %757 = vmatmul.mubr.f32.gmra.mrb[0].mxu0 %v675
    %v758 = vpop.f32.mrb[0].mxu0
    %v759 = vadd.f32 0.0, %v758
    %v760 = vpop.f32.mrb[0].mxu0
    %761 = vdwg.mxu0
    %v762 = vld [vmem:[%s13] sm:$0xff]
    %v763 = vld [vmem:[%s13 + $0x8] sm:$0xff]
    %v765 = vsel %vm511, %v744, 0
    %v768 = vsel %vm511, %v749, 0
    %v771 = vsel %vm511, %v754, 0
    %v774 = vsel %vm511, %v759, 0
    %776 = vmatprep.subr.mxu0 0.0
    %777 = vmatpush1.msra.mxu0 %v762
    %778 = vmatprep.subr.mxu0 0.0
    %779 = vmatpush1.msra.mxu0 %v763
    %780 = vmatprep.subr.mxu0 0.0
    %781 = vmatpush1.msra.mxu0 0.0
    %782 = vmatprep.subr.mxu0 0.0
    %783 = vmatpush1.msra.mxu0 0.0
    %784 = vmatprep.subr.mxu0 0.0
    %785 = vmatpush1.msra.mxu0 0.0
    %786 = vmatprep.subr.mxu0 0.0
    %787 = vmatpush1.msra.mxu0 0.0
    %788 = vmatprep.subr.mxu0 0.0
    %789 = vmatpush1.msra.mxu0 0.0
    %790 = vmatprep.subr.mxu0 0.0
    %791 = vmatpush1.msra.mxu0 0.0
    %792 = vmatprep.subr.mxu0 0.0
    %793 = vmatpush1.msra.mxu0 0.0
    %794 = vmatprep.subr.mxu0 0.0
    %795 = vmatpush1.msra.mxu0 0.0
    %796 = vmatprep.subr.mxu0 0.0
    %797 = vmatpush1.msra.mxu0 0.0
    %798 = vmatprep.subr.mxu0 0.0
    %799 = vmatpush1.msra.mxu0 0.0
    %800 = vmatprep.subr.mxu0 0.0
    %801 = vmatpush1.msra.mxu0 0.0
    %802 = vmatprep.subr.mxu0 0.0
    %803 = vmatpush1.msra.mxu0 0.0
    %804 = vmatprep.subr.mxu0 0.0
    %805 = vmatpush1.msra.mxu0 0.0
    %806 = vmatprep.subr.mxu0 0.0
    %807 = vmatpush1.msra.mxu0 0.0
    %808 = vmatprep.subr.mxu0 0.0
    %809 = vmatpush1.msra.mxu0 0.0
    %810 = vmatprep.subr.mxu0 0.0
    %811 = vmatpush1.msra.mxu0 0.0
    %812 = vmatprep.subr.mxu0 0.0
    %813 = vmatpush1.msra.mxu0 0.0
    %814 = vmatprep.subr.mxu0 0.0
    %815 = vmatpush1.msra.mxu0 0.0
    %816 = vmatprep.subr.mxu0 0.0
    %817 = vmatpush1.msra.mxu0 0.0
    %818 = vmatprep.subr.mxu0 0.0
    %819 = vmatpush1.msra.mxu0 0.0
    %820 = vmatprep.subr.mxu0 0.0
    %821 = vmatpush1.msra.mxu0 0.0
    %822 = vmatprep.subr.mxu0 0.0
    %823 = vmatpush1.msra.mxu0 0.0
    %824 = vmatprep.subr.mxu0 0.0
    %825 = vmatpush1.msra.mxu0 0.0
    %826 = vmatprep.subr.mxu0 0.0
    %827 = vmatpush1.msra.mxu0 0.0
    %828 = vmatprep.subr.mxu0 0.0
    %829 = vmatpush1.msra.mxu0 0.0
    %830 = vmatprep.subr.mxu0 0.0
    %831 = vmatpush1.msra.mxu0 0.0
    %832 = vmatprep.subr.mxu0 0.0
    %833 = vmatpush1.msra.mxu0 0.0
    %834 = vmatprep.subr.mxu0 0.0
    %835 = vmatpush1.msra.mxu0 0.0
    %836 = vmatprep.subr.mxu0 0.0
    %837 = vmatpush1.msra.mxu0 0.0
    %838 = vmatprep.subr.mxu0 0.0
    %839 = vmatpush1.msra.mxu0 0.0
    %840 = vmatprep.mubr.f32.mxu0 0.0
    %841 = vmatmul.mubr.f32.gmra.mrb[0].mxu0 %v765
    %v842 = vpop.f32.mrb[0].mxu0
    %v843 = vadd.f32 0.0, %v842
    %v844 = vpop.f32.mrb[0].mxu0
    %845 = vmatprep.mubr.f32.mxu0 0.0
    %846 = vmatmul.mubr.f32.gmra.mrb[0].mxu0 %v768
    %v847 = vpop.f32.mrb[0].mxu0
    %v848 = vadd.f32 0.0, %v847
    %v849 = vpop.f32.mrb[0].mxu0
    %850 = vmatprep.mubr.f32.mxu0 0.0
    %851 = vmatmul.mubr.f32.gmra.mrb[0].mxu0 %v771
    %v852 = vpop.f32.mrb[0].mxu0
    %v853 = vadd.f32 0.0, %v852
    %v854 = vpop.f32.mrb[0].mxu0
    %855 = vmatprep.mubr.f32.mxu0 0.0
    %856 = vmatmul.mubr.f32.gmra.mrb[0].mxu0 %v774
    %v857 = vpop.f32.mrb[0].mxu0
    %v858 = vadd.f32 0.0, %v857
    %v859 = vpop.f32.mrb[0].mxu0
    %860 = vdwg.mxu0
    %v862 = vlaneseq
    %v863 = vshrl.u32 %v862, 7
    %v864 = vsub.s32 0, %v863
    %v865 = vrot.slane %v210, %v864
    %v867 = vadd.f32 %v865, %v843
    %v868 = vadd.f32 %v865, %v848
    %v869 = vadd.f32 %v865, %v853
    %v870 = vadd.f32 %v865, %v858
    %s871 = scalar_lea.vmem %s7, 32
    %v872 = vld [vmem:[%s871] sm:$0xff]
    %v873 = vld [vmem:[%s871 + $0x8] sm:$0xff]
    %v874 = vld [vmem:[%s871 + $0x10] sm:$0xff]
    %v875 = vld [vmem:[%s871 + $0x18] sm:$0xff]
    %s876 = scalar_lea.vmem %s8, 1
    %v877 = vld [vmem:[%s876] sm:$0x1]
    %v879 = vlaneseq
    %v880 = vshrl.u32 %v879, 7
    %v881 = vsub.s32 0, %v880
    %v882 = vrot.slane %v877, %v881
    %884 = vmatprep.subr.mxu0 0.0
    %885 = vmatpush1.msra.mxu0 %v872
    %886 = vmatprep.subr.mxu0 0.0
    %887 = vmatpush1.msra.mxu0 %v873
    %888 = vmatprep.subr.mxu0 0.0
    %889 = vmatpush1.msra.mxu0 %v874
    %890 = vmatprep.subr.mxu0 0.0
    %891 = vmatpush1.msra.mxu0 %v875
    %892 = vmatprep.subr.mxu0 0.0
    %893 = vmatpush1.msra.mxu0 0.0
    %894 = vmatprep.subr.mxu0 0.0
    %895 = vmatpush1.msra.mxu0 0.0
    %896 = vmatprep.subr.mxu0 0.0
    %897 = vmatpush1.msra.mxu0 0.0
    %898 = vmatprep.subr.mxu0 0.0
    %899 = vmatpush1.msra.mxu0 0.0
    %900 = vmatprep.subr.mxu0 0.0
    %901 = vmatpush1.msra.mxu0 0.0
    %902 = vmatprep.subr.mxu0 0.0
    %903 = vmatpush1.msra.mxu0 0.0
    %904 = vmatprep.subr.mxu0 0.0
    %905 = vmatpush1.msra.mxu0 0.0
    %906 = vmatprep.subr.mxu0 0.0
    %907 = vmatpush1.msra.mxu0 0.0
    %908 = vmatprep.subr.mxu0 0.0
    %909 = vmatpush1.msra.mxu0 0.0
    %910 = vmatprep.subr.mxu0 0.0
    %911 = vmatpush1.msra.mxu0 0.0
    %912 = vmatprep.subr.mxu0 0.0
    %913 = vmatpush1.msra.mxu0 0.0
    %914 = vmatprep.subr.mxu0 0.0
    %915 = vmatpush1.msra.mxu0 0.0
    %916 = vmatprep.subr.mxu0 0.0
    %917 = vmatpush1.msra.mxu0 0.0
    %918 = vmatprep.subr.mxu0 0.0
    %919 = vmatpush1.msra.mxu0 0.0
    %920 = vmatprep.subr.mxu0 0.0
    %921 = vmatpush1.msra.mxu0 0.0
    %922 = vmatprep.subr.mxu0 0.0
    %923 = vmatpush1.msra.mxu0 0.0
    %924 = vmatprep.subr.mxu0 0.0
    %925 = vmatpush1.msra.mxu0 0.0
    %926 = vmatprep.subr.mxu0 0.0
    %927 = vmatpush1.msra.mxu0 0.0
    %928 = vmatprep.subr.mxu0 0.0
    %929 = vmatpush1.msra.mxu0 0.0
    %930 = vmatprep.subr.mxu0 0.0
    %931 = vmatpush1.msra.mxu0 0.0
    %932 = vmatprep.subr.mxu0 0.0
    %933 = vmatpush1.msra.mxu0 0.0
    %934 = vmatprep.subr.mxu0 0.0
    %935 = vmatpush1.msra.mxu0 0.0
    %936 = vmatprep.subr.mxu0 0.0
    %937 = vmatpush1.msra.mxu0 0.0
    %938 = vmatprep.subr.mxu0 0.0
    %939 = vmatpush1.msra.mxu0 0.0
    %940 = vmatprep.subr.mxu0 0.0
    %941 = vmatpush1.msra.mxu0 0.0
    %942 = vmatprep.subr.mxu0 0.0
    %943 = vmatpush1.msra.mxu0 0.0
    %944 = vmatprep.subr.mxu0 0.0
    %945 = vmatpush1.msra.mxu0 0.0
    %946 = vmatprep.subr.mxu0 0.0
    %947 = vmatpush1.msra.mxu0 0.0
    %948 = vmatprep.mubr.f32.mxu0 0.0
    %949 = vmatmul.mubr.f32.gmra.mrb[0].mxu0 %v223
    %v950 = vpop.f32.mrb[0].mxu0
    %v951 = vadd.f32 %v882, %v950
    %v952 = vpop.f32.mrb[0].mxu0
    %953 = vmatprep.mubr.f32.mxu0 0.0
    %954 = vmatmul.mubr.f32.gmra.mrb[0].mxu0 %v226
    %v955 = vpop.f32.mrb[0].mxu0
    %v956 = vadd.f32 %v882, %v955
    %v957 = vpop.f32.mrb[0].mxu0
    %958 = vmatprep.mubr.f32.mxu0 0.0
    %959 = vmatmul.mubr.f32.gmra.mrb[0].mxu0 %v229
    %v960 = vpop.f32.mrb[0].mxu0
    %v961 = vadd.f32 %v882, %v960
    %v962 = vpop.f32.mrb[0].mxu0
    %963 = vmatprep.mubr.f32.mxu0 0.0
    %964 = vmatmul.mubr.f32.gmra.mrb[0].mxu0 %v232
    %v965 = vpop.f32.mrb[0].mxu0
    %v966 = vadd.f32 %v882, %v965
    %v967 = vpop.f32.mrb[0].mxu0
    %968 = vdwg.mxu0
    %s969 = scalar_lea.vmem %s9, 32
    %v970 = vld [vmem:[%s969] sm:$0xff]
    %v971 = vld [vmem:[%s969 + $0x8] sm:$0xff]
    %v972 = vld [vmem:[%s969 + $0x10] sm:$0xff]
    %v973 = vld [vmem:[%s969 + $0x18] sm:$0xff]
    %s974 = scalar_lea.vmem %s10, 1
    %v975 = vld [vmem:[%s974] sm:$0x1]
    %v977 = vlaneseq
    %v978 = vshrl.u32 %v977, 7
    %v979 = vsub.s32 0, %v978
    %v980 = vrot.slane %v975, %v979
    %982 = vmatprep.subr.mxu0 0.0
    %983 = vmatpush1.msra.mxu0 %v970
    %984 = vmatprep.subr.mxu0 0.0
    %985 = vmatpush1.msra.mxu0 %v971
    %986 = vmatprep.subr.mxu0 0.0
    %987 = vmatpush1.msra.mxu0 %v972
    %988 = vmatprep.subr.mxu0 0.0
    %989 = vmatpush1.msra.mxu0 %v973
    %990 = vmatprep.subr.mxu0 0.0
    %991 = vmatpush1.msra.mxu0 0.0
    %992 = vmatprep.subr.mxu0 0.0
    %993 = vmatpush1.msra.mxu0 0.0
    %994 = vmatprep.subr.mxu0 0.0
    %995 = vmatpush1.msra.mxu0 0.0
    %996 = vmatprep.subr.mxu0 0.0
    %997 = vmatpush1.msra.mxu0 0.0
    %998 = vmatprep.subr.mxu0 0.0
    %999 = vmatpush1.msra.mxu0 0.0
    %1000 = vmatprep.subr.mxu0 0.0
    %1001 = vmatpush1.msra.mxu0 0.0
    %1002 = vmatprep.subr.mxu0 0.0
    %1003 = vmatpush1.msra.mxu0 0.0
    %1004 = vmatprep.subr.mxu0 0.0
    %1005 = vmatpush1.msra.mxu0 0.0
    %1006 = vmatprep.subr.mxu0 0.0
    %1007 = vmatpush1.msra.mxu0 0.0
    %1008 = vmatprep.subr.mxu0 0.0
    %1009 = vmatpush1.msra.mxu0 0.0
    %1010 = vmatprep.subr.mxu0 0.0
    %1011 = vmatpush1.msra.mxu0 0.0
    %1012 = vmatprep.subr.mxu0 0.0
    %1013 = vmatpush1.msra.mxu0 0.0
    %1014 = vmatprep.subr.mxu0 0.0
    %1015 = vmatpush1.msra.mxu0 0.0
    %1016 = vmatprep.subr.mxu0 0.0
    %1017 = vmatpush1.msra.mxu0 0.0
    %1018 = vmatprep.subr.mxu0 0.0
    %1019 = vmatpush1.msra.mxu0 0.0
    %1020 = vmatprep.subr.mxu0 0.0
    %1021 = vmatpush1.msra.mxu0 0.0
    %1022 = vmatprep.subr.mxu0 0.0
    %1023 = vmatpush1.msra.mxu0 0.0
    %1024 = vmatprep.subr.mxu0 0.0
    %1025 = vmatpush1.msra.mxu0 0.0
    %1026 = vmatprep.subr.mxu0 0.0
    %1027 = vmatpush1.msra.mxu0 0.0
    %1028 = vmatprep.subr.mxu0 0.0
    %1029 = vmatpush1.msra.mxu0 0.0
    %1030 = vmatprep.subr.mxu0 0.0
    %1031 = vmatpush1.msra.mxu0 0.0
    %1032 = vmatprep.subr.mxu0 0.0
    %1033 = vmatpush1.msra.mxu0 0.0
    %1034 = vmatprep.subr.mxu0 0.0
    %1035 = vmatpush1.msra.mxu0 0.0
    %1036 = vmatprep.subr.mxu0 0.0
    %1037 = vmatpush1.msra.mxu0 0.0
    %1038 = vmatprep.subr.mxu0 0.0
    %1039 = vmatpush1.msra.mxu0 0.0
    %1040 = vmatprep.subr.mxu0 0.0
    %1041 = vmatpush1.msra.mxu0 0.0
    %1042 = vmatprep.subr.mxu0 0.0
    %1043 = vmatpush1.msra.mxu0 0.0
    %1044 = vmatprep.subr.mxu0 0.0
    %1045 = vmatpush1.msra.mxu0 0.0
    %1046 = vmatprep.mubr.f32.mxu0 0.0
    %1047 = vmatmul.mubr.f32.gmra.mrb[0].mxu0 %v223
    %v1048 = vpop.f32.mrb[0].mxu0
    %v1049 = vadd.f32 %v980, %v1048
    %v1050 = vpop.f32.mrb[0].mxu0
    %1051 = vmatprep.mubr.f32.mxu0 0.0
    %1052 = vmatmul.mubr.f32.gmra.mrb[0].mxu0 %v226
    %v1053 = vpop.f32.mrb[0].mxu0
    %v1054 = vadd.f32 %v980, %v1053
    %v1055 = vpop.f32.mrb[0].mxu0
    %1056 = vmatprep.mubr.f32.mxu0 0.0
    %1057 = vmatmul.mubr.f32.gmra.mrb[0].mxu0 %v229
    %v1058 = vpop.f32.mrb[0].mxu0
    %v1059 = vadd.f32 %v980, %v1058
    %v1060 = vpop.f32.mrb[0].mxu0
    %1061 = vmatprep.mubr.f32.mxu0 0.0
    %1062 = vmatmul.mubr.f32.gmra.mrb[0].mxu0 %v232
    %v1063 = vpop.f32.mrb[0].mxu0
    %v1064 = vadd.f32 %v980, %v1063
    %v1065 = vpop.f32.mrb[0].mxu0
    %1066 = vdwg.mxu0
    %s1067 = scalar_lea.vmem %s11, 32
    %v1068 = vld [vmem:[%s1067] sm:$0xff]
    %v1069 = vld [vmem:[%s1067 + $0x8] sm:$0xff]
    %v1070 = vld [vmem:[%s1067 + $0x10] sm:$0xff]
    %v1071 = vld [vmem:[%s1067 + $0x18] sm:$0xff]
    %s1072 = scalar_lea.vmem %s12, 1
    %v1073 = vld [vmem:[%s1072] sm:$0x1]
    %v1075 = vlaneseq
    %v1076 = vshrl.u32 %v1075, 7
    %v1077 = vsub.s32 0, %v1076
    %v1078 = vrot.slane %v1073, %v1077
    %1080 = vmatprep.subr.mxu0 0.0
    %1081 = vmatpush1.msra.mxu0 %v1068
    %1082 = vmatprep.subr.mxu0 0.0
    %1083 = vmatpush1.msra.mxu0 %v1069
    %1084 = vmatprep.subr.mxu0 0.0
    %1085 = vmatpush1.msra.mxu0 %v1070
    %1086 = vmatprep.subr.mxu0 0.0
    %1087 = vmatpush1.msra.mxu0 %v1071
    %1088 = vmatprep.subr.mxu0 0.0
    %1089 = vmatpush1.msra.mxu0 0.0
    %1090 = vmatprep.subr.mxu0 0.0
    %1091 = vmatpush1.msra.mxu0 0.0
    %1092 = vmatprep.subr.mxu0 0.0
    %1093 = vmatpush1.msra.mxu0 0.0
    %1094 = vmatprep.subr.mxu0 0.0
    %1095 = vmatpush1.msra.mxu0 0.0
    %1096 = vmatprep.subr.mxu0 0.0
    %1097 = vmatpush1.msra.mxu0 0.0
    %1098 = vmatprep.subr.mxu0 0.0
    %1099 = vmatpush1.msra.mxu0 0.0
    %1100 = vmatprep.subr.mxu0 0.0
    %1101 = vmatpush1.msra.mxu0 0.0
    %1102 = vmatprep.subr.mxu0 0.0
    %1103 = vmatpush1.msra.mxu0 0.0
    %1104 = vmatprep.subr.mxu0 0.0
    %1105 = vmatpush1.msra.mxu0 0.0
    %1106 = vmatprep.subr.mxu0 0.0
    %1107 = vmatpush1.msra.mxu0 0.0
    %1108 = vmatprep.subr.mxu0 0.0
    %1109 = vmatpush1.msra.mxu0 0.0
    %1110 = vmatprep.subr.mxu0 0.0
    %1111 = vmatpush1.msra.mxu0 0.0
    %1112 = vmatprep.subr.mxu0 0.0
    %1113 = vmatpush1.msra.mxu0 0.0
    %1114 = vmatprep.subr.mxu0 0.0
    %1115 = vmatpush1.msra.mxu0 0.0
    %1116 = vmatprep.subr.mxu0 0.0
    %1117 = vmatpush1.msra.mxu0 0.0
    %1118 = vmatprep.subr.mxu0 0.0
    %1119 = vmatpush1.msra.mxu0 0.0
    %1120 = vmatprep.subr.mxu0 0.0
    %1121 = vmatpush1.msra.mxu0 0.0
    %1122 = vmatprep.subr.mxu0 0.0
    %1123 = vmatpush1.msra.mxu0 0.0
    %1124 = vmatprep.subr.mxu0 0.0
    %1125 = vmatpush1.msra.mxu0 0.0
    %1126 = vmatprep.subr.mxu0 0.0
    %1127 = vmatpush1.msra.mxu0 0.0
    %1128 = vmatprep.subr.mxu0 0.0
    %1129 = vmatpush1.msra.mxu0 0.0
    %1130 = vmatprep.subr.mxu0 0.0
    %1131 = vmatpush1.msra.mxu0 0.0
    %1132 = vmatprep.subr.mxu0 0.0
    %1133 = vmatpush1.msra.mxu0 0.0
    %1134 = vmatprep.subr.mxu0 0.0
    %1135 = vmatpush1.msra.mxu0 0.0
    %1136 = vmatprep.subr.mxu0 0.0
    %1137 = vmatpush1.msra.mxu0 0.0
    %1138 = vmatprep.subr.mxu0 0.0
    %1139 = vmatpush1.msra.mxu0 0.0
    %1140 = vmatprep.subr.mxu0 0.0
    %1141 = vmatpush1.msra.mxu0 0.0
    %1142 = vmatprep.subr.mxu0 0.0
    %1143 = vmatpush1.msra.mxu0 0.0
    %1144 = vmatprep.mubr.f32.mxu0 0.0
    %1145 = vmatmul.mubr.f32.gmra.mrb[0].mxu0 %v223
    %v1146 = vpop.f32.mrb[0].mxu0
    %v1147 = vadd.f32 %v1078, %v1146
    %v1148 = vpop.f32.mrb[0].mxu0
    %1149 = vmatprep.mubr.f32.mxu0 0.0
    %1150 = vmatmul.mubr.f32.gmra.mrb[0].mxu0 %v226
    %v1151 = vpop.f32.mrb[0].mxu0
    %v1152 = vadd.f32 %v1078, %v1151
    %v1153 = vpop.f32.mrb[0].mxu0
    %1154 = vmatprep.mubr.f32.mxu0 0.0
    %1155 = vmatmul.mubr.f32.gmra.mrb[0].mxu0 %v229
    %v1156 = vpop.f32.mrb[0].mxu0
    %v1157 = vadd.f32 %v1078, %v1156
    %v1158 = vpop.f32.mrb[0].mxu0
    %1159 = vmatprep.mubr.f32.mxu0 0.0
    %1160 = vmatmul.mubr.f32.gmra.mrb[0].mxu0 %v232
    %v1161 = vpop.f32.mrb[0].mxu0
    %v1162 = vadd.f32 %v1078, %v1161
    %v1163 = vpop.f32.mrb[0].mxu0
    %1164 = vdwg.mxu0
    %v1166 = vsel %vm511, %v951, 0
    %v1169 = vsel %vm511, %v956, 0
    %v1172 = vsel %vm511, %v961, 0
    %v1175 = vsel %vm511, %v966, 0
    %v1178 = vsel %vm511, %v1049, 0
    %v1181 = vsel %vm511, %v1054, 0
    %v1184 = vsel %vm511, %v1059, 0
    %v1187 = vsel %vm511, %v1064, 0
    %1189 = vmatprep.subr.mxu0 0.0
    %1190 = vmatpush1.xpose.msra.mxu0 %v1178
    %1191 = vmatprep.subr.mxu0 0.0
    %1192 = vmatpush1.xpose.msra.mxu0 %v1181
    %1193 = vmatprep.subr.mxu0 0.0
    %1194 = vmatpush1.xpose.msra.mxu0 %v1184
    %1195 = vmatprep.subr.mxu0 0.0
    %1196 = vmatpush1.xpose.msra.mxu0 %v1187
    %1197 = vmatprep.subr.mxu0 0.0
    %1198 = vmatpush1.xpose.msra.mxu0 0.0
    %1199 = vmatprep.subr.mxu0 0.0
    %1200 = vmatpush1.xpose.msra.mxu0 0.0
    %1201 = vmatprep.subr.mxu0 0.0
    %1202 = vmatpush1.xpose.msra.mxu0 0.0
    %1203 = vmatprep.subr.mxu0 0.0
    %1204 = vmatpush1.xpose.msra.mxu0 0.0
    %1205 = vmatprep.subr.mxu0 0.0
    %1206 = vmatpush1.xpose.msra.mxu0 0.0
    %1207 = vmatprep.subr.mxu0 0.0
    %1208 = vmatpush1.xpose.msra.mxu0 0.0
    %1209 = vmatprep.subr.mxu0 0.0
    %1210 = vmatpush1.xpose.msra.mxu0 0.0
    %1211 = vmatprep.subr.mxu0 0.0
    %1212 = vmatpush1.xpose.msra.mxu0 0.0
    %1213 = vmatprep.subr.mxu0 0.0
    %1214 = vmatpush1.xpose.msra.mxu0 0.0
    %1215 = vmatprep.subr.mxu0 0.0
    %1216 = vmatpush1.xpose.msra.mxu0 0.0
    %1217 = vmatprep.subr.mxu0 0.0
    %1218 = vmatpush1.xpose.msra.mxu0 0.0
    %1219 = vmatprep.subr.mxu0 0.0
    %1220 = vmatpush1.xpose.msra.mxu0 0.0
    %1221 = vmatprep.subr.mxu0 0.0
    %1222 = vmatpush1.xpose.msra.mxu0 0.0
    %1223 = vmatprep.subr.mxu0 0.0
    %1224 = vmatpush1.xpose.msra.mxu0 0.0
    %1225 = vmatprep.subr.mxu0 0.0
    %1226 = vmatpush1.xpose.msra.mxu0 0.0
    %1227 = vmatprep.subr.mxu0 0.0
    %1228 = vmatpush1.xpose.msra.mxu0 0.0
    %1229 = vmatprep.subr.mxu0 0.0
    %1230 = vmatpush1.xpose.msra.mxu0 0.0
    %1231 = vmatprep.subr.mxu0 0.0
    %1232 = vmatpush1.xpose.msra.mxu0 0.0
    %1233 = vmatprep.subr.mxu0 0.0
    %1234 = vmatpush1.xpose.msra.mxu0 0.0
    %1235 = vmatprep.subr.mxu0 0.0
    %1236 = vmatpush1.xpose.msra.mxu0 0.0
    %1237 = vmatprep.subr.mxu0 0.0
    %1238 = vmatpush1.xpose.msra.mxu0 0.0
    %1239 = vmatprep.subr.mxu0 0.0
    %1240 = vmatpush1.xpose.msra.mxu0 0.0
    %1241 = vmatprep.subr.mxu0 0.0
    %1242 = vmatpush1.xpose.msra.mxu0 0.0
    %1243 = vmatprep.subr.mxu0 0.0
    %1244 = vmatpush1.xpose.msra.mxu0 0.0
    %1245 = vmatprep.subr.mxu0 0.0
    %1246 = vmatpush1.xpose.msra.mxu0 0.0
    %1247 = vmatprep.subr.mxu0 0.0
    %1248 = vmatpush1.xpose.msra.mxu0 0.0
    %1249 = vmatprep.subr.mxu0 0.0
    %1250 = vmatpush1.xpose.msra.mxu0 0.0
    %1251 = vmatprep.subr.mxu0 0.0
    %1252 = vmatpush1.xpose.msra.mxu0 0.0
    %1253 = vmatprep.mubr.f32.mxu0 0.0
    %1254 = vmatmul.mubr.f32.gmra.mrb[0].mxu0 %v1166
    %v1255 = vpop.f32.mrb[0].mxu0
    %v1256 = vadd.f32 %v206, %v1255
    %v1257 = vpop.f32.mrb[0].mxu0
    %1258 = vmatprep.mubr.f32.mxu0 0.0
    %1259 = vmatmul.mubr.f32.gmra.mrb[0].mxu0 %v1169
    %v1260 = vpop.f32.mrb[0].mxu0
    %v1261 = vadd.f32 %v207, %v1260
    %v1262 = vpop.f32.mrb[0].mxu0
    %1263 = vmatprep.mubr.f32.mxu0 0.0
    %1264 = vmatmul.mubr.f32.gmra.mrb[0].mxu0 %v1172
    %v1265 = vpop.f32.mrb[0].mxu0
    %v1266 = vadd.f32 %v208, %v1265
    %v1267 = vpop.f32.mrb[0].mxu0
    %1268 = vmatprep.mubr.f32.mxu0 0.0
    %1269 = vmatmul.mubr.f32.gmra.mrb[0].mxu0 %v1175
    %v1270 = vpop.f32.mrb[0].mxu0
    %v1271 = vadd.f32 %v209, %v1270
    %v1272 = vpop.f32.mrb[0].mxu0
    %1273 = vdwg.mxu0
    %v1274 = vsel %vm101, %v1256, -inf
    %1275 = vmax.xlane.f32.xlu0 %v1274
    %v1276 = vpop.xlane.xlu0 %1275
    %v1277 = vsel %vm101, %v1261, -inf
    %1278 = vmax.xlane.f32.xlu0 %v1277
    %v1279 = vpop.xlane.xlu0 %1278
    %v1280 = vsel %vm101, %v1266, -inf
    %1281 = vmax.xlane.f32.xlu0 %v1280
    %v1282 = vpop.xlane.xlu0 %1281
    %v1283 = vsel %vm101, %v1271, -inf
    %1284 = vmax.xlane.f32.xlu0 %v1283
    %v1285 = vpop.xlane.xlu0 %1284
    %v1286 = vsub.f32 %v1256, %v1276
    %v1287 = vsub.f32 %v1261, %v1279
    %v1288 = vsub.f32 %v1266, %v1282
    %v1289 = vsub.f32 %v1271, %v1285
    %v1290 = vmul.f32 %v1286, 1.442695
    %v1291 = vpow.pop %v1290
    %v1292 = vmul.f32 %v1287, 1.442695
    %v1293 = vpow.pop %v1292
    %v1294 = vmul.f32 %v1288, 1.442695
    %v1295 = vpow.pop %v1294
    %v1296 = vmul.f32 %v1289, 1.442695
    %v1297 = vpow.pop %v1296
    %v1298 = vsel %vm101, %v1291, 0.0
    %1299 = vadd.xlane.f32.xlu0 %v1298
    %v1300 = vpop.xlane.xlu0 %1299
    %v1301 = vsel %vm101, %v1293, 0.0
    %1302 = vadd.xlane.f32.xlu0 %v1301
    %v1303 = vpop.xlane.xlu0 %1302
    %v1304 = vsel %vm101, %v1295, 0.0
    %1305 = vadd.xlane.f32.xlu0 %v1304
    %v1306 = vpop.xlane.xlu0 %1305
    %v1307 = vsel %vm101, %v1297, 0.0
    %1308 = vadd.xlane.f32.xlu0 %v1307
    %v1309 = vpop.xlane.xlu0 %1308
    %v1310 = vrcp.pop %v1300
    %v1311 = vmul.f32 %v1291, %v1310
    %v1312 = vrcp.pop %v1303
    %v1313 = vmul.f32 %v1293, %v1312
    %v1314 = vrcp.pop %v1306
    %v1315 = vmul.f32 %v1295, %v1314
    %v1316 = vrcp.pop %v1309
    %v1317 = vmul.f32 %v1297, %v1316
    %v1319 = vsel %vm101, %v1311, 0
    %v1322 = vsel %vm101, %v1313, 0
    %v1325 = vsel %vm101, %v1315, 0
    %v1328 = vsel %vm101, %v1317, 0
    %1330 = vmatprep.subr.mxu0 0.0
    %1331 = vmatpush1.msra.mxu0 %v1147
    %1332 = vmatprep.subr.mxu0 0.0
    %1333 = vmatpush1.msra.mxu0 %v1152
    %1334 = vmatprep.subr.mxu0 0.0
    %1335 = vmatpush1.msra.mxu0 %v1157
    %1336 = vmatprep.subr.mxu0 0.0
    %1337 = vmatpush1.msra.mxu0 %v1162
    %1338 = vmatprep.subr.mxu0 0.0
    %1339 = vmatpush1.msra.mxu0 0.0
    %1340 = vmatprep.subr.mxu0 0.0
    %1341 = vmatpush1.msra.mxu0 0.0
    %1342 = vmatprep.subr.mxu0 0.0
    %1343 = vmatpush1.msra.mxu0 0.0
    %1344 = vmatprep.subr.mxu0 0.0
    %1345 = vmatpush1.msra.mxu0 0.0
    %1346 = vmatprep.subr.mxu0 0.0
    %1347 = vmatpush1.msra.mxu0 0.0
    %1348 = vmatprep.subr.mxu0 0.0
    %1349 = vmatpush1.msra.mxu0 0.0
    %1350 = vmatprep.subr.mxu0 0.0
    %1351 = vmatpush1.msra.mxu0 0.0
    %1352 = vmatprep.subr.mxu0 0.0
    %1353 = vmatpush1.msra.mxu0 0.0
    %1354 = vmatprep.subr.mxu0 0.0
    %1355 = vmatpush1.msra.mxu0 0.0
    %1356 = vmatprep.subr.mxu0 0.0
    %1357 = vmatpush1.msra.mxu0 0.0
    %1358 = vmatprep.subr.mxu0 0.0
    %1359 = vmatpush1.msra.mxu0 0.0
    %1360 = vmatprep.subr.mxu0 0.0
    %1361 = vmatpush1.msra.mxu0 0.0
    %1362 = vmatprep.subr.mxu0 0.0
    %1363 = vmatpush1.msra.mxu0 0.0
    %1364 = vmatprep.subr.mxu0 0.0
    %1365 = vmatpush1.msra.mxu0 0.0
    %1366 = vmatprep.subr.mxu0 0.0
    %1367 = vmatpush1.msra.mxu0 0.0
    %1368 = vmatprep.subr.mxu0 0.0
    %1369 = vmatpush1.msra.mxu0 0.0
    %1370 = vmatprep.subr.mxu0 0.0
    %1371 = vmatpush1.msra.mxu0 0.0
    %1372 = vmatprep.subr.mxu0 0.0
    %1373 = vmatpush1.msra.mxu0 0.0
    %1374 = vmatprep.subr.mxu0 0.0
    %1375 = vmatpush1.msra.mxu0 0.0
    %1376 = vmatprep.subr.mxu0 0.0
    %1377 = vmatpush1.msra.mxu0 0.0
    %1378 = vmatprep.subr.mxu0 0.0
    %1379 = vmatpush1.msra.mxu0 0.0
    %1380 = vmatprep.subr.mxu0 0.0
    %1381 = vmatpush1.msra.mxu0 0.0
    %1382 = vmatprep.subr.mxu0 0.0
    %1383 = vmatpush1.msra.mxu0 0.0
    %1384 = vmatprep.subr.mxu0 0.0
    %1385 = vmatpush1.msra.mxu0 0.0
    %1386 = vmatprep.subr.mxu0 0.0
    %1387 = vmatpush1.msra.mxu0 0.0
    %1388 = vmatprep.subr.mxu0 0.0
    %1389 = vmatpush1.msra.mxu0 0.0
    %1390 = vmatprep.subr.mxu0 0.0
    %1391 = vmatpush1.msra.mxu0 0.0
    %1392 = vmatprep.subr.mxu0 0.0
    %1393 = vmatpush1.msra.mxu0 0.0
    %1394 = vmatprep.mubr.f32.mxu0 0.0
    %1395 = vmatmul.mubr.f32.gmra.mrb[0].mxu0 %v1319
    %v1396 = vpop.f32.mrb[0].mxu0
    %v1397 = vadd.f32 0.0, %v1396
    %v1398 = vpop.f32.mrb[0].mxu0
    %1399 = vmatprep.mubr.f32.mxu0 0.0
    %1400 = vmatmul.mubr.f32.gmra.mrb[0].mxu0 %v1322
    %v1401 = vpop.f32.mrb[0].mxu0
    %v1402 = vadd.f32 0.0, %v1401
    %v1403 = vpop.f32.mrb[0].mxu0
    %1404 = vmatprep.mubr.f32.mxu0 0.0
    %1405 = vmatmul.mubr.f32.gmra.mrb[0].mxu0 %v1325
    %v1406 = vpop.f32.mrb[0].mxu0
    %v1407 = vadd.f32 0.0, %v1406
    %v1408 = vpop.f32.mrb[0].mxu0
    %1409 = vmatprep.mubr.f32.mxu0 0.0
    %1410 = vmatmul.mubr.f32.gmra.mrb[0].mxu0 %v1328
    %v1411 = vpop.f32.mrb[0].mxu0
    %v1412 = vadd.f32 0.0, %v1411
    %v1413 = vpop.f32.mrb[0].mxu0
    %1414 = vdwg.mxu0
    %s1415 = scalar_lea.vmem %s13, 16
    %v1416 = vld [vmem:[%s1415] sm:$0xff]
    %v1417 = vld [vmem:[%s1415 + $0x8] sm:$0xff]
    %v1419 = vsel %vm511, %v1397, 0
    %v1422 = vsel %vm511, %v1402, 0
    %v1425 = vsel %vm511, %v1407, 0
    %v1428 = vsel %vm511, %v1412, 0
    %1430 = vmatprep.subr.mxu0 0.0
    %1431 = vmatpush1.msra.mxu0 %v1416
    %1432 = vmatprep.subr.mxu0 0.0
    %1433 = vmatpush1.msra.mxu0 %v1417
    %1434 = vmatprep.subr.mxu0 0.0
    %1435 = vmatpush1.msra.mxu0 0.0
    %1436 = vmatprep.subr.mxu0 0.0
    %1437 = vmatpush1.msra.mxu0 0.0
    %1438 = vmatprep.subr.mxu0 0.0
    %1439 = vmatpush1.msra.mxu0 0.0
    %1440 = vmatprep.subr.mxu0 0.0
    %1441 = vmatpush1.msra.mxu0 0.0
    %1442 = vmatprep.subr.mxu0 0.0
    %1443 = vmatpush1.msra.mxu0 0.0
    %1444 = vmatprep.subr.mxu0 0.0
    %1445 = vmatpush1.msra.mxu0 0.0
    %1446 = vmatprep.subr.mxu0 0.0
    %1447 = vmatpush1.msra.mxu0 0.0
    %1448 = vmatprep.subr.mxu0 0.0
    %1449 = vmatpush1.msra.mxu0 0.0
    %1450 = vmatprep.subr.mxu0 0.0
    %1451 = vmatpush1.msra.mxu0 0.0
    %1452 = vmatprep.subr.mxu0 0.0
    %1453 = vmatpush1.msra.mxu0 0.0
    %1454 = vmatprep.subr.mxu0 0.0
    %1455 = vmatpush1.msra.mxu0 0.0
    %1456 = vmatprep.subr.mxu0 0.0
    %1457 = vmatpush1.msra.mxu0 0.0
    %1458 = vmatprep.subr.mxu0 0.0
    %1459 = vmatpush1.msra.mxu0 0.0
    %1460 = vmatprep.subr.mxu0 0.0
    %1461 = vmatpush1.msra.mxu0 0.0
    %1462 = vmatprep.subr.mxu0 0.0
    %1463 = vmatpush1.msra.mxu0 0.0
    %1464 = vmatprep.subr.mxu0 0.0
    %1465 = vmatpush1.msra.mxu0 0.0
    %1466 = vmatprep.subr.mxu0 0.0
    %1467 = vmatpush1.msra.mxu0 0.0
    %1468 = vmatprep.subr.mxu0 0.0
    %1469 = vmatpush1.msra.mxu0 0.0
    %1470 = vmatprep.subr.mxu0 0.0
    %1471 = vmatpush1.msra.mxu0 0.0
    %1472 = vmatprep.subr.mxu0 0.0
    %1473 = vmatpush1.msra.mxu0 0.0
    %1474 = vmatprep.subr.mxu0 0.0
    %1475 = vmatpush1.msra.mxu0 0.0
    %1476 = vmatprep.subr.mxu0 0.0
    %1477 = vmatpush1.msra.mxu0 0.0
    %1478 = vmatprep.subr.mxu0 0.0
    %1479 = vmatpush1.msra.mxu0 0.0
    %1480 = vmatprep.subr.mxu0 0.0
    %1481 = vmatpush1.msra.mxu0 0.0
    %1482 = vmatprep.subr.mxu0 0.0
    %1483 = vmatpush1.msra.mxu0 0.0
    %1484 = vmatprep.subr.mxu0 0.0
    %1485 = vmatpush1.msra.mxu0 0.0
    %1486 = vmatprep.subr.mxu0 0.0
    %1487 = vmatpush1.msra.mxu0 0.0
    %1488 = vmatprep.subr.mxu0 0.0
    %1489 = vmatpush1.msra.mxu0 0.0
    %1490 = vmatprep.subr.mxu0 0.0
    %1491 = vmatpush1.msra.mxu0 0.0
    %1492 = vmatprep.subr.mxu0 0.0
    %1493 = vmatpush1.msra.mxu0 0.0
    %1494 = vmatprep.mubr.f32.mxu0 0.0
    %1495 = vmatmul.mubr.f32.gmra.mrb[0].mxu0 %v1419
    %v1496 = vpop.f32.mrb[0].mxu0
    %v1497 = vadd.f32 0.0, %v1496
    %v1498 = vpop.f32.mrb[0].mxu0
    %1499 = vmatprep.mubr.f32.mxu0 0.0
    %1500 = vmatmul.mubr.f32.gmra.mrb[0].mxu0 %v1422
    %v1501 = vpop.f32.mrb[0].mxu0
    %v1502 = vadd.f32 0.0, %v1501
    %v1503 = vpop.f32.mrb[0].mxu0
    %1504 = vmatprep.mubr.f32.mxu0 0.0
    %1505 = vmatmul.mubr.f32.gmra.mrb[0].mxu0 %v1425
    %v1506 = vpop.f32.mrb[0].mxu0
    %v1507 = vadd.f32 0.0, %v1506
    %v1508 = vpop.f32.mrb[0].mxu0
    %1509 = vmatprep.mubr.f32.mxu0 0.0
    %1510 = vmatmul.mubr.f32.gmra.mrb[0].mxu0 %v1428
    %v1511 = vpop.f32.mrb[0].mxu0
    %v1512 = vadd.f32 0.0, %v1511
    %v1513 = vpop.f32.mrb[0].mxu0
    %1514 = vdwg.mxu0
    %v1515 = vadd.f32 %v867, %v1497
    %v1516 = vadd.f32 %v868, %v1502
    %v1517 = vadd.f32 %v869, %v1507
    %v1518 = vadd.f32 %v870, %v1512
    %v1519 = vadd.f32 %v1515, %v183
    %v1520 = vadd.f32 %v1516, %v184
    %v1521 = vadd.f32 %v1517, %v185
    %v1522 = vadd.f32 %v1518, %v186
    %v1523 = vld [vmem:[%s15] sm:$0x1]
    %v1524 = vld [vmem:[%s16] sm:$0x1]
    %v1525 = vsel %vm101, %v1519, 0.0
    %1526 = vadd.xlane.f32.xlu0 %v1525
    %v1527 = vpop.xlane.xlu0 %1526
    %v1528 = vsel %vm101, %v1520, 0.0
    %1529 = vadd.xlane.f32.xlu0 %v1528
    %v1530 = vpop.xlane.xlu0 %1529
    %v1531 = vsel %vm101, %v1521, 0.0
    %1532 = vadd.xlane.f32.xlu0 %v1531
    %v1533 = vpop.xlane.xlu0 %1532
    %v1534 = vsel %vm101, %v1522, 0.0
    %1535 = vadd.xlane.f32.xlu0 %v1534
    %v1536 = vpop.xlane.xlu0 %1535
    %v1537 = vmul.f32 %v1527, %v114
    %v1538 = vmul.f32 %v1530, %v114
    %v1539 = vmul.f32 %v1533, %v114
    %v1540 = vmul.f32 %v1536, %v114
    %v1541 = vmul.f32 %v1519, %v1519
    %v1542 = vmul.f32 %v1520, %v1520
    %v1543 = vmul.f32 %v1521, %v1521
    %v1544 = vmul.f32 %v1522, %v1522
    %v1545 = vsel %vm101, %v1541, 0.0
    %1546 = vadd.xlane.f32.xlu0 %v1545
    %v1547 = vpop.xlane.xlu0 %1546
    %v1548 = vsel %vm101, %v1542, 0.0
    %1549 = vadd.xlane.f32.xlu0 %v1548
    %v1550 = vpop.xlane.xlu0 %1549
    %v1551 = vsel %vm101, %v1543, 0.0
    %1552 = vadd.xlane.f32.xlu0 %v1551
    %v1553 = vpop.xlane.xlu0 %1552
    %v1554 = vsel %vm101, %v1544, 0.0
    %1555 = vadd.xlane.f32.xlu0 %v1554
    %v1556 = vpop.xlane.xlu0 %1555
    %v1557 = vmul.f32 %v1547, %v114
    %v1558 = vmul.f32 %v1550, %v114
    %v1559 = vmul.f32 %v1553, %v114
    %v1560 = vmul.f32 %v1556, %v114
    %v1561 = vmul.f32 %v1537, %v1537
    %v1562 = vmul.f32 %v1538, %v1538
    %v1563 = vmul.f32 %v1539, %v1539
    %v1564 = vmul.f32 %v1540, %v1540
    %v1565 = vsub.f32 %v1557, %v1561
    %v1566 = vsub.f32 %v1558, %v1562
    %v1567 = vsub.f32 %v1559, %v1563
    %v1568 = vsub.f32 %v1560, %v1564
    %v1569 = vmax.f32 %v1565, 0.0
    %v1570 = vmax.f32 %v1566, 0.0
    %v1571 = vmax.f32 %v1567, 0.0
    %v1572 = vmax.f32 %v1568, 0.0
    %v1573 = vsub.f32 %v1519, %v1537
    %v1574 = vsub.f32 %v1520, %v1538
    %v1575 = vsub.f32 %v1521, %v1539
    %v1576 = vsub.f32 %v1522, %v1540
    %v1577 = vadd.f32 %v1569, 1e-12
    %v1578 = vadd.f32 %v1570, 1e-12
    %v1579 = vadd.f32 %v1571, 1e-12
    %v1580 = vadd.f32 %v1572, 1e-12
    %v1581 = vrsqrt.pop %v1577
    %v1582 = vrsqrt.pop %v1578
    %v1583 = vrsqrt.pop %v1579
    %v1584 = vrsqrt.pop %v1580
    %v1585 = vmul.f32 %v1573, %v1581
    %v1586 = vmul.f32 %v1574, %v1582
    %v1587 = vmul.f32 %v1575, %v1583
    %v1588 = vmul.f32 %v1576, %v1584
    %v1590 = vlaneseq
    %v1591 = vshrl.u32 %v1590, 7
    %v1592 = vsub.s32 0, %v1591
    %v1593 = vrot.slane %v1523, %v1592
    %v1595 = vmul.f32 %v1585, %v1593
    %v1596 = vmul.f32 %v1586, %v1593
    %v1597 = vmul.f32 %v1587, %v1593
    %v1598 = vmul.f32 %v1588, %v1593
    %v1600 = vlaneseq
    %v1601 = vshrl.u32 %v1600, 7
    %v1602 = vsub.s32 0, %v1601
    %v1603 = vrot.slane %v1524, %v1602
    %v1605 = vadd.f32 %v1595, %v1603
    %v1606 = vadd.f32 %v1596, %v1603
    %v1607 = vadd.f32 %v1597, %v1603
    %v1608 = vadd.f32 %v1598, %v1603
    %v1609 = vld [vmem:[#allocation2] sm:$0xff]
    %v1610 = vld [vmem:[#allocation2 + $0x8] sm:$0xff]
    %v1611 = vld [vmem:[#allocation2 + $0x10] sm:$0xff]
    %v1612 = vld [vmem:[#allocation2 + $0x18] sm:$0xff]
    %v1613 = vld [vmem:[%s18] sm:$0x1]
    %v1615 = vlaneseq
    %v1616 = vshrl.u32 %v1615, 7
    %v1617 = vsub.s32 0, %v1616
    %v1618 = vrot.slane %v1613, %v1617
    %v1621 = vsel %vm101, %v1605, 0
    %v1624 = vsel %vm101, %v1606, 0
    %v1627 = vsel %vm101, %v1607, 0
    %v1630 = vsel %vm101, %v1608, 0
    %1632 = vmatprep.subr.mxu0 0.0
    %1633 = vmatpush1.msra.mxu0 %v1609
    %1634 = vmatprep.subr.mxu0 0.0
    %1635 = vmatpush1.msra.mxu0 %v1610
    %1636 = vmatprep.subr.mxu0 0.0
    %1637 = vmatpush1.msra.mxu0 %v1611
    %1638 = vmatprep.subr.mxu0 0.0
    %1639 = vmatpush1.msra.mxu0 %v1612
    %1640 = vmatprep.subr.mxu0 0.0
    %1641 = vmatpush1.msra.mxu0 0.0
    %1642 = vmatprep.subr.mxu0 0.0
    %1643 = vmatpush1.msra.mxu0 0.0
    %1644 = vmatprep.subr.mxu0 0.0
    %1645 = vmatpush1.msra.mxu0 0.0
    %1646 = vmatprep.subr.mxu0 0.0
    %1647 = vmatpush1.msra.mxu0 0.0
    %1648 = vmatprep.subr.mxu0 0.0
    %1649 = vmatpush1.msra.mxu0 0.0
    %1650 = vmatprep.subr.mxu0 0.0
    %1651 = vmatpush1.msra.mxu0 0.0
    %1652 = vmatprep.subr.mxu0 0.0
    %1653 = vmatpush1.msra.mxu0 0.0
    %1654 = vmatprep.subr.mxu0 0.0
    %1655 = vmatpush1.msra.mxu0 0.0
    %1656 = vmatprep.subr.mxu0 0.0
    %1657 = vmatpush1.msra.mxu0 0.0
    %1658 = vmatprep.subr.mxu0 0.0
    %1659 = vmatpush1.msra.mxu0 0.0
    %1660 = vmatprep.subr.mxu0 0.0
    %1661 = vmatpush1.msra.mxu0 0.0
    %1662 = vmatprep.subr.mxu0 0.0
    %1663 = vmatpush1.msra.mxu0 0.0
    %1664 = vmatprep.subr.mxu0 0.0
    %1665 = vmatpush1.msra.mxu0 0.0
    %1666 = vmatprep.subr.mxu0 0.0
    %1667 = vmatpush1.msra.mxu0 0.0
    %1668 = vmatprep.subr.mxu0 0.0
    %1669 = vmatpush1.msra.mxu0 0.0
    %1670 = vmatprep.subr.mxu0 0.0
    %1671 = vmatpush1.msra.mxu0 0.0
    %1672 = vmatprep.subr.mxu0 0.0
    %1673 = vmatpush1.msra.mxu0 0.0
    %1674 = vmatprep.subr.mxu0 0.0
    %1675 = vmatpush1.msra.mxu0 0.0
    %1676 = vmatprep.subr.mxu0 0.0
    %1677 = vmatpush1.msra.mxu0 0.0
    %1678 = vmatprep.subr.mxu0 0.0
    %1679 = vmatpush1.msra.mxu0 0.0
    %1680 = vmatprep.subr.mxu0 0.0
    %1681 = vmatpush1.msra.mxu0 0.0
    %1682 = vmatprep.subr.mxu0 0.0
    %1683 = vmatpush1.msra.mxu0 0.0
    %1684 = vmatprep.subr.mxu0 0.0
    %1685 = vmatpush1.msra.mxu0 0.0
    %1686 = vmatprep.subr.mxu0 0.0
    %1687 = vmatpush1.msra.mxu0 0.0
    %1688 = vmatprep.subr.mxu0 0.0
    %1689 = vmatpush1.msra.mxu0 0.0
    %1690 = vmatprep.subr.mxu0 0.0
    %1691 = vmatpush1.msra.mxu0 0.0
    %1692 = vmatprep.subr.mxu0 0.0
    %1693 = vmatpush1.msra.mxu0 0.0
    %1694 = vmatprep.subr.mxu0 0.0
    %1695 = vmatpush1.msra.mxu0 0.0
    %1696 = vmatprep.mubr.f32.mxu0 0.0
    %1697 = vmatmul.mubr.f32.gmra.mrb[0].mxu0 %v1621
    %v1698 = vpop.f32.mrb[0].mxu0
    %v1699 = vadd.f32 %v1618, %v1698
    %v1700 = vpop.f32.mrb[0].mxu0
    %1701 = vmatprep.mubr.f32.mxu0 0.0
    %1702 = vmatmul.mubr.f32.gmra.mrb[0].mxu0 %v1624
    %v1703 = vpop.f32.mrb[0].mxu0
    %v1704 = vadd.f32 %v1618, %v1703
    %v1705 = vpop.f32.mrb[0].mxu0
    %1706 = vmatprep.mubr.f32.mxu0 0.0
    %1707 = vmatmul.mubr.f32.gmra.mrb[0].mxu0 %v1627
    %v1708 = vpop.f32.mrb[0].mxu0
    %v1709 = vadd.f32 %v1618, %v1708
    %v1710 = vpop.f32.mrb[0].mxu0
    %1711 = vmatprep.mubr.f32.mxu0 0.0
    %1712 = vmatmul.mubr.f32.gmra.mrb[0].mxu0 %v1630
    %v1713 = vpop.f32.mrb[0].mxu0
    %v1714 = vadd.f32 %v1618, %v1713
    %v1715 = vpop.f32.mrb[0].mxu0
    %1716 = vdwg.mxu0
    %v1717 = vmul.f32 %v1699, 0.5
    %v1718 = vmul.f32 %v1704, 0.5
    %v1719 = vmul.f32 %v1709, 0.5
    %v1720 = vmul.f32 %v1714, 0.5
    %v1721 = vmul.f32 %v1699, 0.044715
    %v1722 = vmul.f32 %v1704, 0.044715
    %v1723 = vmul.f32 %v1709, 0.044715
    %v1724 = vmul.f32 %v1714, 0.044715
    %v1725 = vmul.f32 %v1721, %v1699
    %v1726 = vmul.f32 %v1722, %v1704
    %v1727 = vmul.f32 %v1723, %v1709
    %v1728 = vmul.f32 %v1724, %v1714
    %v1729 = vmul.f32 %v1725, %v1699
    %v1730 = vmul.f32 %v1726, %v1704
    %v1731 = vmul.f32 %v1727, %v1709
    %v1732 = vmul.f32 %v1728, %v1714
    %v1733 = vadd.f32 %v1699, %v1729
    %v1734 = vadd.f32 %v1704, %v1730
    %v1735 = vadd.f32 %v1709, %v1731
    %v1736 = vadd.f32 %v1714, %v1732
    %v1737 = vmul.f32 %v1733, 0.7978846
    %v1738 = vmul.f32 %v1734, 0.7978846
    %v1739 = vmul.f32 %v1735, 0.7978846
    %v1740 = vmul.f32 %v1736, 0.7978846
    %v1741 = vtanh.pop %v1737
    %v1742 = vtanh.pop %v1738
    %v1743 = vtanh.pop %v1739
    %v1744 = vtanh.pop %v1740
    %v1745 = vadd.f32 %v1741, 1.0
    %v1746 = vadd.f32 %v1742, 1.0
    %v1747 = vadd.f32 %v1743, 1.0
    %v1748 = vadd.f32 %v1744, 1.0
    %v1749 = vmul.f32 %v1717, %v1745
    %v1750 = vmul.f32 %v1718, %v1746
    %v1751 = vmul.f32 %v1719, %v1747
    %v1752 = vmul.f32 %v1720, %v1748
    %v1753 = vld [vmem:[%s19] sm:$0xff]
    %v1754 = vld [vmem:[%s19 + $0x8] sm:$0xff]
    %v1755 = vld [vmem:[%s19 + $0x10] sm:$0xff]
    %v1756 = vld [vmem:[%s19 + $0x18] sm:$0xff]
    %v1757 = vld [vmem:[%s19 + $0x20] sm:$0xff]
    %v1758 = vld [vmem:[%s19 + $0x28] sm:$0xff]
    %v1759 = vld [vmem:[%s19 + $0x30] sm:$0xff]
    %v1760 = vld [vmem:[%s19 + $0x38] sm:$0xff]
    %v1761 = vld [vmem:[%s20] sm:$0x1]
    %v1763 = vlaneseq
    %v1764 = vshrl.u32 %v1763, 7
    %v1765 = vsub.s32 0, %v1764
    %v1766 = vrot.slane %v1761, %v1765
    %vm1768 = vcmask 523264
    %v1770 = vsel %vm1768, %v1749, 0
    %v1773 = vsel %vm1768, %v1750, 0
    %v1776 = vsel %vm1768, %v1751, 0
    %v1779 = vsel %vm1768, %v1752, 0
    %1781 = vmatprep.subr.mxu0 0.0
    %1782 = vmatpush1.msra.mxu0 %v1753
    %1783 = vmatprep.subr.mxu0 0.0
    %1784 = vmatpush1.msra.mxu0 %v1754
    %1785 = vmatprep.subr.mxu0 0.0
    %1786 = vmatpush1.msra.mxu0 %v1755
    %1787 = vmatprep.subr.mxu0 0.0
    %1788 = vmatpush1.msra.mxu0 %v1756
    %1789 = vmatprep.subr.mxu0 0.0
    %1790 = vmatpush1.msra.mxu0 %v1757
    %1791 = vmatprep.subr.mxu0 0.0
    %1792 = vmatpush1.msra.mxu0 %v1758
    %1793 = vmatprep.subr.mxu0 0.0
    %1794 = vmatpush1.msra.mxu0 %v1759
    %1795 = vmatprep.subr.mxu0 0.0
    %1796 = vmatpush1.msra.mxu0 %v1760
    %1797 = vmatprep.subr.mxu0 0.0
    %1798 = vmatpush1.msra.mxu0 0.0
    %1799 = vmatprep.subr.mxu0 0.0
    %1800 = vmatpush1.msra.mxu0 0.0
    %1801 = vmatprep.subr.mxu0 0.0
    %1802 = vmatpush1.msra.mxu0 0.0
    %1803 = vmatprep.subr.mxu0 0.0
    %1804 = vmatpush1.msra.mxu0 0.0
    %1805 = vmatprep.subr.mxu0 0.0
    %1806 = vmatpush1.msra.mxu0 0.0
    %1807 = vmatprep.subr.mxu0 0.0
    %1808 = vmatpush1.msra.mxu0 0.0
    %1809 = vmatprep.subr.mxu0 0.0
    %1810 = vmatpush1.msra.mxu0 0.0
    %1811 = vmatprep.subr.mxu0 0.0
    %1812 = vmatpush1.msra.mxu0 0.0
    %1813 = vmatprep.subr.mxu0 0.0
    %1814 = vmatpush1.msra.mxu0 0.0
    %1815 = vmatprep.subr.mxu0 0.0
    %1816 = vmatpush1.msra.mxu0 0.0
    %1817 = vmatprep.subr.mxu0 0.0
    %1818 = vmatpush1.msra.mxu0 0.0
    %1819 = vmatprep.subr.mxu0 0.0
    %1820 = vmatpush1.msra.mxu0 0.0
    %1821 = vmatprep.subr.mxu0 0.0
    %1822 = vmatpush1.msra.mxu0 0.0
    %1823 = vmatprep.subr.mxu0 0.0
    %1824 = vmatpush1.msra.mxu0 0.0
    %1825 = vmatprep.subr.mxu0 0.0
    %1826 = vmatpush1.msra.mxu0 0.0
    %1827 = vmatprep.subr.mxu0 0.0
    %1828 = vmatpush1.msra.mxu0 0.0
    %1829 = vmatprep.subr.mxu0 0.0
    %1830 = vmatpush1.msra.mxu0 0.0
    %1831 = vmatprep.subr.mxu0 0.0
    %1832 = vmatpush1.msra.mxu0 0.0
    %1833 = vmatprep.subr.mxu0 0.0
    %1834 = vmatpush1.msra.mxu0 0.0
    %1835 = vmatprep.subr.mxu0 0.0
    %1836 = vmatpush1.msra.mxu0 0.0
    %1837 = vmatprep.subr.mxu0 0.0
    %1838 = vmatpush1.msra.mxu0 0.0
    %1839 = vmatprep.subr.mxu0 0.0
    %1840 = vmatpush1.msra.mxu0 0.0
    %1841 = vmatprep.subr.mxu0 0.0
    %1842 = vmatpush1.msra.mxu0 0.0
    %1843 = vmatprep.subr.mxu0 0.0
    %1844 = vmatpush1.msra.mxu0 0.0
    %1845 = vmatprep.mubr.f32.mxu0 0.0
    %1846 = vmatmul.mubr.f32.gmra.mrb[0].mxu0 %v1770
    %v1847 = vpop.f32.mrb[0].mxu0
    %v1848 = vadd.f32 %v1766, %v1847
    %v1849 = vpop.f32.mrb[0].mxu0
    %1850 = vmatprep.mubr.f32.mxu0 0.0
    %1851 = vmatmul.mubr.f32.gmra.mrb[0].mxu0 %v1773
    %v1852 = vpop.f32.mrb[0].mxu0
    %v1853 = vadd.f32 %v1766, %v1852
    %v1854 = vpop.f32.mrb[0].mxu0
    %1855 = vmatprep.mubr.f32.mxu0 0.0
    %1856 = vmatmul.mubr.f32.gmra.mrb[0].mxu0 %v1776
    %v1857 = vpop.f32.mrb[0].mxu0
    %v1858 = vadd.f32 %v1766, %v1857
    %v1859 = vpop.f32.mrb[0].mxu0
    %1860 = vmatprep.mubr.f32.mxu0 0.0
    %1861 = vmatmul.mubr.f32.gmra.mrb[0].mxu0 %v1779
    %v1862 = vpop.f32.mrb[0].mxu0
    %v1863 = vadd.f32 %v1766, %v1862
    %v1864 = vpop.f32.mrb[0].mxu0
    %1865 = vdwg.mxu0
    %v1866 = vadd.f32 %v1848, %v1605
    %v1867 = vadd.f32 %v1853, %v1606
    %v1868 = vadd.f32 %v1858, %v1607
    %v1869 = vadd.f32 %v1863, %v1608
    %v1870 = vld [vmem:[%s21] sm:$0x1]
    %v1871 = vld [vmem:[%s22] sm:$0x1]
    %v1872 = vsel %vm101, %v1866, 0.0
    %1873 = vadd.xlane.f32.xlu0 %v1872
    %v1874 = vpop.xlane.xlu0 %1873
    %v1875 = vsel %vm101, %v1867, 0.0
    %1876 = vadd.xlane.f32.xlu0 %v1875
    %v1877 = vpop.xlane.xlu0 %1876
    %v1878 = vsel %vm101, %v1868, 0.0
    %1879 = vadd.xlane.f32.xlu0 %v1878
    %v1880 = vpop.xlane.xlu0 %1879
    %v1881 = vsel %vm101, %v1869, 0.0
    %1882 = vadd.xlane.f32.xlu0 %v1881
    %v1883 = vpop.xlane.xlu0 %1882
    %v1884 = vmul.f32 %v1874, %v114
    %v1885 = vmul.f32 %v1877, %v114
    %v1886 = vmul.f32 %v1880, %v114
    %v1887 = vmul.f32 %v1883, %v114
    %v1888 = vmul.f32 %v1866, %v1866
    %v1889 = vmul.f32 %v1867, %v1867
    %v1890 = vmul.f32 %v1868, %v1868
    %v1891 = vmul.f32 %v1869, %v1869
    %v1892 = vsel %vm101, %v1888, 0.0
    %1893 = vadd.xlane.f32.xlu0 %v1892
    %v1894 = vpop.xlane.xlu0 %1893
    %v1895 = vsel %vm101, %v1889, 0.0
    %1896 = vadd.xlane.f32.xlu0 %v1895
    %v1897 = vpop.xlane.xlu0 %1896
    %v1898 = vsel %vm101, %v1890, 0.0
    %1899 = vadd.xlane.f32.xlu0 %v1898
    %v1900 = vpop.xlane.xlu0 %1899
    %v1901 = vsel %vm101, %v1891, 0.0
    %1902 = vadd.xlane.f32.xlu0 %v1901
    %v1903 = vpop.xlane.xlu0 %1902
    %v1904 = vmul.f32 %v1894, %v114
    %v1905 = vmul.f32 %v1897, %v114
    %v1906 = vmul.f32 %v1900, %v114
    %v1907 = vmul.f32 %v1903, %v114
    %v1908 = vmul.f32 %v1884, %v1884
    %v1909 = vmul.f32 %v1885, %v1885
    %v1910 = vmul.f32 %v1886, %v1886
    %v1911 = vmul.f32 %v1887, %v1887
    %v1912 = vsub.f32 %v1904, %v1908
    %v1913 = vsub.f32 %v1905, %v1909
    %v1914 = vsub.f32 %v1906, %v1910
    %v1915 = vsub.f32 %v1907, %v1911
    %v1916 = vmax.f32 %v1912, 0.0
    %v1917 = vmax.f32 %v1913, 0.0
    %v1918 = vmax.f32 %v1914, 0.0
    %v1919 = vmax.f32 %v1915, 0.0
    %v1920 = vsub.f32 %v1866, %v1884
    %v1921 = vsub.f32 %v1867, %v1885
    %v1922 = vsub.f32 %v1868, %v1886
    %v1923 = vsub.f32 %v1869, %v1887
    %v1924 = vadd.f32 %v1916, 1e-12
    %v1925 = vadd.f32 %v1917, 1e-12
    %v1926 = vadd.f32 %v1918, 1e-12
    %v1927 = vadd.f32 %v1919, 1e-12
    %v1928 = vrsqrt.pop %v1924
    %v1929 = vrsqrt.pop %v1925
    %v1930 = vrsqrt.pop %v1926
    %v1931 = vrsqrt.pop %v1927
    %v1932 = vmul.f32 %v1920, %v1928
    %v1933 = vmul.f32 %v1921, %v1929
    %v1934 = vmul.f32 %v1922, %v1930
    %v1935 = vmul.f32 %v1923, %v1931
    %v1937 = vlaneseq
    %v1938 = vshrl.u32 %v1937, 7
    %v1939 = vsub.s32 0, %v1938
    %v1940 = vrot.slane %v1870, %v1939
    %v1942 = vmul.f32 %v1932, %v1940
    %v1943 = vmul.f32 %v1933, %v1940
    %v1944 = vmul.f32 %v1934, %v1940
    %v1945 = vmul.f32 %v1935, %v1940
    %v1947 = vlaneseq
    %v1948 = vshrl.u32 %v1947, 7
    %v1949 = vsub.s32 0, %v1948
    %v1950 = vrot.slane %v1871, %v1949
    %v1952 = vadd.f32 %v1942, %v1950
    %v1953 = vadd.f32 %v1943, %v1950
    %v1954 = vadd.f32 %v1944, %v1950
    %v1955 = vadd.f32 %v1945, %v1950
    %s1956 = scalar_lea.vmem %s14, 1
    %v1957 = vld [vmem:[%s1956] sm:$0x1]
    %s1958 = scalar_lea.vmem %s7, 64
    %v1959 = vld [vmem:[%s1958] sm:$0xff]
    %v1960 = vld [vmem:[%s1958 + $0x8] sm:$0xff]
    %v1961 = vld [vmem:[%s1958 + $0x10] sm:$0xff]
    %v1962 = vld [vmem:[%s1958 + $0x18] sm:$0xff]
    %s1963 = scalar_lea.vmem %s8, 2
    %v1964 = vld [vmem:[%s1963] sm:$0x1]
    %v1966 = vlaneseq
    %v1967 = vshrl.u32 %v1966, 7
    %v1968 = vsub.s32 0, %v1967
    %v1969 = vrot.slane %v1964, %v1968
    %v1972 = vsel %vm101, %v1952, 0
    %v1975 = vsel %vm101, %v1953, 0
    %v1978 = vsel %vm101, %v1954, 0
    %v1981 = vsel %vm101, %v1955, 0
    %1983 = vmatprep.subr.mxu0 0.0
    %1984 = vmatpush1.msra.mxu0 %v1959
    %1985 = vmatprep.subr.mxu0 0.0
    %1986 = vmatpush1.msra.mxu0 %v1960
    %1987 = vmatprep.subr.mxu0 0.0
    %1988 = vmatpush1.msra.mxu0 %v1961
    %1989 = vmatprep.subr.mxu0 0.0
    %1990 = vmatpush1.msra.mxu0 %v1962
    %1991 = vmatprep.subr.mxu0 0.0
    %1992 = vmatpush1.msra.mxu0 0.0
    %1993 = vmatprep.subr.mxu0 0.0
    %1994 = vmatpush1.msra.mxu0 0.0
    %1995 = vmatprep.subr.mxu0 0.0
    %1996 = vmatpush1.msra.mxu0 0.0
    %1997 = vmatprep.subr.mxu0 0.0
    %1998 = vmatpush1.msra.mxu0 0.0
    %1999 = vmatprep.subr.mxu0 0.0
    %2000 = vmatpush1.msra.mxu0 0.0
    %2001 = vmatprep.subr.mxu0 0.0
    %2002 = vmatpush1.msra.mxu0 0.0
    %2003 = vmatprep.subr.mxu0 0.0
    %2004 = vmatpush1.msra.mxu0 0.0
    %2005 = vmatprep.subr.mxu0 0.0
    %2006 = vmatpush1.msra.mxu0 0.0
    %2007 = vmatprep.subr.mxu0 0.0
    %2008 = vmatpush1.msra.mxu0 0.0
    %2009 = vmatprep.subr.mxu0 0.0
    %2010 = vmatpush1.msra.mxu0 0.0
    %2011 = vmatprep.subr.mxu0 0.0
    %2012 = vmatpush1.msra.mxu0 0.0
    %2013 = vmatprep.subr.mxu0 0.0
    %2014 = vmatpush1.msra.mxu0 0.0
    %2015 = vmatprep.subr.mxu0 0.0
    %2016 = vmatpush1.msra.mxu0 0.0
    %2017 = vmatprep.subr.mxu0 0.0
    %2018 = vmatpush1.msra.mxu0 0.0
    %2019 = vmatprep.subr.mxu0 0.0
    %2020 = vmatpush1.msra.mxu0 0.0
    %2021 = vmatprep.subr.mxu0 0.0
    %2022 = vmatpush1.msra.mxu0 0.0
    %2023 = vmatprep.subr.mxu0 0.0
    %2024 = vmatpush1.msra.mxu0 0.0
    %2025 = vmatprep.subr.mxu0 0.0
    %2026 = vmatpush1.msra.mxu0 0.0
    %2027 = vmatprep.subr.mxu0 0.0
    %2028 = vmatpush1.msra.mxu0 0.0
    %2029 = vmatprep.subr.mxu0 0.0
    %2030 = vmatpush1.msra.mxu0 0.0
    %2031 = vmatprep.subr.mxu0 0.0
    %2032 = vmatpush1.msra.mxu0 0.0
    %2033 = vmatprep.subr.mxu0 0.0
    %2034 = vmatpush1.msra.mxu0 0.0
    %2035 = vmatprep.subr.mxu0 0.0
    %2036 = vmatpush1.msra.mxu0 0.0
    %2037 = vmatprep.subr.mxu0 0.0
    %2038 = vmatpush1.msra.mxu0 0.0
    %2039 = vmatprep.subr.mxu0 0.0
    %2040 = vmatpush1.msra.mxu0 0.0
    %2041 = vmatprep.subr.mxu0 0.0
    %2042 = vmatpush1.msra.mxu0 0.0
    %2043 = vmatprep.subr.mxu0 0.0
    %2044 = vmatpush1.msra.mxu0 0.0
    %2045 = vmatprep.subr.mxu0 0.0
    %2046 = vmatpush1.msra.mxu0 0.0
    %2047 = vmatprep.mubr.f32.mxu0 0.0
    %2048 = vmatmul.mubr.f32.gmra.mrb[0].mxu0 %v1972
    %v2049 = vpop.f32.mrb[0].mxu0
    %v2050 = vadd.f32 %v1969, %v2049
    %v2051 = vpop.f32.mrb[0].mxu0
    %2052 = vmatprep.mubr.f32.mxu0 0.0
    %2053 = vmatmul.mubr.f32.gmra.mrb[0].mxu0 %v1975
    %v2054 = vpop.f32.mrb[0].mxu0
    %v2055 = vadd.f32 %v1969, %v2054
    %v2056 = vpop.f32.mrb[0].mxu0
    %2057 = vmatprep.mubr.f32.mxu0 0.0
    %2058 = vmatmul.mubr.f32.gmra.mrb[0].mxu0 %v1978
    %v2059 = vpop.f32.mrb[0].mxu0
    %v2060 = vadd.f32 %v1969, %v2059
    %v2061 = vpop.f32.mrb[0].mxu0
    %2062 = vmatprep.mubr.f32.mxu0 0.0
    %2063 = vmatmul.mubr.f32.gmra.mrb[0].mxu0 %v1981
    %v2064 = vpop.f32.mrb[0].mxu0
    %v2065 = vadd.f32 %v1969, %v2064
    %v2066 = vpop.f32.mrb[0].mxu0
    %2067 = vdwg.mxu0
    %s2068 = scalar_lea.vmem %s9, 64
    %v2069 = vld [vmem:[%s2068] sm:$0xff]
    %v2070 = vld [vmem:[%s2068 + $0x8] sm:$0xff]
    %v2071 = vld [vmem:[%s2068 + $0x10] sm:$0xff]
    %v2072 = vld [vmem:[%s2068 + $0x18] sm:$0xff]
    %s2073 = scalar_lea.vmem %s10, 2
    %v2074 = vld [vmem:[%s2073] sm:$0x1]
    %v2076 = vlaneseq
    %v2077 = vshrl.u32 %v2076, 7
    %v2078 = vsub.s32 0, %v2077
    %v2079 = vrot.slane %v2074, %v2078
    %2081 = vmatprep.subr.mxu0 0.0
    %2082 = vmatpush1.msra.mxu0 %v2069
    %2083 = vmatprep.subr.mxu0 0.0
    %2084 = vmatpush1.msra.mxu0 %v2070
    %2085 = vmatprep.subr.mxu0 0.0
    %2086 = vmatpush1.msra.mxu0 %v2071
    %2087 = vmatprep.subr.mxu0 0.0
    %2088 = vmatpush1.msra.mxu0 %v2072
    %2089 = vmatprep.subr.mxu0 0.0
    %2090 = vmatpush1.msra.mxu0 0.0
    %2091 = vmatprep.subr.mxu0 0.0
    %2092 = vmatpush1.msra.mxu0 0.0
    %2093 = vmatprep.subr.mxu0 0.0
    %2094 = vmatpush1.msra.mxu0 0.0
    %2095 = vmatprep.subr.mxu0 0.0
    %2096 = vmatpush1.msra.mxu0 0.0
    %2097 = vmatprep.subr.mxu0 0.0
    %2098 = vmatpush1.msra.mxu0 0.0
    %2099 = vmatprep.subr.mxu0 0.0
    %2100 = vmatpush1.msra.mxu0 0.0
    %2101 = vmatprep.subr.mxu0 0.0
    %2102 = vmatpush1.msra.mxu0 0.0
    %2103 = vmatprep.subr.mxu0 0.0
    %2104 = vmatpush1.msra.mxu0 0.0
    %2105 = vmatprep.subr.mxu0 0.0
    %2106 = vmatpush1.msra.mxu0 0.0
    %2107 = vmatprep.subr.mxu0 0.0
    %2108 = vmatpush1.msra.mxu0 0.0
    %2109 = vmatprep.subr.mxu0 0.0
    %2110 = vmatpush1.msra.mxu0 0.0
    %2111 = vmatprep.subr.mxu0 0.0
    %2112 = vmatpush1.msra.mxu0 0.0
    %2113 = vmatprep.subr.mxu0 0.0
    %2114 = vmatpush1.msra.mxu0 0.0
    %2115 = vmatprep.subr.mxu0 0.0
    %2116 = vmatpush1.msra.mxu0 0.0
    %2117 = vmatprep.subr.mxu0 0.0
    %2118 = vmatpush1.msra.mxu0 0.0
    %2119 = vmatprep.subr.mxu0 0.0
    %2120 = vmatpush1.msra.mxu0 0.0
    %2121 = vmatprep.subr.mxu0 0.0
    %2122 = vmatpush1.msra.mxu0 0.0
    %2123 = vmatprep.subr.mxu0 0.0
    %2124 = vmatpush1.msra.mxu0 0.0
    %2125 = vmatprep.subr.mxu0 0.0
    %2126 = vmatpush1.msra.mxu0 0.0
    %2127 = vmatprep.subr.mxu0 0.0
    %2128 = vmatpush1.msra.mxu0 0.0
    %2129 = vmatprep.subr.mxu0 0.0
    %2130 = vmatpush1.msra.mxu0 0.0
    %2131 = vmatprep.subr.mxu0 0.0
    %2132 = vmatpush1.msra.mxu0 0.0
    %2133 = vmatprep.subr.mxu0 0.0
    %2134 = vmatpush1.msra.mxu0 0.0
    %2135 = vmatprep.subr.mxu0 0.0
    %2136 = vmatpush1.msra.mxu0 0.0
    %2137 = vmatprep.subr.mxu0 0.0
    %2138 = vmatpush1.msra.mxu0 0.0
    %2139 = vmatprep.subr.mxu0 0.0
    %2140 = vmatpush1.msra.mxu0 0.0
    %2141 = vmatprep.subr.mxu0 0.0
    %2142 = vmatpush1.msra.mxu0 0.0
    %2143 = vmatprep.subr.mxu0 0.0
    %2144 = vmatpush1.msra.mxu0 0.0
    %2145 = vmatprep.mubr.f32.mxu0 0.0
    %2146 = vmatmul.mubr.f32.gmra.mrb[0].mxu0 %v1972
    %v2147 = vpop.f32.mrb[0].mxu0
    %v2148 = vadd.f32 %v2079, %v2147
    %v2149 = vpop.f32.mrb[0].mxu0
    %2150 = vmatprep.mubr.f32.mxu0 0.0
    %2151 = vmatmul.mubr.f32.gmra.mrb[0].mxu0 %v1975
    %v2152 = vpop.f32.mrb[0].mxu0
    %v2153 = vadd.f32 %v2079, %v2152
    %v2154 = vpop.f32.mrb[0].mxu0
    %2155 = vmatprep.mubr.f32.mxu0 0.0
    %2156 = vmatmul.mubr.f32.gmra.mrb[0].mxu0 %v1978
    %v2157 = vpop.f32.mrb[0].mxu0
    %v2158 = vadd.f32 %v2079, %v2157
    %v2159 = vpop.f32.mrb[0].mxu0
    %2160 = vmatprep.mubr.f32.mxu0 0.0
    %2161 = vmatmul.mubr.f32.gmra.mrb[0].mxu0 %v1981
    %v2162 = vpop.f32.mrb[0].mxu0
    %v2163 = vadd.f32 %v2079, %v2162
    %v2164 = vpop.f32.mrb[0].mxu0
    %2165 = vdwg.mxu0
    %s2166 = scalar_lea.vmem %s11, 64
    %v2167 = vld [vmem:[%s2166] sm:$0xff]
    %v2168 = vld [vmem:[%s2166 + $0x8] sm:$0xff]
    %v2169 = vld [vmem:[%s2166 + $0x10] sm:$0xff]
    %v2170 = vld [vmem:[%s2166 + $0x18] sm:$0xff]
    %s2171 = scalar_lea.vmem %s12, 2
    %v2172 = vld [vmem:[%s2171] sm:$0x1]
    %v2174 = vlaneseq
    %v2175 = vshrl.u32 %v2174, 7
    %v2176 = vsub.s32 0, %v2175
    %v2177 = vrot.slane %v2172, %v2176
    %2179 = vmatprep.subr.mxu0 0.0
    %2180 = vmatpush1.msra.mxu0 %v2167
    %2181 = vmatprep.subr.mxu0 0.0
    %2182 = vmatpush1.msra.mxu0 %v2168
    %2183 = vmatprep.subr.mxu0 0.0
    %2184 = vmatpush1.msra.mxu0 %v2169
    %2185 = vmatprep.subr.mxu0 0.0
    %2186 = vmatpush1.msra.mxu0 %v2170
    %2187 = vmatprep.subr.mxu0 0.0
    %2188 = vmatpush1.msra.mxu0 0.0
    %2189 = vmatprep.subr.mxu0 0.0
    %2190 = vmatpush1.msra.mxu0 0.0
    %2191 = vmatprep.subr.mxu0 0.0
    %2192 = vmatpush1.msra.mxu0 0.0
    %2193 = vmatprep.subr.mxu0 0.0
    %2194 = vmatpush1.msra.mxu0 0.0
    %2195 = vmatprep.subr.mxu0 0.0
    %2196 = vmatpush1.msra.mxu0 0.0
    %2197 = vmatprep.subr.mxu0 0.0
    %2198 = vmatpush1.msra.mxu0 0.0
    %2199 = vmatprep.subr.mxu0 0.0
    %2200 = vmatpush1.msra.mxu0 0.0
    %2201 = vmatprep.subr.mxu0 0.0
    %2202 = vmatpush1.msra.mxu0 0.0
    %2203 = vmatprep.subr.mxu0 0.0
    %2204 = vmatpush1.msra.mxu0 0.0
    %2205 = vmatprep.subr.mxu0 0.0
    %2206 = vmatpush1.msra.mxu0 0.0
    %2207 = vmatprep.subr.mxu0 0.0
    %2208 = vmatpush1.msra.mxu0 0.0
    %2209 = vmatprep.subr.mxu0 0.0
    %2210 = vmatpush1.msra.mxu0 0.0
    %2211 = vmatprep.subr.mxu0 0.0
    %2212 = vmatpush1.msra.mxu0 0.0
    %2213 = vmatprep.subr.mxu0 0.0
    %2214 = vmatpush1.msra.mxu0 0.0
    %2215 = vmatprep.subr.mxu0 0.0
    %2216 = vmatpush1.msra.mxu0 0.0
    %2217 = vmatprep.subr.mxu0 0.0
    %2218 = vmatpush1.msra.mxu0 0.0
    %2219 = vmatprep.subr.mxu0 0.0
    %2220 = vmatpush1.msra.mxu0 0.0
    %2221 = vmatprep.subr.mxu0 0.0
    %2222 = vmatpush1.msra.mxu0 0.0
    %2223 = vmatprep.subr.mxu0 0.0
    %2224 = vmatpush1.msra.mxu0 0.0
    %2225 = vmatprep.subr.mxu0 0.0
    %2226 = vmatpush1.msra.mxu0 0.0
    %2227 = vmatprep.subr.mxu0 0.0
    %2228 = vmatpush1.msra.mxu0 0.0
    %2229 = vmatprep.subr.mxu0 0.0
    %2230 = vmatpush1.msra.mxu0 0.0
    %2231 = vmatprep.subr.mxu0 0.0
    %2232 = vmatpush1.msra.mxu0 0.0
    %2233 = vmatprep.subr.mxu0 0.0
    %2234 = vmatpush1.msra.mxu0 0.0
    %2235 = vmatprep.subr.mxu0 0.0
    %2236 = vmatpush1.msra.mxu0 0.0
    %2237 = vmatprep.subr.mxu0 0.0
    %2238 = vmatpush1.msra.mxu0 0.0
    %2239 = vmatprep.subr.mxu0 0.0
    %2240 = vmatpush1.msra.mxu0 0.0
    %2241 = vmatprep.subr.mxu0 0.0
    %2242 = vmatpush1.msra.mxu0 0.0
    %2243 = vmatprep.mubr.f32.mxu0 0.0
    %2244 = vmatmul.mubr.f32.gmra.mrb[0].mxu0 %v1972
    %v2245 = vpop.f32.mrb[0].mxu0
    %v2246 = vadd.f32 %v2177, %v2245
    %v2247 = vpop.f32.mrb[0].mxu0
    %2248 = vmatprep.mubr.f32.mxu0 0.0
    %2249 = vmatmul.mubr.f32.gmra.mrb[0].mxu0 %v1975
    %v2250 = vpop.f32.mrb[0].mxu0
    %v2251 = vadd.f32 %v2177, %v2250
    %v2252 = vpop.f32.mrb[0].mxu0
    %2253 = vmatprep.mubr.f32.mxu0 0.0
    %2254 = vmatmul.mubr.f32.gmra.mrb[0].mxu0 %v1978
    %v2255 = vpop.f32.mrb[0].mxu0
    %v2256 = vadd.f32 %v2177, %v2255
    %v2257 = vpop.f32.mrb[0].mxu0
    %2258 = vmatprep.mubr.f32.mxu0 0.0
    %2259 = vmatmul.mubr.f32.gmra.mrb[0].mxu0 %v1981
    %v2260 = vpop.f32.mrb[0].mxu0
    %v2261 = vadd.f32 %v2177, %v2260
    %v2262 = vpop.f32.mrb[0].mxu0
    %2263 = vdwg.mxu0
    %v2265 = vsel %vm511, %v2050, 0
    %v2268 = vsel %vm511, %v2055, 0
    %v2271 = vsel %vm511, %v2060, 0
    %v2274 = vsel %vm511, %v2065, 0
    %v2277 = vsel %vm511, %v2148, 0
    %v2280 = vsel %vm511, %v2153, 0
    %v2283 = vsel %vm511, %v2158, 0
    %v2286 = vsel %vm511, %v2163, 0
    %2288 = vmatprep.subr.mxu0 0.0
    %2289 = vmatpush1.xpose.msra.mxu0 %v2277
    %2290 = vmatprep.subr.mxu0 0.0
    %2291 = vmatpush1.xpose.msra.mxu0 %v2280
    %2292 = vmatprep.subr.mxu0 0.0
    %2293 = vmatpush1.xpose.msra.mxu0 %v2283
    %2294 = vmatprep.subr.mxu0 0.0
    %2295 = vmatpush1.xpose.msra.mxu0 %v2286
    %2296 = vmatprep.subr.mxu0 0.0
    %2297 = vmatpush1.xpose.msra.mxu0 0.0
    %2298 = vmatprep.subr.mxu0 0.0
    %2299 = vmatpush1.xpose.msra.mxu0 0.0
    %2300 = vmatprep.subr.mxu0 0.0
    %2301 = vmatpush1.xpose.msra.mxu0 0.0
    %2302 = vmatprep.subr.mxu0 0.0
    %2303 = vmatpush1.xpose.msra.mxu0 0.0
    %2304 = vmatprep.subr.mxu0 0.0
    %2305 = vmatpush1.xpose.msra.mxu0 0.0
    %2306 = vmatprep.subr.mxu0 0.0
    %2307 = vmatpush1.xpose.msra.mxu0 0.0
    %2308 = vmatprep.subr.mxu0 0.0
    %2309 = vmatpush1.xpose.msra.mxu0 0.0
    %2310 = vmatprep.subr.mxu0 0.0
    %2311 = vmatpush1.xpose.msra.mxu0 0.0
    %2312 = vmatprep.subr.mxu0 0.0
    %2313 = vmatpush1.xpose.msra.mxu0 0.0
    %2314 = vmatprep.subr.mxu0 0.0
    %2315 = vmatpush1.xpose.msra.mxu0 0.0
    %2316 = vmatprep.subr.mxu0 0.0
    %2317 = vmatpush1.xpose.msra.mxu0 0.0
    %2318 = vmatprep.subr.mxu0 0.0
    %2319 = vmatpush1.xpose.msra.mxu0 0.0
    %2320 = vmatprep.subr.mxu0 0.0
    %2321 = vmatpush1.xpose.msra.mxu0 0.0
    %2322 = vmatprep.subr.mxu0 0.0
    %2323 = vmatpush1.xpose.msra.mxu0 0.0
    %2324 = vmatprep.subr.mxu0 0.0
    %2325 = vmatpush1.xpose.msra.mxu0 0.0
    %2326 = vmatprep.subr.mxu0 0.0
    %2327 = vmatpush1.xpose.msra.mxu0 0.0
    %2328 = vmatprep.subr.mxu0 0.0
    %2329 = vmatpush1.xpose.msra.mxu0 0.0
    %2330 = vmatprep.subr.mxu0 0.0
    %2331 = vmatpush1.xpose.msra.mxu0 0.0
    %2332 = vmatprep.subr.mxu0 0.0
    %2333 = vmatpush1.xpose.msra.mxu0 0.0
    %2334 = vmatprep.subr.mxu0 0.0
    %2335 = vmatpush1.xpose.msra.mxu0 0.0
    %2336 = vmatprep.subr.mxu0 0.0
    %2337 = vmatpush1.xpose.msra.mxu0 0.0
    %2338 = vmatprep.subr.mxu0 0.0
    %2339 = vmatpush1.xpose.msra.mxu0 0.0
    %2340 = vmatprep.subr.mxu0 0.0
    %2341 = vmatpush1.xpose.msra.mxu0 0.0
    %2342 = vmatprep.subr.mxu0 0.0
    %2343 = vmatpush1.xpose.msra.mxu0 0.0
    %2344 = vmatprep.subr.mxu0 0.0
    %2345 = vmatpush1.xpose.msra.mxu0 0.0
    %2346 = vmatprep.subr.mxu0 0.0
    %2347 = vmatpush1.xpose.msra.mxu0 0.0
    %2348 = vmatprep.subr.mxu0 0.0
    %2349 = vmatpush1.xpose.msra.mxu0 0.0
    %2350 = vmatprep.subr.mxu0 0.0
    %2351 = vmatpush1.xpose.msra.mxu0 0.0
    %2352 = vmatprep.mubr.f32.mxu0 0.0
    %2353 = vmatmul.mubr.f32.gmra.mrb[0].mxu0 %v2265
    %v2354 = vpop.f32.mrb[0].mxu0
    %v2355 = vadd.f32 %v206, %v2354
    %v2356 = vpop.f32.mrb[0].mxu0
    %2357 = vmatprep.mubr.f32.mxu0 0.0
    %2358 = vmatmul.mubr.f32.gmra.mrb[0].mxu0 %v2268
    %v2359 = vpop.f32.mrb[0].mxu0
    %v2360 = vadd.f32 %v207, %v2359
    %v2361 = vpop.f32.mrb[0].mxu0
    %2362 = vmatprep.mubr.f32.mxu0 0.0
    %2363 = vmatmul.mubr.f32.gmra.mrb[0].mxu0 %v2271
    %v2364 = vpop.f32.mrb[0].mxu0
    %v2365 = vadd.f32 %v208, %v2364
    %v2366 = vpop.f32.mrb[0].mxu0
    %2367 = vmatprep.mubr.f32.mxu0 0.0
    %2368 = vmatmul.mubr.f32.gmra.mrb[0].mxu0 %v2274
    %v2369 = vpop.f32.mrb[0].mxu0
    %v2370 = vadd.f32 %v209, %v2369
    %v2371 = vpop.f32.mrb[0].mxu0
    %2372 = vdwg.mxu0
    %v2373 = vsel %vm101, %v2355, -inf
    %2374 = vmax.xlane.f32.xlu0 %v2373
    %v2375 = vpop.xlane.xlu0 %2374
    %v2376 = vsel %vm101, %v2360, -inf
    %2377 = vmax.xlane.f32.xlu0 %v2376
    %v2378 = vpop.xlane.xlu0 %2377
    %v2379 = vsel %vm101, %v2365, -inf
    %2380 = vmax.xlane.f32.xlu0 %v2379
    %v2381 = vpop.xlane.xlu0 %2380
    %v2382 = vsel %vm101, %v2370, -inf
    %2383 = vmax.xlane.f32.xlu0 %v2382
    %v2384 = vpop.xlane.xlu0 %2383
    %v2385 = vsub.f32 %v2355, %v2375
    %v2386 = vsub.f32 %v2360, %v2378
    %v2387 = vsub.f32 %v2365, %v2381
    %v2388 = vsub.f32 %v2370, %v2384
    %v2389 = vmul.f32 %v2385, 1.442695
    %v2390 = vpow.pop %v2389
    %v2391 = vmul.f32 %v2386, 1.442695
    %v2392 = vpow.pop %v2391
    %v2393 = vmul.f32 %v2387, 1.442695
    %v2394 = vpow.pop %v2393
    %v2395 = vmul.f32 %v2388, 1.442695
    %v2396 = vpow.pop %v2395
    %v2397 = vsel %vm101, %v2390, 0.0
    %2398 = vadd.xlane.f32.xlu0 %v2397
    %v2399 = vpop.xlane.xlu0 %2398
    %v2400 = vsel %vm101, %v2392, 0.0
    %2401 = vadd.xlane.f32.xlu0 %v2400
    %v2402 = vpop.xlane.xlu0 %2401
    %v2403 = vsel %vm101, %v2394, 0.0
    %2404 = vadd.xlane.f32.xlu0 %v2403
    %v2405 = vpop.xlane.xlu0 %2404
    %v2406 = vsel %vm101, %v2396, 0.0
    %2407 = vadd.xlane.f32.xlu0 %v2406
    %v2408 = vpop.xlane.xlu0 %2407
    %v2409 = vrcp.pop %v2399
    %v2410 = vmul.f32 %v2390, %v2409
    %v2411 = vrcp.pop %v2402
    %v2412 = vmul.f32 %v2392, %v2411
    %v2413 = vrcp.pop %v2405
    %v2414 = vmul.f32 %v2394, %v2413
    %v2415 = vrcp.pop %v2408
    %v2416 = vmul.f32 %v2396, %v2415
    %v2418 = vsel %vm101, %v2410, 0
    %v2421 = vsel %vm101, %v2412, 0
    %v2424 = vsel %vm101, %v2414, 0
    %v2427 = vsel %vm101, %v2416, 0
    %2429 = vmatprep.subr.mxu0 0.0
    %2430 = vmatpush1.msra.mxu0 %v2246
    %2431 = vmatprep.subr.mxu0 0.0
    %2432 = vmatpush1.msra.mxu0 %v2251
    %2433 = vmatprep.subr.mxu0 0.0
    %2434 = vmatpush1.msra.mxu0 %v2256
    %2435 = vmatprep.subr.mxu0 0.0
    %2436 = vmatpush1.msra.mxu0 %v2261
    %2437 = vmatprep.subr.mxu0 0.0
    %2438 = vmatpush1.msra.mxu0 0.0
    %2439 = vmatprep.subr.mxu0 0.0
    %2440 = vmatpush1.msra.mxu0 0.0
    %2441 = vmatprep.subr.mxu0 0.0
    %2442 = vmatpush1.msra.mxu0 0.0
    %2443 = vmatprep.subr.mxu0 0.0
    %2444 = vmatpush1.msra.mxu0 0.0
    %2445 = vmatprep.subr.mxu0 0.0
    %2446 = vmatpush1.msra.mxu0 0.0
    %2447 = vmatprep.subr.mxu0 0.0
    %2448 = vmatpush1.msra.mxu0 0.0
    %2449 = vmatprep.subr.mxu0 0.0
    %2450 = vmatpush1.msra.mxu0 0.0
    %2451 = vmatprep.subr.mxu0 0.0
    %2452 = vmatpush1.msra.mxu0 0.0
    %2453 = vmatprep.subr.mxu0 0.0
    %2454 = vmatpush1.msra.mxu0 0.0
    %2455 = vmatprep.subr.mxu0 0.0
    %2456 = vmatpush1.msra.mxu0 0.0
    %2457 = vmatprep.subr.mxu0 0.0
    %2458 = vmatpush1.msra.mxu0 0.0
    %2459 = vmatprep.subr.mxu0 0.0
    %2460 = vmatpush1.msra.mxu0 0.0
    %2461 = vmatprep.subr.mxu0 0.0
    %2462 = vmatpush1.msra.mxu0 0.0
    %2463 = vmatprep.subr.mxu0 0.0
    %2464 = vmatpush1.msra.mxu0 0.0
    %2465 = vmatprep.subr.mxu0 0.0
    %2466 = vmatpush1.msra.mxu0 0.0
    %2467 = vmatprep.subr.mxu0 0.0
    %2468 = vmatpush1.msra.mxu0 0.0
    %2469 = vmatprep.subr.mxu0 0.0
    %2470 = vmatpush1.msra.mxu0 0.0
    %2471 = vmatprep.subr.mxu0 0.0
    %2472 = vmatpush1.msra.mxu0 0.0
    %2473 = vmatprep.subr.mxu0 0.0
    %2474 = vmatpush1.msra.mxu0 0.0
    %2475 = vmatprep.subr.mxu0 0.0
    %2476 = vmatpush1.msra.mxu0 0.0
    %2477 = vmatprep.subr.mxu0 0.0
    %2478 = vmatpush1.msra.mxu0 0.0
    %2479 = vmatprep.subr.mxu0 0.0
    %2480 = vmatpush1.msra.mxu0 0.0
    %2481 = vmatprep.subr.mxu0 0.0
    %2482 = vmatpush1.msra.mxu0 0.0
    %2483 = vmatprep.subr.mxu0 0.0
    %2484 = vmatpush1.msra.mxu0 0.0
    %2485 = vmatprep.subr.mxu0 0.0
    %2486 = vmatpush1.msra.mxu0 0.0
    %2487 = vmatprep.subr.mxu0 0.0
    %2488 = vmatpush1.msra.mxu0 0.0
    %2489 = vmatprep.subr.mxu0 0.0
    %2490 = vmatpush1.msra.mxu0 0.0
    %2491 = vmatprep.subr.mxu0 0.0
    %2492 = vmatpush1.msra.mxu0 0.0
    %2493 = vmatprep.mubr.f32.mxu0 0.0
    %2494 = vmatmul.mubr.f32.gmra.mrb[0].mxu0 %v2418
    %v2495 = vpop.f32.mrb[0].mxu0
    %v2496 = vadd.f32 0.0, %v2495
    %v2497 = vpop.f32.mrb[0].mxu0
    %2498 = vmatprep.mubr.f32.mxu0 0.0
    %2499 = vmatmul.mubr.f32.gmra.mrb[0].mxu0 %v2421
    %v2500 = vpop.f32.mrb[0].mxu0
    %v2501 = vadd.f32 0.0, %v2500
    %v2502 = vpop.f32.mrb[0].mxu0
    %2503 = vmatprep.mubr.f32.mxu0 0.0
    %2504 = vmatmul.mubr.f32.gmra.mrb[0].mxu0 %v2424
    %v2505 = vpop.f32.mrb[0].mxu0
    %v2506 = vadd.f32 0.0, %v2505
    %v2507 = vpop.f32.mrb[0].mxu0
    %2508 = vmatprep.mubr.f32.mxu0 0.0
    %2509 = vmatmul.mubr.f32.gmra.mrb[0].mxu0 %v2427
    %v2510 = vpop.f32.mrb[0].mxu0
    %v2511 = vadd.f32 0.0, %v2510
    %v2512 = vpop.f32.mrb[0].mxu0
    %2513 = vdwg.mxu0
    %s2514 = scalar_lea.vmem %s13, 32
    %v2515 = vld [vmem:[%s2514] sm:$0xff]
    %v2516 = vld [vmem:[%s2514 + $0x8] sm:$0xff]
    %v2518 = vsel %vm511, %v2496, 0
    %v2521 = vsel %vm511, %v2501, 0
    %v2524 = vsel %vm511, %v2506, 0
    %v2527 = vsel %vm511, %v2511, 0
    %2529 = vmatprep.subr.mxu0 0.0
    %2530 = vmatpush1.msra.mxu0 %v2515
    %2531 = vmatprep.subr.mxu0 0.0
    %2532 = vmatpush1.msra.mxu0 %v2516
    %2533 = vmatprep.subr.mxu0 0.0
    %2534 = vmatpush1.msra.mxu0 0.0
    %2535 = vmatprep.subr.mxu0 0.0
    %2536 = vmatpush1.msra.mxu0 0.0
    %2537 = vmatprep.subr.mxu0 0.0
    %2538 = vmatpush1.msra.mxu0 0.0
    %2539 = vmatprep.subr.mxu0 0.0
    %2540 = vmatpush1.msra.mxu0 0.0
    %2541 = vmatprep.subr.mxu0 0.0
    %2542 = vmatpush1.msra.mxu0 0.0
    %2543 = vmatprep.subr.mxu0 0.0
    %2544 = vmatpush1.msra.mxu0 0.0
    %2545 = vmatprep.subr.mxu0 0.0
    %2546 = vmatpush1.msra.mxu0 0.0
    %2547 = vmatprep.subr.mxu0 0.0
    %2548 = vmatpush1.msra.mxu0 0.0
    %2549 = vmatprep.subr.mxu0 0.0
    %2550 = vmatpush1.msra.mxu0 0.0
    %2551 = vmatprep.subr.mxu0 0.0
    %2552 = vmatpush1.msra.mxu0 0.0
    %2553 = vmatprep.subr.mxu0 0.0
    %2554 = vmatpush1.msra.mxu0 0.0
    %2555 = vmatprep.subr.mxu0 0.0
    %2556 = vmatpush1.msra.mxu0 0.0
    %2557 = vmatprep.subr.mxu0 0.0
    %2558 = vmatpush1.msra.mxu0 0.0
    %2559 = vmatprep.subr.mxu0 0.0
    %2560 = vmatpush1.msra.mxu0 0.0
    %2561 = vmatprep.subr.mxu0 0.0
    %2562 = vmatpush1.msra.mxu0 0.0
    %2563 = vmatprep.subr.mxu0 0.0
    %2564 = vmatpush1.msra.mxu0 0.0
    %2565 = vmatprep.subr.mxu0 0.0
    %2566 = vmatpush1.msra.mxu0 0.0
    %2567 = vmatprep.subr.mxu0 0.0
    %2568 = vmatpush1.msra.mxu0 0.0
    %2569 = vmatprep.subr.mxu0 0.0
    %2570 = vmatpush1.msra.mxu0 0.0
    %2571 = vmatprep.subr.mxu0 0.0
    %2572 = vmatpush1.msra.mxu0 0.0
    %2573 = vmatprep.subr.mxu0 0.0
    %2574 = vmatpush1.msra.mxu0 0.0
    %2575 = vmatprep.subr.mxu0 0.0
    %2576 = vmatpush1.msra.mxu0 0.0
    %2577 = vmatprep.subr.mxu0 0.0
    %2578 = vmatpush1.msra.mxu0 0.0
    %2579 = vmatprep.subr.mxu0 0.0
    %2580 = vmatpush1.msra.mxu0 0.0
    %2581 = vmatprep.subr.mxu0 0.0
    %2582 = vmatpush1.msra.mxu0 0.0
    %2583 = vmatprep.subr.mxu0 0.0
    %2584 = vmatpush1.msra.mxu0 0.0
    %2585 = vmatprep.subr.mxu0 0.0
    %2586 = vmatpush1.msra.mxu0 0.0
    %2587 = vmatprep.subr.mxu0 0.0
    %2588 = vmatpush1.msra.mxu0 0.0
    %2589 = vmatprep.subr.mxu0 0.0
    %2590 = vmatpush1.msra.mxu0 0.0
    %2591 = vmatprep.subr.mxu0 0.0
    %2592 = vmatpush1.msra.mxu0 0.0
    %2593 = vmatprep.mubr.f32.mxu0 0.0
    %2594 = vmatmul.mubr.f32.gmra.mrb[0].mxu0 %v2518
    %v2595 = vpop.f32.mrb[0].mxu0
    %v2596 = vadd.f32 0.0, %v2595
    %v2597 = vpop.f32.mrb[0].mxu0
    %2598 = vmatprep.mubr.f32.mxu0 0.0
    %2599 = vmatmul.mubr.f32.gmra.mrb[0].mxu0 %v2521
    %v2600 = vpop.f32.mrb[0].mxu0
    %v2601 = vadd.f32 0.0, %v2600
    %v2602 = vpop.f32.mrb[0].mxu0
    %2603 = vmatprep.mubr.f32.mxu0 0.0
    %2604 = vmatmul.mubr.f32.gmra.mrb[0].mxu0 %v2524
    %v2605 = vpop.f32.mrb[0].mxu0
    %v2606 = vadd.f32 0.0, %v2605
    %v2607 = vpop.f32.mrb[0].mxu0
    %2608 = vmatprep.mubr.f32.mxu0 0.0
    %2609 = vmatmul.mubr.f32.gmra.mrb[0].mxu0 %v2527
    %v2610 = vpop.f32.mrb[0].mxu0
    %v2611 = vadd.f32 0.0, %v2610
    %v2612 = vpop.f32.mrb[0].mxu0
    %2613 = vdwg.mxu0
    %v2615 = vlaneseq
    %v2616 = vshrl.u32 %v2615, 7
    %v2617 = vsub.s32 0, %v2616
    %v2618 = vrot.slane %v1957, %v2617
    %v2620 = vadd.f32 %v2618, %v2596
    %v2621 = vadd.f32 %v2618, %v2601
    %v2622 = vadd.f32 %v2618, %v2606
    %v2623 = vadd.f32 %v2618, %v2611
    %s2624 = scalar_lea.vmem %s7, 96
    %v2625 = vld [vmem:[%s2624] sm:$0xff]
    %v2626 = vld [vmem:[%s2624 + $0x8] sm:$0xff]
    %v2627 = vld [vmem:[%s2624 + $0x10] sm:$0xff]
    %v2628 = vld [vmem:[%s2624 + $0x18] sm:$0xff]
    %s2629 = scalar_lea.vmem %s8, 3
    %v2630 = vld [vmem:[%s2629] sm:$0x1]
    %v2632 = vlaneseq
    %v2633 = vshrl.u32 %v2632, 7
    %v2634 = vsub.s32 0, %v2633
    %v2635 = vrot.slane %v2630, %v2634
    %2637 = vmatprep.subr.mxu0 0.0
    %2638 = vmatpush1.msra.mxu0 %v2625
    %2639 = vmatprep.subr.mxu0 0.0
    %2640 = vmatpush1.msra.mxu0 %v2626
    %2641 = vmatprep.subr.mxu0 0.0
    %2642 = vmatpush1.msra.mxu0 %v2627
    %2643 = vmatprep.subr.mxu0 0.0
    %2644 = vmatpush1.msra.mxu0 %v2628
    %2645 = vmatprep.subr.mxu0 0.0
    %2646 = vmatpush1.msra.mxu0 0.0
    %2647 = vmatprep.subr.mxu0 0.0
    %2648 = vmatpush1.msra.mxu0 0.0
    %2649 = vmatprep.subr.mxu0 0.0
    %2650 = vmatpush1.msra.mxu0 0.0
    %2651 = vmatprep.subr.mxu0 0.0
    %2652 = vmatpush1.msra.mxu0 0.0
    %2653 = vmatprep.subr.mxu0 0.0
    %2654 = vmatpush1.msra.mxu0 0.0
    %2655 = vmatprep.subr.mxu0 0.0
    %2656 = vmatpush1.msra.mxu0 0.0
    %2657 = vmatprep.subr.mxu0 0.0
    %2658 = vmatpush1.msra.mxu0 0.0
    %2659 = vmatprep.subr.mxu0 0.0
    %2660 = vmatpush1.msra.mxu0 0.0
    %2661 = vmatprep.subr.mxu0 0.0
    %2662 = vmatpush1.msra.mxu0 0.0
    %2663 = vmatprep.subr.mxu0 0.0
    %2664 = vmatpush1.msra.mxu0 0.0
    %2665 = vmatprep.subr.mxu0 0.0
    %2666 = vmatpush1.msra.mxu0 0.0
    %2667 = vmatprep.subr.mxu0 0.0
    %2668 = vmatpush1.msra.mxu0 0.0
    %2669 = vmatprep.subr.mxu0 0.0
    %2670 = vmatpush1.msra.mxu0 0.0
    %2671 = vmatprep.subr.mxu0 0.0
    %2672 = vmatpush1.msra.mxu0 0.0
    %2673 = vmatprep.subr.mxu0 0.0
    %2674 = vmatpush1.msra.mxu0 0.0
    %2675 = vmatprep.subr.mxu0 0.0
    %2676 = vmatpush1.msra.mxu0 0.0
    %2677 = vmatprep.subr.mxu0 0.0
    %2678 = vmatpush1.msra.mxu0 0.0
    %2679 = vmatprep.subr.mxu0 0.0
    %2680 = vmatpush1.msra.mxu0 0.0
    %2681 = vmatprep.subr.mxu0 0.0
    %2682 = vmatpush1.msra.mxu0 0.0
    %2683 = vmatprep.subr.mxu0 0.0
    %2684 = vmatpush1.msra.mxu0 0.0
    %2685 = vmatprep.subr.mxu0 0.0
    %2686 = vmatpush1.msra.mxu0 0.0
    %2687 = vmatprep.subr.mxu0 0.0
    %2688 = vmatpush1.msra.mxu0 0.0
    %2689 = vmatprep.subr.mxu0 0.0
    %2690 = vmatpush1.msra.mxu0 0.0
    %2691 = vmatprep.subr.mxu0 0.0
    %2692 = vmatpush1.msra.mxu0 0.0
    %2693 = vmatprep.subr.mxu0 0.0
    %2694 = vmatpush1.msra.mxu0 0.0
    %2695 = vmatprep.subr.mxu0 0.0
    %2696 = vmatpush1.msra.mxu0 0.0
    %2697 = vmatprep.subr.mxu0 0.0
    %2698 = vmatpush1.msra.mxu0 0.0
    %2699 = vmatprep.subr.mxu0 0.0
    %2700 = vmatpush1.msra.mxu0 0.0
    %2701 = vmatprep.mubr.f32.mxu0 0.0
    %2702 = vmatmul.mubr.f32.gmra.mrb[0].mxu0 %v1972
    %v2703 = vpop.f32.mrb[0].mxu0
    %v2704 = vadd.f32 %v2635, %v2703
    %v2705 = vpop.f32.mrb[0].mxu0
    %2706 = vmatprep.mubr.f32.mxu0 0.0
    %2707 = vmatmul.mubr.f32.gmra.mrb[0].mxu0 %v1975
    %v2708 = vpop.f32.mrb[0].mxu0
    %v2709 = vadd.f32 %v2635, %v2708
    %v2710 = vpop.f32.mrb[0].mxu0
    %2711 = vmatprep.mubr.f32.mxu0 0.0
    %2712 = vmatmul.mubr.f32.gmra.mrb[0].mxu0 %v1978
    %v2713 = vpop.f32.mrb[0].mxu0
    %v2714 = vadd.f32 %v2635, %v2713
    %v2715 = vpop.f32.mrb[0].mxu0
    %2716 = vmatprep.mubr.f32.mxu0 0.0
    %2717 = vmatmul.mubr.f32.gmra.mrb[0].mxu0 %v1981
    %v2718 = vpop.f32.mrb[0].mxu0
    %v2719 = vadd.f32 %v2635, %v2718
    %v2720 = vpop.f32.mrb[0].mxu0
    %2721 = vdwg.mxu0
    %s2722 = scalar_lea.vmem %s9, 96
    %v2723 = vld [vmem:[%s2722] sm:$0xff]
    %v2724 = vld [vmem:[%s2722 + $0x8] sm:$0xff]
    %v2725 = vld [vmem:[%s2722 + $0x10] sm:$0xff]
    %v2726 = vld [vmem:[%s2722 + $0x18] sm:$0xff]
    %s2727 = scalar_lea.vmem %s10, 3
    %v2728 = vld [vmem:[%s2727] sm:$0x1]
    %v2730 = vlaneseq
    %v2731 = vshrl.u32 %v2730, 7
    %v2732 = vsub.s32 0, %v2731
    %v2733 = vrot.slane %v2728, %v2732
    %2735 = vmatprep.subr.mxu0 0.0
    %2736 = vmatpush1.msra.mxu0 %v2723
    %2737 = vmatprep.subr.mxu0 0.0
    %2738 = vmatpush1.msra.mxu0 %v2724
    %2739 = vmatprep.subr.mxu0 0.0
    %2740 = vmatpush1.msra.mxu0 %v2725
    %2741 = vmatprep.subr.mxu0 0.0
    %2742 = vmatpush1.msra.mxu0 %v2726
    %2743 = vmatprep.subr.mxu0 0.0
    %2744 = vmatpush1.msra.mxu0 0.0
    %2745 = vmatprep.subr.mxu0 0.0
    %2746 = vmatpush1.msra.mxu0 0.0
    %2747 = vmatprep.subr.mxu0 0.0
    %2748 = vmatpush1.msra.mxu0 0.0
    %2749 = vmatprep.subr.mxu0 0.0
    %2750 = vmatpush1.msra.mxu0 0.0
    %2751 = vmatprep.subr.mxu0 0.0
    %2752 = vmatpush1.msra.mxu0 0.0
    %2753 = vmatprep.subr.mxu0 0.0
    %2754 = vmatpush1.msra.mxu0 0.0
    %2755 = vmatprep.subr.mxu0 0.0
    %2756 = vmatpush1.msra.mxu0 0.0
    %2757 = vmatprep.subr.mxu0 0.0
    %2758 = vmatpush1.msra.mxu0 0.0
    %2759 = vmatprep.subr.mxu0 0.0
    %2760 = vmatpush1.msra.mxu0 0.0
    %2761 = vmatprep.subr.mxu0 0.0
    %2762 = vmatpush1.msra.mxu0 0.0
    %2763 = vmatprep.subr.mxu0 0.0
    %2764 = vmatpush1.msra.mxu0 0.0
    %2765 = vmatprep.subr.mxu0 0.0
    %2766 = vmatpush1.msra.mxu0 0.0
    %2767 = vmatprep.subr.mxu0 0.0
    %2768 = vmatpush1.msra.mxu0 0.0
    %2769 = vmatprep.subr.mxu0 0.0
    %2770 = vmatpush1.msra.mxu0 0.0
    %2771 = vmatprep.subr.mxu0 0.0
    %2772 = vmatpush1.msra.mxu0 0.0
    %2773 = vmatprep.subr.mxu0 0.0
    %2774 = vmatpush1.msra.mxu0 0.0
    %2775 = vmatprep.subr.mxu0 0.0
    %2776 = vmatpush1.msra.mxu0 0.0
    %2777 = vmatprep.subr.mxu0 0.0
    %2778 = vmatpush1.msra.mxu0 0.0
    %2779 = vmatprep.subr.mxu0 0.0
    %2780 = vmatpush1.msra.mxu0 0.0
    %2781 = vmatprep.subr.mxu0 0.0
    %2782 = vmatpush1.msra.mxu0 0.0
    %2783 = vmatprep.subr.mxu0 0.0
    %2784 = vmatpush1.msra.mxu0 0.0
    %2785 = vmatprep.subr.mxu0 0.0
    %2786 = vmatpush1.msra.mxu0 0.0
    %2787 = vmatprep.subr.mxu0 0.0
    %2788 = vmatpush1.msra.mxu0 0.0
    %2789 = vmatprep.subr.mxu0 0.0
    %2790 = vmatpush1.msra.mxu0 0.0
    %2791 = vmatprep.subr.mxu0 0.0
    %2792 = vmatpush1.msra.mxu0 0.0
    %2793 = vmatprep.subr.mxu0 0.0
    %2794 = vmatpush1.msra.mxu0 0.0
    %2795 = vmatprep.subr.mxu0 0.0
    %2796 = vmatpush1.msra.mxu0 0.0
    %2797 = vmatprep.subr.mxu0 0.0
    %2798 = vmatpush1.msra.mxu0 0.0
    %2799 = vmatprep.mubr.f32.mxu0 0.0
    %2800 = vmatmul.mubr.f32.gmra.mrb[0].mxu0 %v1972
    %v2801 = vpop.f32.mrb[0].mxu0
    %v2802 = vadd.f32 %v2733, %v2801
    %v2803 = vpop.f32.mrb[0].mxu0
    %2804 = vmatprep.mubr.f32.mxu0 0.0
    %2805 = vmatmul.mubr.f32.gmra.mrb[0].mxu0 %v1975
    %v2806 = vpop.f32.mrb[0].mxu0
    %v2807 = vadd.f32 %v2733, %v2806
    %v2808 = vpop.f32.mrb[0].mxu0
    %2809 = vmatprep.mubr.f32.mxu0 0.0
    %2810 = vmatmul.mubr.f32.gmra.mrb[0].mxu0 %v1978
    %v2811 = vpop.f32.mrb[0].mxu0
    %v2812 = vadd.f32 %v2733, %v2811
    %v2813 = vpop.f32.mrb[0].mxu0
    %2814 = vmatprep.mubr.f32.mxu0 0.0
    %2815 = vmatmul.mubr.f32.gmra.mrb[0].mxu0 %v1981
    %v2816 = vpop.f32.mrb[0].mxu0
    %v2817 = vadd.f32 %v2733, %v2816
    %v2818 = vpop.f32.mrb[0].mxu0
    %2819 = vdwg.mxu0
    %s2820 = scalar_lea.vmem %s11, 96
    %v2821 = vld [vmem:[%s2820] sm:$0xff]
    %v2822 = vld [vmem:[%s2820 + $0x8] sm:$0xff]
    %v2823 = vld [vmem:[%s2820 + $0x10] sm:$0xff]
    %v2824 = vld [vmem:[%s2820 + $0x18] sm:$0xff]
    %s2825 = scalar_lea.vmem %s12, 3
    %v2826 = vld [vmem:[%s2825] sm:$0x1]
    %v2828 = vlaneseq
    %v2829 = vshrl.u32 %v2828, 7
    %v2830 = vsub.s32 0, %v2829
    %v2831 = vrot.slane %v2826, %v2830
    %2833 = vmatprep.subr.mxu0 0.0
    %2834 = vmatpush1.msra.mxu0 %v2821
    %2835 = vmatprep.subr.mxu0 0.0
    %2836 = vmatpush1.msra.mxu0 %v2822
    %2837 = vmatprep.subr.mxu0 0.0
    %2838 = vmatpush1.msra.mxu0 %v2823
    %2839 = vmatprep.subr.mxu0 0.0
    %2840 = vmatpush1.msra.mxu0 %v2824
    %2841 = vmatprep.subr.mxu0 0.0
    %2842 = vmatpush1.msra.mxu0 0.0
    %2843 = vmatprep.subr.mxu0 0.0
    %2844 = vmatpush1.msra.mxu0 0.0
    %2845 = vmatprep.subr.mxu0 0.0
    %2846 = vmatpush1.msra.mxu0 0.0
    %2847 = vmatprep.subr.mxu0 0.0
    %2848 = vmatpush1.msra.mxu0 0.0
    %2849 = vmatprep.subr.mxu0 0.0
    %2850 = vmatpush1.msra.mxu0 0.0
    %2851 = vmatprep.subr.mxu0 0.0
    %2852 = vmatpush1.msra.mxu0 0.0
    %2853 = vmatprep.subr.mxu0 0.0
    %2854 = vmatpush1.msra.mxu0 0.0
    %2855 = vmatprep.subr.mxu0 0.0
    %2856 = vmatpush1.msra.mxu0 0.0
    %2857 = vmatprep.subr.mxu0 0.0
    %2858 = vmatpush1.msra.mxu0 0.0
    %2859 = vmatprep.subr.mxu0 0.0
    %2860 = vmatpush1.msra.mxu0 0.0
    %2861 = vmatprep.subr.mxu0 0.0
    %2862 = vmatpush1.msra.mxu0 0.0
    %2863 = vmatprep.subr.mxu0 0.0
    %2864 = vmatpush1.msra.mxu0 0.0
    %2865 = vmatprep.subr.mxu0 0.0
    %2866 = vmatpush1.msra.mxu0 0.0
    %2867 = vmatprep.subr.mxu0 0.0
    %2868 = vmatpush1.msra.mxu0 0.0
    %2869 = vmatprep.subr.mxu0 0.0
    %2870 = vmatpush1.msra.mxu0 0.0
    %2871 = vmatprep.subr.mxu0 0.0
    %2872 = vmatpush1.msra.mxu0 0.0
    %2873 = vmatprep.subr.mxu0 0.0
    %2874 = vmatpush1.msra.mxu0 0.0
    %2875 = vmatprep.subr.mxu0 0.0
    %2876 = vmatpush1.msra.mxu0 0.0
    %2877 = vmatprep.subr.mxu0 0.0
    %2878 = vmatpush1.msra.mxu0 0.0
    %2879 = vmatprep.subr.mxu0 0.0
    %2880 = vmatpush1.msra.mxu0 0.0
    %2881 = vmatprep.subr.mxu0 0.0
    %2882 = vmatpush1.msra.mxu0 0.0
    %2883 = vmatprep.subr.mxu0 0.0
    %2884 = vmatpush1.msra.mxu0 0.0
    %2885 = vmatprep.subr.mxu0 0.0
    %2886 = vmatpush1.msra.mxu0 0.0
    %2887 = vmatprep.subr.mxu0 0.0
    %2888 = vmatpush1.msra.mxu0 0.0
    %2889 = vmatprep.subr.mxu0 0.0
    %2890 = vmatpush1.msra.mxu0 0.0
    %2891 = vmatprep.subr.mxu0 0.0
    %2892 = vmatpush1.msra.mxu0 0.0
    %2893 = vmatprep.subr.mxu0 0.0
    %2894 = vmatpush1.msra.mxu0 0.0
    %2895 = vmatprep.subr.mxu0 0.0
    %2896 = vmatpush1.msra.mxu0 0.0
    %2897 = vmatprep.mubr.f32.mxu0 0.0
    %2898 = vmatmul.mubr.f32.gmra.mrb[0].mxu0 %v1972
    %v2899 = vpop.f32.mrb[0].mxu0
    %v2900 = vadd.f32 %v2831, %v2899
    %v2901 = vpop.f32.mrb[0].mxu0
    %2902 = vmatprep.mubr.f32.mxu0 0.0
    %2903 = vmatmul.mubr.f32.gmra.mrb[0].mxu0 %v1975
    %v2904 = vpop.f32.mrb[0].mxu0
    %v2905 = vadd.f32 %v2831, %v2904
    %v2906 = vpop.f32.mrb[0].mxu0
    %2907 = vmatprep.mubr.f32.mxu0 0.0
    %2908 = vmatmul.mubr.f32.gmra.mrb[0].mxu0 %v1978
    %v2909 = vpop.f32.mrb[0].mxu0
    %v2910 = vadd.f32 %v2831, %v2909
    %v2911 = vpop.f32.mrb[0].mxu0
    %2912 = vmatprep.mubr.f32.mxu0 0.0
    %2913 = vmatmul.mubr.f32.gmra.mrb[0].mxu0 %v1981
    %v2914 = vpop.f32.mrb[0].mxu0
    %v2915 = vadd.f32 %v2831, %v2914
    %v2916 = vpop.f32.mrb[0].mxu0
    %2917 = vdwg.mxu0
    %v2919 = vsel %vm511, %v2704, 0
    %v2922 = vsel %vm511, %v2709, 0
    %v2925 = vsel %vm511, %v2714, 0
    %v2928 = vsel %vm511, %v2719, 0
    %v2931 = vsel %vm511, %v2802, 0
    %v2934 = vsel %vm511, %v2807, 0
    %v2937 = vsel %vm511, %v2812, 0
    %v2940 = vsel %vm511, %v2817, 0
    %2942 = vmatprep.subr.mxu0 0.0
    %2943 = vmatpush1.xpose.msra.mxu0 %v2931
    %2944 = vmatprep.subr.mxu0 0.0
    %2945 = vmatpush1.xpose.msra.mxu0 %v2934
    %2946 = vmatprep.subr.mxu0 0.0
    %2947 = vmatpush1.xpose.msra.mxu0 %v2937
    %2948 = vmatprep.subr.mxu0 0.0
    %2949 = vmatpush1.xpose.msra.mxu0 %v2940
    %2950 = vmatprep.subr.mxu0 0.0
    %2951 = vmatpush1.xpose.msra.mxu0 0.0
    %2952 = vmatprep.subr.mxu0 0.0
    %2953 = vmatpush1.xpose.msra.mxu0 0.0
    %2954 = vmatprep.subr.mxu0 0.0
    %2955 = vmatpush1.xpose.msra.mxu0 0.0
    %2956 = vmatprep.subr.mxu0 0.0
    %2957 = vmatpush1.xpose.msra.mxu0 0.0
    %2958 = vmatprep.subr.mxu0 0.0
    %2959 = vmatpush1.xpose.msra.mxu0 0.0
    %2960 = vmatprep.subr.mxu0 0.0
    %2961 = vmatpush1.xpose.msra.mxu0 0.0
    %2962 = vmatprep.subr.mxu0 0.0
    %2963 = vmatpush1.xpose.msra.mxu0 0.0
    %2964 = vmatprep.subr.mxu0 0.0
    %2965 = vmatpush1.xpose.msra.mxu0 0.0
    %2966 = vmatprep.subr.mxu0 0.0
    %2967 = vmatpush1.xpose.msra.mxu0 0.0
    %2968 = vmatprep.subr.mxu0 0.0
    %2969 = vmatpush1.xpose.msra.mxu0 0.0
    %2970 = vmatprep.subr.mxu0 0.0
    %2971 = vmatpush1.xpose.msra.mxu0 0.0
    %2972 = vmatprep.subr.mxu0 0.0
    %2973 = vmatpush1.xpose.msra.mxu0 0.0
    %2974 = vmatprep.subr.mxu0 0.0
    %2975 = vmatpush1.xpose.msra.mxu0 0.0
    %2976 = vmatprep.subr.mxu0 0.0
    %2977 = vmatpush1.xpose.msra.mxu0 0.0
    %2978 = vmatprep.subr.mxu0 0.0
    %2979 = vmatpush1.xpose.msra.mxu0 0.0
    %2980 = vmatprep.subr.mxu0 0.0
    %2981 = vmatpush1.xpose.msra.mxu0 0.0
    %2982 = vmatprep.subr.mxu0 0.0
    %2983 = vmatpush1.xpose.msra.mxu0 0.0
    %2984 = vmatprep.subr.mxu0 0.0
    %2985 = vmatpush1.xpose.msra.mxu0 0.0
    %2986 = vmatprep.subr.mxu0 0.0
    %2987 = vmatpush1.xpose.msra.mxu0 0.0
    %2988 = vmatprep.subr.mxu0 0.0
    %2989 = vmatpush1.xpose.msra.mxu0 0.0
    %2990 = vmatprep.subr.mxu0 0.0
    %2991 = vmatpush1.xpose.msra.mxu0 0.0
    %2992 = vmatprep.subr.mxu0 0.0
    %2993 = vmatpush1.xpose.msra.mxu0 0.0
    %2994 = vmatprep.subr.mxu0 0.0
    %2995 = vmatpush1.xpose.msra.mxu0 0.0
    %2996 = vmatprep.subr.mxu0 0.0
    %2997 = vmatpush1.xpose.msra.mxu0 0.0
    %2998 = vmatprep.subr.mxu0 0.0
    %2999 = vmatpush1.xpose.msra.mxu0 0.0
    %3000 = vmatprep.subr.mxu0 0.0
    %3001 = vmatpush1.xpose.msra.mxu0 0.0
    %3002 = vmatprep.subr.mxu0 0.0
    %3003 = vmatpush1.xpose.msra.mxu0 0.0
    %3004 = vmatprep.subr.mxu0 0.0
    %3005 = vmatpush1.xpose.msra.mxu0 0.0
    %3006 = vmatprep.mubr.f32.mxu0 0.0
    %3007 = vmatmul.mubr.f32.gmra.mrb[0].mxu0 %v2919
    %v3008 = vpop.f32.mrb[0].mxu0
    %v3009 = vadd.f32 %v206, %v3008
    %v3010 = vpop.f32.mrb[0].mxu0
    %3011 = vmatprep.mubr.f32.mxu0 0.0
    %3012 = vmatmul.mubr.f32.gmra.mrb[0].mxu0 %v2922
    %v3013 = vpop.f32.mrb[0].mxu0
    %v3014 = vadd.f32 %v207, %v3013
    %v3015 = vpop.f32.mrb[0].mxu0
    %3016 = vmatprep.mubr.f32.mxu0 0.0
    %3017 = vmatmul.mubr.f32.gmra.mrb[0].mxu0 %v2925
    %v3018 = vpop.f32.mrb[0].mxu0
    %v3019 = vadd.f32 %v208, %v3018
    %v3020 = vpop.f32.mrb[0].mxu0
    %3021 = vmatprep.mubr.f32.mxu0 0.0
    %3022 = vmatmul.mubr.f32.gmra.mrb[0].mxu0 %v2928
    %v3023 = vpop.f32.mrb[0].mxu0
    %v3024 = vadd.f32 %v209, %v3023
    %v3025 = vpop.f32.mrb[0].mxu0
    %3026 = vdwg.mxu0
    %v3027 = vsel %vm101, %v3009, -inf
    %3028 = vmax.xlane.f32.xlu0 %v3027
    %v3029 = vpop.xlane.xlu0 %3028
    %v3030 = vsel %vm101, %v3014, -inf
    %3031 = vmax.xlane.f32.xlu0 %v3030
    %v3032 = vpop.xlane.xlu0 %3031
    %v3033 = vsel %vm101, %v3019, -inf
    %3034 = vmax.xlane.f32.xlu0 %v3033
    %v3035 = vpop.xlane.xlu0 %3034
    %v3036 = vsel %vm101, %v3024, -inf
    %3037 = vmax.xlane.f32.xlu0 %v3036
    %v3038 = vpop.xlane.xlu0 %3037
    %v3039 = vsub.f32 %v3009, %v3029
    %v3040 = vsub.f32 %v3014, %v3032
    %v3041 = vsub.f32 %v3019, %v3035
    %v3042 = vsub.f32 %v3024, %v3038
    %v3043 = vmul.f32 %v3039, 1.442695
    %v3044 = vpow.pop %v3043
    %v3045 = vmul.f32 %v3040, 1.442695
    %v3046 = vpow.pop %v3045
    %v3047 = vmul.f32 %v3041, 1.442695
    %v3048 = vpow.pop %v3047
    %v3049 = vmul.f32 %v3042, 1.442695
    %v3050 = vpow.pop %v3049
    %v3051 = vsel %vm101, %v3044, 0.0
    %3052 = vadd.xlane.f32.xlu0 %v3051
    %v3053 = vpop.xlane.xlu0 %3052
    %v3054 = vsel %vm101, %v3046, 0.0
    %3055 = vadd.xlane.f32.xlu0 %v3054
    %v3056 = vpop.xlane.xlu0 %3055
    %v3057 = vsel %vm101, %v3048, 0.0
    %3058 = vadd.xlane.f32.xlu0 %v3057
    %v3059 = vpop.xlane.xlu0 %3058
    %v3060 = vsel %vm101, %v3050, 0.0
    %3061 = vadd.xlane.f32.xlu0 %v3060
    %v3062 = vpop.xlane.xlu0 %3061
    %v3063 = vrcp.pop %v3053
    %v3064 = vmul.f32 %v3044, %v3063
    %v3065 = vrcp.pop %v3056
    %v3066 = vmul.f32 %v3046, %v3065
    %v3067 = vrcp.pop %v3059
    %v3068 = vmul.f32 %v3048, %v3067
    %v3069 = vrcp.pop %v3062
    %v3070 = vmul.f32 %v3050, %v3069
    %v3072 = vsel %vm101, %v3064, 0
    %v3075 = vsel %vm101, %v3066, 0
    %v3078 = vsel %vm101, %v3068, 0
    %v3081 = vsel %vm101, %v3070, 0
    %3083 = vmatprep.subr.mxu0 0.0
    %3084 = vmatpush1.msra.mxu0 %v2900
    %3085 = vmatprep.subr.mxu0 0.0
    %3086 = vmatpush1.msra.mxu0 %v2905
    %3087 = vmatprep.subr.mxu0 0.0
    %3088 = vmatpush1.msra.mxu0 %v2910
    %3089 = vmatprep.subr.mxu0 0.0
    %3090 = vmatpush1.msra.mxu0 %v2915
    %3091 = vmatprep.subr.mxu0 0.0
    %3092 = vmatpush1.msra.mxu0 0.0
    %3093 = vmatprep.subr.mxu0 0.0
    %3094 = vmatpush1.msra.mxu0 0.0
    %3095 = vmatprep.subr.mxu0 0.0
    %3096 = vmatpush1.msra.mxu0 0.0
    %3097 = vmatprep.subr.mxu0 0.0
    %3098 = vmatpush1.msra.mxu0 0.0
    %3099 = vmatprep.subr.mxu0 0.0
    %3100 = vmatpush1.msra.mxu0 0.0
    %3101 = vmatprep.subr.mxu0 0.0
    %3102 = vmatpush1.msra.mxu0 0.0
    %3103 = vmatprep.subr.mxu0 0.0
    %3104 = vmatpush1.msra.mxu0 0.0
    %3105 = vmatprep.subr.mxu0 0.0
    %3106 = vmatpush1.msra.mxu0 0.0
    %3107 = vmatprep.subr.mxu0 0.0
    %3108 = vmatpush1.msra.mxu0 0.0
    %3109 = vmatprep.subr.mxu0 0.0
    %3110 = vmatpush1.msra.mxu0 0.0
    %3111 = vmatprep.subr.mxu0 0.0
    %3112 = vmatpush1.msra.mxu0 0.0
    %3113 = vmatprep.subr.mxu0 0.0
    %3114 = vmatpush1.msra.mxu0 0.0
    %3115 = vmatprep.subr.mxu0 0.0
    %3116 = vmatpush1.msra.mxu0 0.0
    %3117 = vmatprep.subr.mxu0 0.0
    %3118 = vmatpush1.msra.mxu0 0.0
    %3119 = vmatprep.subr.mxu0 0.0
    %3120 = vmatpush1.msra.mxu0 0.0
    %3121 = vmatprep.subr.mxu0 0.0
    %3122 = vmatpush1.msra.mxu0 0.0
    %3123 = vmatprep.subr.mxu0 0.0
    %3124 = vmatpush1.msra.mxu0 0.0
    %3125 = vmatprep.subr.mxu0 0.0
    %3126 = vmatpush1.msra.mxu0 0.0
    %3127 = vmatprep.subr.mxu0 0.0
    %3128 = vmatpush1.msra.mxu0 0.0
    %3129 = vmatprep.subr.mxu0 0.0
    %3130 = vmatpush1.msra.mxu0 0.0
    %3131 = vmatprep.subr.mxu0 0.0
    %3132 = vmatpush1.msra.mxu0 0.0
    %3133 = vmatprep.subr.mxu0 0.0
    %3134 = vmatpush1.msra.mxu0 0.0
    %3135 = vmatprep.subr.mxu0 0.0
    %3136 = vmatpush1.msra.mxu0 0.0
    %3137 = vmatprep.subr.mxu0 0.0
    %3138 = vmatpush1.msra.mxu0 0.0
    %3139 = vmatprep.subr.mxu0 0.0
    %3140 = vmatpush1.msra.mxu0 0.0
    %3141 = vmatprep.subr.mxu0 0.0
    %3142 = vmatpush1.msra.mxu0 0.0
    %3143 = vmatprep.subr.mxu0 0.0
    %3144 = vmatpush1.msra.mxu0 0.0
    %3145 = vmatprep.subr.mxu0 0.0
    %3146 = vmatpush1.msra.mxu0 0.0
    %3147 = vmatprep.mubr.f32.mxu0 0.0
    %3148 = vmatmul.mubr.f32.gmra.mrb[0].mxu0 %v3072
    %v3149 = vpop.f32.mrb[0].mxu0
    %v3150 = vadd.f32 0.0, %v3149
    %v3151 = vpop.f32.mrb[0].mxu0
    %3152 = vmatprep.mubr.f32.mxu0 0.0
    %3153 = vmatmul.mubr.f32.gmra.mrb[0].mxu0 %v3075
    %v3154 = vpop.f32.mrb[0].mxu0
    %v3155 = vadd.f32 0.0, %v3154
    %v3156 = vpop.f32.mrb[0].mxu0
    %3157 = vmatprep.mubr.f32.mxu0 0.0
    %3158 = vmatmul.mubr.f32.gmra.mrb[0].mxu0 %v3078
    %v3159 = vpop.f32.mrb[0].mxu0
    %v3160 = vadd.f32 0.0, %v3159
    %v3161 = vpop.f32.mrb[0].mxu0
    %3162 = vmatprep.mubr.f32.mxu0 0.0
    %3163 = vmatmul.mubr.f32.gmra.mrb[0].mxu0 %v3081
    %v3164 = vpop.f32.mrb[0].mxu0
    %v3165 = vadd.f32 0.0, %v3164
    %v3166 = vpop.f32.mrb[0].mxu0
    %3167 = vdwg.mxu0
    %s3168 = scalar_lea.vmem %s13, 48
    %v3169 = vld [vmem:[%s3168] sm:$0xff]
    %v3170 = vld [vmem:[%s3168 + $0x8] sm:$0xff]
    %v3172 = vsel %vm511, %v3150, 0
    %v3175 = vsel %vm511, %v3155, 0
    %v3178 = vsel %vm511, %v3160, 0
    %v3181 = vsel %vm511, %v3165, 0
    %3183 = vmatprep.subr.mxu0 0.0
    %3184 = vmatpush1.msra.mxu0 %v3169
    %3185 = vmatprep.subr.mxu0 0.0
    %3186 = vmatpush1.msra.mxu0 %v3170
    %3187 = vmatprep.subr.mxu0 0.0
    %3188 = vmatpush1.msra.mxu0 0.0
    %3189 = vmatprep.subr.mxu0 0.0
    %3190 = vmatpush1.msra.mxu0 0.0
    %3191 = vmatprep.subr.mxu0 0.0
    %3192 = vmatpush1.msra.mxu0 0.0
    %3193 = vmatprep.subr.mxu0 0.0
    %3194 = vmatpush1.msra.mxu0 0.0
    %3195 = vmatprep.subr.mxu0 0.0
    %3196 = vmatpush1.msra.mxu0 0.0
    %3197 = vmatprep.subr.mxu0 0.0
    %3198 = vmatpush1.msra.mxu0 0.0
    %3199 = vmatprep.subr.mxu0 0.0
    %3200 = vmatpush1.msra.mxu0 0.0
    %3201 = vmatprep.subr.mxu0 0.0
    %3202 = vmatpush1.msra.mxu0 0.0
    %3203 = vmatprep.subr.mxu0 0.0
    %3204 = vmatpush1.msra.mxu0 0.0
    %3205 = vmatprep.subr.mxu0 0.0
    %3206 = vmatpush1.msra.mxu0 0.0
    %3207 = vmatprep.subr.mxu0 0.0
    %3208 = vmatpush1.msra.mxu0 0.0
    %3209 = vmatprep.subr.mxu0 0.0
    %3210 = vmatpush1.msra.mxu0 0.0
    %3211 = vmatprep.subr.mxu0 0.0
    %3212 = vmatpush1.msra.mxu0 0.0
    %3213 = vmatprep.subr.mxu0 0.0
    %3214 = vmatpush1.msra.mxu0 0.0
    %3215 = vmatprep.subr.mxu0 0.0
    %3216 = vmatpush1.msra.mxu0 0.0
    %3217 = vmatprep.subr.mxu0 0.0
    %3218 = vmatpush1.msra.mxu0 0.0
    %3219 = vmatprep.subr.mxu0 0.0
    %3220 = vmatpush1.msra.mxu0 0.0
    %3221 = vmatprep.subr.mxu0 0.0
    %3222 = vmatpush1.msra.mxu0 0.0
    %3223 = vmatprep.subr.mxu0 0.0
    %3224 = vmatpush1.msra.mxu0 0.0
    %3225 = vmatprep.subr.mxu0 0.0
    %3226 = vmatpush1.msra.mxu0 0.0
    %3227 = vmatprep.subr.mxu0 0.0
    %3228 = vmatpush1.msra.mxu0 0.0
    %3229 = vmatprep.subr.mxu0 0.0
    %3230 = vmatpush1.msra.mxu0 0.0
    %3231 = vmatprep.subr.mxu0 0.0
    %3232 = vmatpush1.msra.mxu0 0.0
    %3233 = vmatprep.subr.mxu0 0.0
    %3234 = vmatpush1.msra.mxu0 0.0
    %3235 = vmatprep.subr.mxu0 0.0
    %3236 = vmatpush1.msra.mxu0 0.0
    %3237 = vmatprep.subr.mxu0 0.0
    %3238 = vmatpush1.msra.mxu0 0.0
    %3239 = vmatprep.subr.mxu0 0.0
    %3240 = vmatpush1.msra.mxu0 0.0
    %3241 = vmatprep.subr.mxu0 0.0
    %3242 = vmatpush1.msra.mxu0 0.0
    %3243 = vmatprep.subr.mxu0 0.0
    %3244 = vmatpush1.msra.mxu0 0.0
    %3245 = vmatprep.subr.mxu0 0.0
    %3246 = vmatpush1.msra.mxu0 0.0
    %3247 = vmatprep.mubr.f32.mxu0 0.0
    %3248 = vmatmul.mubr.f32.gmra.mrb[0].mxu0 %v3172
    %v3249 = vpop.f32.mrb[0].mxu0
    %v3250 = vadd.f32 0.0, %v3249
    %v3251 = vpop.f32.mrb[0].mxu0
    %3252 = vmatprep.mubr.f32.mxu0 0.0
    %3253 = vmatmul.mubr.f32.gmra.mrb[0].mxu0 %v3175
    %v3254 = vpop.f32.mrb[0].mxu0
    %v3255 = vadd.f32 0.0, %v3254
    %v3256 = vpop.f32.mrb[0].mxu0
    %3257 = vmatprep.mubr.f32.mxu0 0.0
    %3258 = vmatmul.mubr.f32.gmra.mrb[0].mxu0 %v3178
    %v3259 = vpop.f32.mrb[0].mxu0
    %v3260 = vadd.f32 0.0, %v3259
    %v3261 = vpop.f32.mrb[0].mxu0
    %3262 = vmatprep.mubr.f32.mxu0 0.0
    %3263 = vmatmul.mubr.f32.gmra.mrb[0].mxu0 %v3181
    %v3264 = vpop.f32.mrb[0].mxu0
    %v3265 = vadd.f32 0.0, %v3264
    %v3266 = vpop.f32.mrb[0].mxu0
    %3267 = vdwg.mxu0
    %v3268 = vadd.f32 %v2620, %v3250
    %v3269 = vadd.f32 %v2621, %v3255
    %v3270 = vadd.f32 %v2622, %v3260
    %v3271 = vadd.f32 %v2623, %v3265
    %v3272 = vadd.f32 %v3268, %v1952
    %v3273 = vadd.f32 %v3269, %v1953
    %v3274 = vadd.f32 %v3270, %v1954
    %v3275 = vadd.f32 %v3271, %v1955
    %s3276 = scalar_lea.vmem %s15, 1
    %v3277 = vld [vmem:[%s3276] sm:$0x1]
    %s3278 = scalar_lea.vmem %s16, 1
    %v3279 = vld [vmem:[%s3278] sm:$0x1]
    %v3280 = vsel %vm101, %v3272, 0.0
    %3281 = vadd.xlane.f32.xlu0 %v3280
    %v3282 = vpop.xlane.xlu0 %3281
    %v3283 = vsel %vm101, %v3273, 0.0
    %3284 = vadd.xlane.f32.xlu0 %v3283
    %v3285 = vpop.xlane.xlu0 %3284
    %v3286 = vsel %vm101, %v3274, 0.0
    %3287 = vadd.xlane.f32.xlu0 %v3286
    %v3288 = vpop.xlane.xlu0 %3287
    %v3289 = vsel %vm101, %v3275, 0.0
    %3290 = vadd.xlane.f32.xlu0 %v3289
    %v3291 = vpop.xlane.xlu0 %3290
    %v3292 = vmul.f32 %v3282, %v114
    %v3293 = vmul.f32 %v3285, %v114
    %v3294 = vmul.f32 %v3288, %v114
    %v3295 = vmul.f32 %v3291, %v114
    %v3296 = vmul.f32 %v3272, %v3272
    %v3297 = vmul.f32 %v3273, %v3273
    %v3298 = vmul.f32 %v3274, %v3274
    %v3299 = vmul.f32 %v3275, %v3275
    %v3300 = vsel %vm101, %v3296, 0.0
    %3301 = vadd.xlane.f32.xlu0 %v3300
    %v3302 = vpop.xlane.xlu0 %3301
    %v3303 = vsel %vm101, %v3297, 0.0
    %3304 = vadd.xlane.f32.xlu0 %v3303
    %v3305 = vpop.xlane.xlu0 %3304
    %v3306 = vsel %vm101, %v3298, 0.0
    %3307 = vadd.xlane.f32.xlu0 %v3306
    %v3308 = vpop.xlane.xlu0 %3307
    %v3309 = vsel %vm101, %v3299, 0.0
    %3310 = vadd.xlane.f32.xlu0 %v3309
    %v3311 = vpop.xlane.xlu0 %3310
    %v3312 = vmul.f32 %v3302, %v114
    %v3313 = vmul.f32 %v3305, %v114
    %v3314 = vmul.f32 %v3308, %v114
    %v3315 = vmul.f32 %v3311, %v114
    %v3316 = vmul.f32 %v3292, %v3292
    %v3317 = vmul.f32 %v3293, %v3293
    %v3318 = vmul.f32 %v3294, %v3294
    %v3319 = vmul.f32 %v3295, %v3295
    %v3320 = vsub.f32 %v3312, %v3316
    %v3321 = vsub.f32 %v3313, %v3317
    %v3322 = vsub.f32 %v3314, %v3318
    %v3323 = vsub.f32 %v3315, %v3319
    %v3324 = vmax.f32 %v3320, 0.0
    %v3325 = vmax.f32 %v3321, 0.0
    %v3326 = vmax.f32 %v3322, 0.0
    %v3327 = vmax.f32 %v3323, 0.0
    %v3328 = vsub.f32 %v3272, %v3292
    %v3329 = vsub.f32 %v3273, %v3293
    %v3330 = vsub.f32 %v3274, %v3294
    %v3331 = vsub.f32 %v3275, %v3295
    %v3332 = vadd.f32 %v3324, 1e-12
    %v3333 = vadd.f32 %v3325, 1e-12
    %v3334 = vadd.f32 %v3326, 1e-12
    %v3335 = vadd.f32 %v3327, 1e-12
    %v3336 = vrsqrt.pop %v3332
    %v3337 = vrsqrt.pop %v3333
    %v3338 = vrsqrt.pop %v3334
    %v3339 = vrsqrt.pop %v3335
    %v3340 = vmul.f32 %v3328, %v3336
    %v3341 = vmul.f32 %v3329, %v3337
    %v3342 = vmul.f32 %v3330, %v3338
    %v3343 = vmul.f32 %v3331, %v3339
    %v3345 = vlaneseq
    %v3346 = vshrl.u32 %v3345, 7
    %v3347 = vsub.s32 0, %v3346
    %v3348 = vrot.slane %v3277, %v3347
    %v3350 = vmul.f32 %v3340, %v3348
    %v3351 = vmul.f32 %v3341, %v3348
    %v3352 = vmul.f32 %v3342, %v3348
    %v3353 = vmul.f32 %v3343, %v3348
    %v3355 = vlaneseq
    %v3356 = vshrl.u32 %v3355, 7
    %v3357 = vsub.s32 0, %v3356
    %v3358 = vrot.slane %v3279, %v3357
    %v3360 = vadd.f32 %v3350, %v3358
    %v3361 = vadd.f32 %v3351, %v3358
    %v3362 = vadd.f32 %v3352, %v3358
    %v3363 = vadd.f32 %v3353, %v3358
    %s3364 = scalar_lea.vmem [#allocation2], 32
    %v3365 = vld [vmem:[%s3364] sm:$0xff]
    %v3366 = vld [vmem:[%s3364 + $0x8] sm:$0xff]
    %v3367 = vld [vmem:[%s3364 + $0x10] sm:$0xff]
    %v3368 = vld [vmem:[%s3364 + $0x18] sm:$0xff]
    %s3369 = scalar_lea.vmem %s18, 1
    %v3370 = vld [vmem:[%s3369] sm:$0x1]
    %v3372 = vlaneseq
    %v3373 = vshrl.u32 %v3372, 7
    %v3374 = vsub.s32 0, %v3373
    %v3375 = vrot.slane %v3370, %v3374
    %v3378 = vsel %vm101, %v3360, 0
    %v3381 = vsel %vm101, %v3361, 0
    %v3384 = vsel %vm101, %v3362, 0
    %v3387 = vsel %vm101, %v3363, 0
    %3389 = vmatprep.subr.mxu0 0.0
    %3390 = vmatpush1.msra.mxu0 %v3365
    %3391 = vmatprep.subr.mxu0 0.0
    %3392 = vmatpush1.msra.mxu0 %v3366
    %3393 = vmatprep.subr.mxu0 0.0
    %3394 = vmatpush1.msra.mxu0 %v3367
    %3395 = vmatprep.subr.mxu0 0.0
    %3396 = vmatpush1.msra.mxu0 %v3368
    %3397 = vmatprep.subr.mxu0 0.0
    %3398 = vmatpush1.msra.mxu0 0.0
    %3399 = vmatprep.subr.mxu0 0.0
    %3400 = vmatpush1.msra.mxu0 0.0
    %3401 = vmatprep.subr.mxu0 0.0
    %3402 = vmatpush1.msra.mxu0 0.0
    %3403 = vmatprep.subr.mxu0 0.0
    %3404 = vmatpush1.msra.mxu0 0.0
    %3405 = vmatprep.subr.mxu0 0.0
    %3406 = vmatpush1.msra.mxu0 0.0
    %3407 = vmatprep.subr.mxu0 0.0
    %3408 = vmatpush1.msra.mxu0 0.0
    %3409 = vmatprep.subr.mxu0 0.0
    %3410 = vmatpush1.msra.mxu0 0.0
    %3411 = vmatprep.subr.mxu0 0.0
    %3412 = vmatpush1.msra.mxu0 0.0
    %3413 = vmatprep.subr.mxu0 0.0
    %3414 = vmatpush1.msra.mxu0 0.0
    %3415 = vmatprep.subr.mxu0 0.0
    %3416 = vmatpush1.msra.mxu0 0.0
    %3417 = vmatprep.subr.mxu0 0.0
    %3418 = vmatpush1.msra.mxu0 0.0
    %3419 = vmatprep.subr.mxu0 0.0
    %3420 = vmatpush1.msra.mxu0 0.0
    %3421 = vmatprep.subr.mxu0 0.0
    %3422 = vmatpush1.msra.mxu0 0.0
    %3423 = vmatprep.subr.mxu0 0.0
    %3424 = vmatpush1.msra.mxu0 0.0
    %3425 = vmatprep.subr.mxu0 0.0
    %3426 = vmatpush1.msra.mxu0 0.0
    %3427 = vmatprep.subr.mxu0 0.0
    %3428 = vmatpush1.msra.mxu0 0.0
    %3429 = vmatprep.subr.mxu0 0.0
    %3430 = vmatpush1.msra.mxu0 0.0
    %3431 = vmatprep.subr.mxu0 0.0
    %3432 = vmatpush1.msra.mxu0 0.0
    %3433 = vmatprep.subr.mxu0 0.0
    %3434 = vmatpush1.msra.mxu0 0.0
    %3435 = vmatprep.subr.mxu0 0.0
    %3436 = vmatpush1.msra.mxu0 0.0
    %3437 = vmatprep.subr.mxu0 0.0
    %3438 = vmatpush1.msra.mxu0 0.0
    %3439 = vmatprep.subr.mxu0 0.0
    %3440 = vmatpush1.msra.mxu0 0.0
    %3441 = vmatprep.subr.mxu0 0.0
    %3442 = vmatpush1.msra.mxu0 0.0
    %3443 = vmatprep.subr.mxu0 0.0
    %3444 = vmatpush1.msra.mxu0 0.0
    %3445 = vmatprep.subr.mxu0 0.0
    %3446 = vmatpush1.msra.mxu0 0.0
    %3447 = vmatprep.subr.mxu0 0.0
    %3448 = vmatpush1.msra.mxu0 0.0
    %3449 = vmatprep.subr.mxu0 0.0
    %3450 = vmatpush1.msra.mxu0 0.0
    %3451 = vmatprep.subr.mxu0 0.0
    %3452 = vmatpush1.msra.mxu0 0.0
    %3453 = vmatprep.mubr.f32.mxu0 0.0
    %3454 = vmatmul.mubr.f32.gmra.mrb[0].mxu0 %v3378
    %v3455 = vpop.f32.mrb[0].mxu0
    %v3456 = vadd.f32 %v3375, %v3455
    %v3457 = vpop.f32.mrb[0].mxu0
    %3458 = vmatprep.mubr.f32.mxu0 0.0
    %3459 = vmatmul.mubr.f32.gmra.mrb[0].mxu0 %v3381
    %v3460 = vpop.f32.mrb[0].mxu0
    %v3461 = vadd.f32 %v3375, %v3460
    %v3462 = vpop.f32.mrb[0].mxu0
    %3463 = vmatprep.mubr.f32.mxu0 0.0
    %3464 = vmatmul.mubr.f32.gmra.mrb[0].mxu0 %v3384
    %v3465 = vpop.f32.mrb[0].mxu0
    %v3466 = vadd.f32 %v3375, %v3465
    %v3467 = vpop.f32.mrb[0].mxu0
    %3468 = vmatprep.mubr.f32.mxu0 0.0
    %3469 = vmatmul.mubr.f32.gmra.mrb[0].mxu0 %v3387
    %v3470 = vpop.f32.mrb[0].mxu0
    %v3471 = vadd.f32 %v3375, %v3470
    %v3472 = vpop.f32.mrb[0].mxu0
    %3473 = vdwg.mxu0
    %v3474 = vmul.f32 %v3456, 0.5
    %v3475 = vmul.f32 %v3461, 0.5
    %v3476 = vmul.f32 %v3466, 0.5
    %v3477 = vmul.f32 %v3471, 0.5
    %v3478 = vmul.f32 %v3456, 0.044715
    %v3479 = vmul.f32 %v3461, 0.044715
    %v3480 = vmul.f32 %v3466, 0.044715
    %v3481 = vmul.f32 %v3471, 0.044715
    %v3482 = vmul.f32 %v3478, %v3456
    %v3483 = vmul.f32 %v3479, %v3461
    %v3484 = vmul.f32 %v3480, %v3466
    %v3485 = vmul.f32 %v3481, %v3471
    %v3486 = vmul.f32 %v3482, %v3456
    %v3487 = vmul.f32 %v3483, %v3461
    %v3488 = vmul.f32 %v3484, %v3466
    %v3489 = vmul.f32 %v3485, %v3471
    %v3490 = vadd.f32 %v3456, %v3486
    %v3491 = vadd.f32 %v3461, %v3487
    %v3492 = vadd.f32 %v3466, %v3488
    %v3493 = vadd.f32 %v3471, %v3489
    %v3494 = vmul.f32 %v3490, 0.7978846
    %v3495 = vmul.f32 %v3491, 0.7978846
    %v3496 = vmul.f32 %v3492, 0.7978846
    %v3497 = vmul.f32 %v3493, 0.7978846
    %v3498 = vtanh.pop %v3494
    %v3499 = vtanh.pop %v3495
    %v3500 = vtanh.pop %v3496
    %v3501 = vtanh.pop %v3497
    %v3502 = vadd.f32 %v3498, 1.0
    %v3503 = vadd.f32 %v3499, 1.0
    %v3504 = vadd.f32 %v3500, 1.0
    %v3505 = vadd.f32 %v3501, 1.0
    %v3506 = vmul.f32 %v3474, %v3502
    %v3507 = vmul.f32 %v3475, %v3503
    %v3508 = vmul.f32 %v3476, %v3504
    %v3509 = vmul.f32 %v3477, %v3505
    %s3510 = scalar_lea.vmem %s19, 64
    %v3511 = vld [vmem:[%s3510] sm:$0xff]
    %v3512 = vld [vmem:[%s3510 + $0x8] sm:$0xff]
    %v3513 = vld [vmem:[%s3510 + $0x10] sm:$0xff]
    %v3514 = vld [vmem:[%s3510 + $0x18] sm:$0xff]
    %v3515 = vld [vmem:[%s3510 + $0x20] sm:$0xff]
    %v3516 = vld [vmem:[%s3510 + $0x28] sm:$0xff]
    %v3517 = vld [vmem:[%s3510 + $0x30] sm:$0xff]
    %v3518 = vld [vmem:[%s3510 + $0x38] sm:$0xff]
    %s3519 = scalar_lea.vmem %s20, 1
    %v3520 = vld [vmem:[%s3519] sm:$0x1]
    %v3522 = vlaneseq
    %v3523 = vshrl.u32 %v3522, 7
    %v3524 = vsub.s32 0, %v3523
    %v3525 = vrot.slane %v3520, %v3524
    %v3528 = vsel %vm1768, %v3506, 0
    %v3531 = vsel %vm1768, %v3507, 0
    %v3534 = vsel %vm1768, %v3508, 0
    %v3537 = vsel %vm1768, %v3509, 0
    %3539 = vmatprep.subr.mxu0 0.0
    %3540 = vmatpush1.msra.mxu0 %v3511
    %3541 = vmatprep.subr.mxu0 0.0
    %3542 = vmatpush1.msra.mxu0 %v3512
    %3543 = vmatprep.subr.mxu0 0.0
    %3544 = vmatpush1.msra.mxu0 %v3513
    %3545 = vmatprep.subr.mxu0 0.0
    %3546 = vmatpush1.msra.mxu0 %v3514
    %3547 = vmatprep.subr.mxu0 0.0
    %3548 = vmatpush1.msra.mxu0 %v3515
    %3549 = vmatprep.subr.mxu0 0.0
    %3550 = vmatpush1.msra.mxu0 %v3516
    %3551 = vmatprep.subr.mxu0 0.0
    %3552 = vmatpush1.msra.mxu0 %v3517
    %3553 = vmatprep.subr.mxu0 0.0
    %3554 = vmatpush1.msra.mxu0 %v3518
    %3555 = vmatprep.subr.mxu0 0.0
    %3556 = vmatpush1.msra.mxu0 0.0
    %3557 = vmatprep.subr.mxu0 0.0
    %3558 = vmatpush1.msra.mxu0 0.0
    %3559 = vmatprep.subr.mxu0 0.0
    %3560 = vmatpush1.msra.mxu0 0.0
    %3561 = vmatprep.subr.mxu0 0.0
    %3562 = vmatpush1.msra.mxu0 0.0
    %3563 = vmatprep.subr.mxu0 0.0
    %3564 = vmatpush1.msra.mxu0 0.0
    %3565 = vmatprep.subr.mxu0 0.0
    %3566 = vmatpush1.msra.mxu0 0.0
    %3567 = vmatprep.subr.mxu0 0.0
    %3568 = vmatpush1.msra.mxu0 0.0
    %3569 = vmatprep.subr.mxu0 0.0
    %3570 = vmatpush1.msra.mxu0 0.0
    %3571 = vmatprep.subr.mxu0 0.0
    %3572 = vmatpush1.msra.mxu0 0.0
    %3573 = vmatprep.subr.mxu0 0.0
    %3574 = vmatpush1.msra.mxu0 0.0
    %3575 = vmatprep.subr.mxu0 0.0
    %3576 = vmatpush1.msra.mxu0 0.0
    %3577 = vmatprep.subr.mxu0 0.0
    %3578 = vmatpush1.msra.mxu0 0.0
    %3579 = vmatprep.subr.mxu0 0.0
    %3580 = vmatpush1.msra.mxu0 0.0
    %3581 = vmatprep.subr.mxu0 0.0
    %3582 = vmatpush1.msra.mxu0 0.0
    %3583 = vmatprep.subr.mxu0 0.0
    %3584 = vmatpush1.msra.mxu0 0.0
    %3585 = vmatprep.subr.mxu0 0.0
    %3586 = vmatpush1.msra.mxu0 0.0
    %3587 = vmatprep.subr.mxu0 0.0
    %3588 = vmatpush1.msra.mxu0 0.0
    %3589 = vmatprep.subr.mxu0 0.0
    %3590 = vmatpush1.msra.mxu0 0.0
    %3591 = vmatprep.subr.mxu0 0.0
    %3592 = vmatpush1.msra.mxu0 0.0
    %3593 = vmatprep.subr.mxu0 0.0
    %3594 = vmatpush1.msra.mxu0 0.0
    %3595 = vmatprep.subr.mxu0 0.0
    %3596 = vmatpush1.msra.mxu0 0.0
    %3597 = vmatprep.subr.mxu0 0.0
    %3598 = vmatpush1.msra.mxu0 0.0
    %3599 = vmatprep.subr.mxu0 0.0
    %3600 = vmatpush1.msra.mxu0 0.0
    %3601 = vmatprep.subr.mxu0 0.0
    %3602 = vmatpush1.msra.mxu0 0.0
    %3603 = vmatprep.mubr.f32.mxu0 0.0
    %3604 = vmatmul.mubr.f32.gmra.mrb[0].mxu0 %v3528
    %v3605 = vpop.f32.mrb[0].mxu0
    %v3606 = vadd.f32 %v3525, %v3605
    %v3607 = vpop.f32.mrb[0].mxu0
    %3608 = vmatprep.mubr.f32.mxu0 0.0
    %3609 = vmatmul.mubr.f32.gmra.mrb[0].mxu0 %v3531
    %v3610 = vpop.f32.mrb[0].mxu0
    %v3611 = vadd.f32 %v3525, %v3610
    %v3612 = vpop.f32.mrb[0].mxu0
    %3613 = vmatprep.mubr.f32.mxu0 0.0
    %3614 = vmatmul.mubr.f32.gmra.mrb[0].mxu0 %v3534
    %v3615 = vpop.f32.mrb[0].mxu0
    %v3616 = vadd.f32 %v3525, %v3615
    %v3617 = vpop.f32.mrb[0].mxu0
    %3618 = vmatprep.mubr.f32.mxu0 0.0
    %3619 = vmatmul.mubr.f32.gmra.mrb[0].mxu0 %v3537
    %v3620 = vpop.f32.mrb[0].mxu0
    %v3621 = vadd.f32 %v3525, %v3620
    %v3622 = vpop.f32.mrb[0].mxu0
    %3623 = vdwg.mxu0
    %v3624 = vadd.f32 %v3606, %v3360
    %v3625 = vadd.f32 %v3611, %v3361
    %v3626 = vadd.f32 %v3616, %v3362
    %v3627 = vadd.f32 %v3621, %v3363
    %s3628 = scalar_lea.vmem %s21, 1
    %v3629 = vld [vmem:[%s3628] sm:$0x1]
    %s3630 = scalar_lea.vmem %s22, 1
    %v3631 = vld [vmem:[%s3630] sm:$0x1]
    %v3632 = vsel %vm101, %v3624, 0.0
    %3633 = vadd.xlane.f32.xlu0 %v3632
    %v3634 = vpop.xlane.xlu0 %3633
    %v3635 = vsel %vm101, %v3625, 0.0
    %3636 = vadd.xlane.f32.xlu0 %v3635
    %v3637 = vpop.xlane.xlu0 %3636
    %v3638 = vsel %vm101, %v3626, 0.0
    %3639 = vadd.xlane.f32.xlu0 %v3638
    %v3640 = vpop.xlane.xlu0 %3639
    %v3641 = vsel %vm101, %v3627, 0.0
    %3642 = vadd.xlane.f32.xlu0 %v3641
    %v3643 = vpop.xlane.xlu0 %3642
    %v3644 = vmul.f32 %v3634, %v114
    %v3645 = vmul.f32 %v3637, %v114
    %v3646 = vmul.f32 %v3640, %v114
    %v3647 = vmul.f32 %v3643, %v114
    %v3648 = vmul.f32 %v3624, %v3624
    %v3649 = vmul.f32 %v3625, %v3625
    %v3650 = vmul.f32 %v3626, %v3626
    %v3651 = vmul.f32 %v3627, %v3627
    %v3652 = vsel %vm101, %v3648, 0.0
    %3653 = vadd.xlane.f32.xlu0 %v3652
    %v3654 = vpop.xlane.xlu0 %3653
    %v3655 = vsel %vm101, %v3649, 0.0
    %3656 = vadd.xlane.f32.xlu0 %v3655
    %v3657 = vpop.xlane.xlu0 %3656
    %v3658 = vsel %vm101, %v3650, 0.0
    %3659 = vadd.xlane.f32.xlu0 %v3658
    %v3660 = vpop.xlane.xlu0 %3659
    %v3661 = vsel %vm101, %v3651, 0.0
    %3662 = vadd.xlane.f32.xlu0 %v3661
    %v3663 = vpop.xlane.xlu0 %3662
    %v3664 = vmul.f32 %v3654, %v114
    %v3665 = vmul.f32 %v3657, %v114
    %v3666 = vmul.f32 %v3660, %v114
    %v3667 = vmul.f32 %v3663, %v114
    %v3668 = vmul.f32 %v3644, %v3644
    %v3669 = vmul.f32 %v3645, %v3645
    %v3670 = vmul.f32 %v3646, %v3646
    %v3671 = vmul.f32 %v3647, %v3647
    %v3672 = vsub.f32 %v3664, %v3668
    %v3673 = vsub.f32 %v3665, %v3669
    %v3674 = vsub.f32 %v3666, %v3670
    %v3675 = vsub.f32 %v3667, %v3671
    %v3676 = vmax.f32 %v3672, 0.0
    %v3677 = vmax.f32 %v3673, 0.0
    %v3678 = vmax.f32 %v3674, 0.0
    %v3679 = vmax.f32 %v3675, 0.0
    %v3680 = vsub.f32 %v3624, %v3644
    %v3681 = vsub.f32 %v3625, %v3645
    %v3682 = vsub.f32 %v3626, %v3646
    %v3683 = vsub.f32 %v3627, %v3647
    %v3684 = vadd.f32 %v3676, 1e-12
    %v3685 = vadd.f32 %v3677, 1e-12
    %v3686 = vadd.f32 %v3678, 1e-12
    %v3687 = vadd.f32 %v3679, 1e-12
    %v3688 = vrsqrt.pop %v3684
    %v3689 = vrsqrt.pop %v3685
    %v3690 = vrsqrt.pop %v3686
    %v3691 = vrsqrt.pop %v3687
    %v3692 = vmul.f32 %v3680, %v3688
    %v3693 = vmul.f32 %v3681, %v3689
    %v3694 = vmul.f32 %v3682, %v3690
    %v3695 = vmul.f32 %v3683, %v3691
    %v3697 = vlaneseq
    %v3698 = vshrl.u32 %v3697, 7
    %v3699 = vsub.s32 0, %v3698
    %v3700 = vrot.slane %v3629, %v3699
    %v3702 = vmul.f32 %v3692, %v3700
    %v3703 = vmul.f32 %v3693, %v3700
    %v3704 = vmul.f32 %v3694, %v3700
    %v3705 = vmul.f32 %v3695, %v3700
    %v3707 = vlaneseq
    %v3708 = vshrl.u32 %v3707, 7
    %v3709 = vsub.s32 0, %v3708
    %v3710 = vrot.slane %v3631, %v3709
    %v3712 = vadd.f32 %v3702, %v3710
    %v3713 = vadd.f32 %v3703, %v3710
    %v3714 = vadd.f32 %v3704, %v3710
    %v3715 = vadd.f32 %v3705, %v3710
    %v3716 = vld [vmem:[%s3] sm:$0xf]
    %v3718 = vsel %vm101, %v3716, 0
    %3720 = vmatprep.subr.mxu0 0.0
    %3721 = vmatpush1.msra.mxu0 %v3712
    %3722 = vmatprep.subr.mxu0 0.0
    %3723 = vmatpush1.msra.mxu0 %v3713
    %3724 = vmatprep.subr.mxu0 0.0
    %3725 = vmatpush1.msra.mxu0 %v3714
    %3726 = vmatprep.subr.mxu0 0.0
    %3727 = vmatpush1.msra.mxu0 %v3715
    %3728 = vmatprep.subr.mxu0 0.0
    %3729 = vmatpush1.msra.mxu0 0.0
    %3730 = vmatprep.subr.mxu0 0.0
    %3731 = vmatpush1.msra.mxu0 0.0
    %3732 = vmatprep.subr.mxu0 0.0
    %3733 = vmatpush1.msra.mxu0 0.0
    %3734 = vmatprep.subr.mxu0 0.0
    %3735 = vmatpush1.msra.mxu0 0.0
    %3736 = vmatprep.subr.mxu0 0.0
    %3737 = vmatpush1.msra.mxu0 0.0
    %3738 = vmatprep.subr.mxu0 0.0
    %3739 = vmatpush1.msra.mxu0 0.0
    %3740 = vmatprep.subr.mxu0 0.0
    %3741 = vmatpush1.msra.mxu0 0.0
    %3742 = vmatprep.subr.mxu0 0.0
    %3743 = vmatpush1.msra.mxu0 0.0
    %3744 = vmatprep.subr.mxu0 0.0
    %3745 = vmatpush1.msra.mxu0 0.0
    %3746 = vmatprep.subr.mxu0 0.0
    %3747 = vmatpush1.msra.mxu0 0.0
    %3748 = vmatprep.subr.mxu0 0.0
    %3749 = vmatpush1.msra.mxu0 0.0
    %3750 = vmatprep.subr.mxu0 0.0
    %3751 = vmatpush1.msra.mxu0 0.0
    %3752 = vmatprep.subr.mxu0 0.0
    %3753 = vmatpush1.msra.mxu0 0.0
    %3754 = vmatprep.subr.mxu0 0.0
    %3755 = vmatpush1.msra.mxu0 0.0
    %3756 = vmatprep.subr.mxu0 0.0
    %3757 = vmatpush1.msra.mxu0 0.0
    %3758 = vmatprep.subr.mxu0 0.0
    %3759 = vmatpush1.msra.mxu0 0.0
    %3760 = vmatprep.subr.mxu0 0.0
    %3761 = vmatpush1.msra.mxu0 0.0
    %3762 = vmatprep.subr.mxu0 0.0
    %3763 = vmatpush1.msra.mxu0 0.0
    %3764 = vmatprep.subr.mxu0 0.0
    %3765 = vmatpush1.msra.mxu0 0.0
    %3766 = vmatprep.subr.mxu0 0.0
    %3767 = vmatpush1.msra.mxu0 0.0
    %3768 = vmatprep.subr.mxu0 0.0
    %3769 = vmatpush1.msra.mxu0 0.0
    %3770 = vmatprep.subr.mxu0 0.0
    %3771 = vmatpush1.msra.mxu0 0.0
    %3772 = vmatprep.subr.mxu0 0.0
    %3773 = vmatpush1.msra.mxu0 0.0
    %3774 = vmatprep.subr.mxu0 0.0
    %3775 = vmatpush1.msra.mxu0 0.0
    %3776 = vmatprep.subr.mxu0 0.0
    %3777 = vmatpush1.msra.mxu0 0.0
    %3778 = vmatprep.subr.mxu0 0.0
    %3779 = vmatpush1.msra.mxu0 0.0
    %3780 = vmatprep.subr.mxu0 0.0
    %3781 = vmatpush1.msra.mxu0 0.0
    %3782 = vmatprep.subr.mxu0 0.0
    %3783 = vmatpush1.msra.mxu0 0.0
    %3784 = vmatprep.mubr.f32.mxu0 0.0
    %3785 = vmatmul.mubr.f32.gmra.mrb[0].mxu0 %v3718
    %v3786 = vpop.f32.mrb[0].mxu0
    %v3787 = vadd.f32 0.0, %v3786
    %v3788 = vpop.f32.mrb[0].mxu0
    %3789 = vdwg.mxu0
    %v3790 = vmul.f32 %v3716, %v196
    %vm3791 = vcmask 257024
    %v3792 = vsel %vm3791, %v3790, 0.0
    %3793 = vadd.xlane.f32.xlu0 %v3792
    %v3794 = vpop.xlane.xlu0 %3793
    %v3795 = vrcp.pop %v3794
    %v3796 = vmul.f32 %v3787, %v3795
    %v3798 = vrot.slane %v3796, 2
    %v3800 = vsub.f32 %v3796, %v3798
    %v3801 = vand.u32 2147483647, %v3800
    %v3802 = vmul.f32 %v3796, %v3796
    %vm3803 = vcmask 254976
    %v3804 = vsel %vm3803, %v3802, 0.0
    %3805 = vadd.xlane.f32.xlu0 %v3804
    %v3806 = vpop.xlane.xlu0 %3805
    %vm3807 = vcmask 257026
    %v3808 = vsel %vm3807, %v3802, 0.0
    %3809 = vadd.xlane.f32.xlu0 %v3808
    %v3810 = vpop.xlane.xlu0 %3809
    %v3812 = vrot.slane %v3810, 2
    %v3814 = vadd.f32 %v3806, %v3812
    %v3815 = vmul.f32 %v3801, %v3801
    %v3816 = vsel %vm3803, %v3815, 0.0
    %3817 = vadd.xlane.f32.xlu0 %v3816
    %v3818 = vpop.xlane.xlu0 %3817
    %v3819 = vadd.f32 %v3814, %v3818
    %v3820 = vrsqrt.pop %v3819
    %v3821 = vmul.f32 %v3819, %v3820
    %vm3822 = vcmp.eq.f32.partialorder %v3819, inf
    %v3823 = vsel %vm3822, %v3819, %v3821
    %vm3824 = vcmp.eq.f32.partialorder %v3819, 0.0
    %v3825 = vand.u32 %v3819, 2147483648
    %v3826 = vsel %vm3824, %v3825, %v3823
    %v3827 = vld [vmem:[%s23] sm:$0xff]
    %v3828 = vld [vmem:[%s23 + $0x8] sm:$0xff]
    %v3829 = vld [vmem:[%s23 + $0x10] sm:$0xff]
    %v3830 = vld [vmem:[%s23 + $0x18] sm:$0xff]
    %s3831 = scalar_lea.vmem %s23, 32
    %v3832 = vld [vmem:[%s3831] sm:$0xff]
    %v3833 = vld [vmem:[%s3831 + $0x8] sm:$0xff]
    %v3834 = vld [vmem:[%s3831 + $0x10] sm:$0xff]
    %v3835 = vld [vmem:[%s3831 + $0x18] sm:$0xff]
    %v3836 = vsel %vm101, %v3798, 0
    %3838 = vmatprep.subr.mxu0 0.0
    %3839 = vmatpush1.msra.mxu0 %v3832
    %3840 = vmatprep.subr.mxu0 0.0
    %3841 = vmatpush1.msra.mxu0 %v3833
    %3842 = vmatprep.subr.mxu0 0.0
    %3843 = vmatpush1.msra.mxu0 %v3834
    %3844 = vmatprep.subr.mxu0 0.0
    %3845 = vmatpush1.msra.mxu0 %v3835
    %3846 = vmatprep.subr.mxu0 0.0
    %3847 = vmatpush1.msra.mxu0 0.0
    %3848 = vmatprep.subr.mxu0 0.0
    %3849 = vmatpush1.msra.mxu0 0.0
    %3850 = vmatprep.subr.mxu0 0.0
    %3851 = vmatpush1.msra.mxu0 0.0
    %3852 = vmatprep.subr.mxu0 0.0
    %3853 = vmatpush1.msra.mxu0 0.0
    %3854 = vmatprep.subr.mxu0 0.0
    %3855 = vmatpush1.msra.mxu0 0.0
    %3856 = vmatprep.subr.mxu0 0.0
    %3857 = vmatpush1.msra.mxu0 0.0
    %3858 = vmatprep.subr.mxu0 0.0
    %3859 = vmatpush1.msra.mxu0 0.0
    %3860 = vmatprep.subr.mxu0 0.0
    %3861 = vmatpush1.msra.mxu0 0.0
    %3862 = vmatprep.subr.mxu0 0.0
    %3863 = vmatpush1.msra.mxu0 0.0
    %3864 = vmatprep.subr.mxu0 0.0
    %3865 = vmatpush1.msra.mxu0 0.0
    %3866 = vmatprep.subr.mxu0 0.0
    %3867 = vmatpush1.msra.mxu0 0.0
    %3868 = vmatprep.subr.mxu0 0.0
    %3869 = vmatpush1.msra.mxu0 0.0
    %3870 = vmatprep.subr.mxu0 0.0
    %3871 = vmatpush1.msra.mxu0 0.0
    %3872 = vmatprep.subr.mxu0 0.0
    %3873 = vmatpush1.msra.mxu0 0.0
    %3874 = vmatprep.subr.mxu0 0.0
    %3875 = vmatpush1.msra.mxu0 0.0
    %3876 = vmatprep.subr.mxu0 0.0
    %3877 = vmatpush1.msra.mxu0 0.0
    %3878 = vmatprep.subr.mxu0 0.0
    %3879 = vmatpush1.msra.mxu0 0.0
    %3880 = vmatprep.subr.mxu0 0.0
    %3881 = vmatpush1.msra.mxu0 0.0
    %3882 = vmatprep.subr.mxu0 0.0
    %3883 = vmatpush1.msra.mxu0 0.0
    %3884 = vmatprep.subr.mxu0 0.0
    %3885 = vmatpush1.msra.mxu0 0.0
    %3886 = vmatprep.subr.mxu0 0.0
    %3887 = vmatpush1.msra.mxu0 0.0
    %3888 = vmatprep.subr.mxu0 0.0
    %3889 = vmatpush1.msra.mxu0 0.0
    %3890 = vmatprep.subr.mxu0 0.0
    %3891 = vmatpush1.msra.mxu0 0.0
    %3892 = vmatprep.subr.mxu0 0.0
    %3893 = vmatpush1.msra.mxu0 0.0
    %3894 = vmatprep.subr.mxu0 0.0
    %3895 = vmatpush1.msra.mxu0 0.0
    %3896 = vmatprep.subr.mxu0 0.0
    %3897 = vmatpush1.msra.mxu0 0.0
    %3898 = vmatprep.subr.mxu0 0.0
    %3899 = vmatpush1.msra.mxu0 0.0
    %3900 = vmatprep.subr.mxu0 0.0
    %3901 = vmatpush1.msra.mxu0 0.0
    %3902 = vmatprep.mubr.f32.mxu0 0.0
    %3903 = vmatmul.mubr.f32.gmra.mrb[0].mxu0 %v3836
    %v3904 = vpop.f32.mrb[0].mxu0
    %v3905 = vadd.f32 0.0, %v3904
    %v3906 = vpop.f32.mrb[0].mxu0
    %3907 = vdwg.mxu0
    %v3908 = vsel %vm101, %v3796, 0
    %3910 = vmatprep.subr.mxu0 0.0
    %3911 = vmatpush1.msra.mxu0 %v3827
    %3912 = vmatprep.subr.mxu0 0.0
    %3913 = vmatpush1.msra.mxu0 %v3828
    %3914 = vmatprep.subr.mxu0 0.0
    %3915 = vmatpush1.msra.mxu0 %v3829
    %3916 = vmatprep.subr.mxu0 0.0
    %3917 = vmatpush1.msra.mxu0 %v3830
    %3918 = vmatprep.subr.mxu0 0.0
    %3919 = vmatpush1.msra.mxu0 0.0
    %3920 = vmatprep.subr.mxu0 0.0
    %3921 = vmatpush1.msra.mxu0 0.0
    %3922 = vmatprep.subr.mxu0 0.0
    %3923 = vmatpush1.msra.mxu0 0.0
    %3924 = vmatprep.subr.mxu0 0.0
    %3925 = vmatpush1.msra.mxu0 0.0
    %3926 = vmatprep.subr.mxu0 0.0
    %3927 = vmatpush1.msra.mxu0 0.0
    %3928 = vmatprep.subr.mxu0 0.0
    %3929 = vmatpush1.msra.mxu0 0.0
    %3930 = vmatprep.subr.mxu0 0.0
    %3931 = vmatpush1.msra.mxu0 0.0
    %3932 = vmatprep.subr.mxu0 0.0
    %3933 = vmatpush1.msra.mxu0 0.0
    %3934 = vmatprep.subr.mxu0 0.0
    %3935 = vmatpush1.msra.mxu0 0.0
    %3936 = vmatprep.subr.mxu0 0.0
    %3937 = vmatpush1.msra.mxu0 0.0
    %3938 = vmatprep.subr.mxu0 0.0
    %3939 = vmatpush1.msra.mxu0 0.0
    %3940 = vmatprep.subr.mxu0 0.0
    %3941 = vmatpush1.msra.mxu0 0.0
    %3942 = vmatprep.subr.mxu0 0.0
    %3943 = vmatpush1.msra.mxu0 0.0
    %3944 = vmatprep.subr.mxu0 0.0
    %3945 = vmatpush1.msra.mxu0 0.0
    %3946 = vmatprep.subr.mxu0 0.0
    %3947 = vmatpush1.msra.mxu0 0.0
    %3948 = vmatprep.subr.mxu0 0.0
    %3949 = vmatpush1.msra.mxu0 0.0
    %3950 = vmatprep.subr.mxu0 0.0
    %3951 = vmatpush1.msra.mxu0 0.0
    %3952 = vmatprep.subr.mxu0 0.0
    %3953 = vmatpush1.msra.mxu0 0.0
    %3954 = vmatprep.subr.mxu0 0.0
    %3955 = vmatpush1.msra.mxu0 0.0
    %3956 = vmatprep.subr.mxu0 0.0
    %3957 = vmatpush1.msra.mxu0 0.0
    %3958 = vmatprep.subr.mxu0 0.0
    %3959 = vmatpush1.msra.mxu0 0.0
    %3960 = vmatprep.subr.mxu0 0.0
    %3961 = vmatpush1.msra.mxu0 0.0
    %3962 = vmatprep.subr.mxu0 0.0
    %3963 = vmatpush1.msra.mxu0 0.0
    %3964 = vmatprep.subr.mxu0 0.0
    %3965 = vmatpush1.msra.mxu0 0.0
    %3966 = vmatprep.subr.mxu0 0.0
    %3967 = vmatpush1.msra.mxu0 0.0
    %3968 = vmatprep.subr.mxu0 0.0
    %3969 = vmatpush1.msra.mxu0 0.0
    %3970 = vmatprep.subr.mxu0 0.0
    %3971 = vmatpush1.msra.mxu0 0.0
    %3972 = vmatprep.subr.mxu0 0.0
    %3973 = vmatpush1.msra.mxu0 0.0
    %3974 = vmatprep.mubr.f32.mxu0 0.0
    %3975 = vmatmul.mubr.f32.gmra.mrb[0].mxu0 %v3908
    %v3976 = vpop.f32.mrb[0].mxu0
    %v3977 = vadd.f32 %v3905, %v3976
    %v3978 = vpop.f32.mrb[0].mxu0
    %3979 = vdwg.mxu0
    %s3980 = scalar_lea.vmem %s23, 64
    %v3981 = vld [vmem:[%s3980] sm:$0xff]
    %v3982 = vld [vmem:[%s3980 + $0x8] sm:$0xff]
    %v3983 = vld [vmem:[%s3980 + $0x10] sm:$0xff]
    %v3984 = vld [vmem:[%s3980 + $0x18] sm:$0xff]
    %v3986 = vsel %vm101, %v3801, 0
    %3988 = vmatprep.subr.mxu0 0.0
    %3989 = vmatpush1.msra.mxu0 %v3981
    %3990 = vmatprep.subr.mxu0 0.0
    %3991 = vmatpush1.msra.mxu0 %v3982
    %3992 = vmatprep.subr.mxu0 0.0
    %3993 = vmatpush1.msra.mxu0 %v3983
    %3994 = vmatprep.subr.mxu0 0.0
    %3995 = vmatpush1.msra.mxu0 %v3984
    %3996 = vmatprep.subr.mxu0 0.0
    %3997 = vmatpush1.msra.mxu0 0.0
    %3998 = vmatprep.subr.mxu0 0.0
    %3999 = vmatpush1.msra.mxu0 0.0
    %4000 = vmatprep.subr.mxu0 0.0
    %4001 = vmatpush1.msra.mxu0 0.0
    %4002 = vmatprep.subr.mxu0 0.0
    %4003 = vmatpush1.msra.mxu0 0.0
    %4004 = vmatprep.subr.mxu0 0.0
    %4005 = vmatpush1.msra.mxu0 0.0
    %4006 = vmatprep.subr.mxu0 0.0
    %4007 = vmatpush1.msra.mxu0 0.0
    %4008 = vmatprep.subr.mxu0 0.0
    %4009 = vmatpush1.msra.mxu0 0.0
    %4010 = vmatprep.subr.mxu0 0.0
    %4011 = vmatpush1.msra.mxu0 0.0
    %4012 = vmatprep.subr.mxu0 0.0
    %4013 = vmatpush1.msra.mxu0 0.0
    %4014 = vmatprep.subr.mxu0 0.0
    %4015 = vmatpush1.msra.mxu0 0.0
    %4016 = vmatprep.subr.mxu0 0.0
    %4017 = vmatpush1.msra.mxu0 0.0
    %4018 = vmatprep.subr.mxu0 0.0
    %4019 = vmatpush1.msra.mxu0 0.0
    %4020 = vmatprep.subr.mxu0 0.0
    %4021 = vmatpush1.msra.mxu0 0.0
    %4022 = vmatprep.subr.mxu0 0.0
    %4023 = vmatpush1.msra.mxu0 0.0
    %4024 = vmatprep.subr.mxu0 0.0
    %4025 = vmatpush1.msra.mxu0 0.0
    %4026 = vmatprep.subr.mxu0 0.0
    %4027 = vmatpush1.msra.mxu0 0.0
    %4028 = vmatprep.subr.mxu0 0.0
    %4029 = vmatpush1.msra.mxu0 0.0
    %4030 = vmatprep.subr.mxu0 0.0
    %4031 = vmatpush1.msra.mxu0 0.0
    %4032 = vmatprep.subr.mxu0 0.0
    %4033 = vmatpush1.msra.mxu0 0.0
    %4034 = vmatprep.subr.mxu0 0.0
    %4035 = vmatpush1.msra.mxu0 0.0
    %4036 = vmatprep.subr.mxu0 0.0
    %4037 = vmatpush1.msra.mxu0 0.0
    %4038 = vmatprep.subr.mxu0 0.0
    %4039 = vmatpush1.msra.mxu0 0.0
    %4040 = vmatprep.subr.mxu0 0.0
    %4041 = vmatpush1.msra.mxu0 0.0
    %4042 = vmatprep.subr.mxu0 0.0
    %4043 = vmatpush1.msra.mxu0 0.0
    %4044 = vmatprep.subr.mxu0 0.0
    %4045 = vmatpush1.msra.mxu0 0.0
    %4046 = vmatprep.subr.mxu0 0.0
    %4047 = vmatpush1.msra.mxu0 0.0
    %4048 = vmatprep.subr.mxu0 0.0
    %4049 = vmatpush1.msra.mxu0 0.0
    %4050 = vmatprep.subr.mxu0 0.0
    %4051 = vmatpush1.msra.mxu0 0.0
    %4052 = vmatprep.mubr.f32.mxu0 0.0
    %4053 = vmatmul.mubr.f32.gmra.mrb[0].mxu0 %v3986
    %v4054 = vpop.f32.mrb[0].mxu0
    %v4055 = vadd.f32 0.0, %v4054
    %v4056 = vpop.f32.mrb[0].mxu0
    %4057 = vdwg.mxu0
    %v4058 = vadd.f32 %v3977, %v4055
    %4060 = vset.pattern.permute.xlu0 0
    %4061 = vperm.xlu0 %4060, %v3826
    %v4062 = vpop.permute.xlu0 %4061
    %v4064 = vrcp.pop %v4062
    %v4065 = vmul.f32 %v4058, %v4064
    %v4066 = vld [vmem:[%s24] sm:$0x1]
    %v4068 = vlaneseq
    %v4069 = vshrl.u32 %v4068, 7
    %v4070 = vsub.s32 0, %v4069
    %v4071 = vrot.slane %v4066, %v4070
    %v4073 = vadd.f32 %v4065, %v4071
    %vm4074 = vcmask 17408
    %v4075 = vsel %vm4074, %v4073, -inf
    %4076 = vmax.xlane.f32.xlu0 %v4075
    %v4077 = vpop.xlane.xlu0 %4076
    %v4078 = vsub.f32 %v4073, %v4077
    %v4079 = vmul.f32 %v4078, 1.442695
    %v4080 = vpow.pop %v4079
    %v4081 = vsel %vm4074, %v4080, 0.0
    %4082 = vadd.xlane.f32.xlu0 %v4081
    %v4083 = vpop.xlane.xlu0 %4082
    %v4084 = vlog2.pop %v4083
    %v4085 = vmul.f32 %v4084, 0.6931472
    %v4086 = vsub.f32 %v4078, %v4085
    %v4087 = vlaneseq
    %v4088 = vand.u32 %v4087, 127
    %v4089 = vld [vmem:[%s2] sm:$0x3]
    %4090 = vset.pattern.permute.xlu0 0
    %4091 = vperm.xlu0 %4090, %v4089
    %v4092 = vpop.permute.xlu0 %4091
    %vm4093 = vcmp.eq.s32.totalorder %v4088, %v4092
    %v4094 = vsel %vm4093, 1.0, 0.0
    %v4095 = vmul.f32 %v4094, %v4086
    %v4096 = vsel %vm4074, %v4095, 0.0
    %4097 = vadd.xlane.f32.xlu0 %v4096
    %v4098 = vpop.xlane.xlu0 %4097
    %v4099 = vrot.slane %v4098, 4
    %v4100 = vadd.f32 %v4098, %v4099
    %v4101 = vrot.slane %v4100, 2
    %v4102 = vadd.f32 %v4100, %v4101
    %v4103 = vrot.slane %v4102, 1
    %v4104 = vadd.f32 %v4102, %v4103
    %s4105 = vtos %v4104
    %s4106 = ssub.f32 0.0, %s4105
    %v4107 = vrcp.pop 2.0
    %s4108 = vtos %v4107
    %s4109 = smul.f32 %s4106, %s4108
    %v4110 = vstv %s4109
    %vm4111 = vcmask 0
    %4112 = vst.msk [vmem:[#allocation5] sm:$0x1] %vm4111, %v4110
    // Predicated region
    $region106: #{bert_for_sb_forward.1} parent=1 // pred_check
      _
    $region107: #{bert_for_sb_forward.1} parent=1 // pred_check_branch
      %4114 = sbr.rel (0) target = $region109
    $region108: #{bert_for_sb_forward.1} parent=1 // pred_region
      %s4116 = ssub.s32 16, 16
      %4117 = vsyncadd [#allocation4], %s4116
      %s4119 = sshll.u32 [#allocation5], 4
      %s4120 = int_to_ptr.vmem [resolvable:$true] %s4119
      %4122 = dma.vmem_to_hbm [thread:$0]  %s4120, 16, %s25, [#allocation4]
    $region109: #{bert_for_sb_forward.1} parent=1 // pred_fallthru
      _
    // Predicated region
    $region110: #{bert_for_sb_forward.1} parent=1 // pred_check
      _
    $region111: #{bert_for_sb_forward.1} parent=1 // pred_check_branch
      %4124 = sbr.rel (0) target = $region113
    $region112: #{bert_for_sb_forward.1} parent=1 // pred_region
      %4125 = dma.done [#allocation4], 16
    $region113: #{bert_for_sb_forward.1} parent=1 // pred_fallthru
      _
    %4126 = vsyncpa [#allocation3], 1
    %4127 = vsyncpa [#allocation4], 1

</llo_original>
